<compile_context>
chip_gen: v7x
topology: tpu7x:2x2x1
jax: 0.10.0
libtpu: 0.0.40
codegen_flags: <defaults>
</compile_context>

<pallas_src>
import functools
import math

import jax
import jax.numpy as jnp
from jax.experimental import pallas as pl
from jax.experimental.pallas import tpu as pltpu

# Python floats (NOT jnp arrays) so the kernels don't capture traced consts.
NEG_SLOPE = 0.01                       # nn.LeakyReLU default negative_slope
LOG2PI = math.log(2.0 * math.pi)

OUT_W = 8                  # rows of the lane-dense packed output slab

# Continuous-variant fused layout.
C_HA = 64                  # actor hidden width
C_HA_PAD = 128             # actor hidden padded to 128 lanes
C_HC = 128                 # critic hidden width
C_F1 = C_HA_PAD + C_HC     # fused layer-1 output width = 256
C_F2 = 128                 # fused layer-2 width
C_VAL_COL = C_HA           # critic value column (64)
C_MAHA_COL = C_HA + 1      # in-kernel Mahalanobis term column (65)
# -> output slab rows 64..71 are one aligned sublane tile after transpose.

# Discrete-variant fused layout.
D_HA = 128
D_HC = 128
D_F1 = D_HA + D_HC         # 256
D_F2 = 128
D_VAL_COL = 120            # critic value column (8-aligned -> rows 120..127
D_LOGP_COL = 121           # of the transposed slab form one clean tile)
D_ENT_COL = 122

FAST_PATH_MAX_B = 256      # below this, fused XLA GEMMs beat the kernel
TB_MAX = 2048              # per-step batch tile cap (VMEM-safe incl. v7x)


def _cdiv(a, b):
    return -(-a // b)


def _round_up(x, m):
    return _cdiv(x, m) * m


def _leaky_relu(x):
    return jnp.where(x > 0, x, NEG_SLOPE * x)


def _num_tensorcores():
    """2 TensorCores behind one device on v4/v5p (megacore) and v7x."""
    try:
        kind = jax.devices()[0].device_kind.lower()
    except Exception:
        return 1
    return 2 if any(t in kind for t in ("v7", "v4", "v5p")) else 1


def _pick_tile(batch):
    """Biggest tile on 1-TC chips; even >=2-step grid on 2-TC chips."""
    ncores = _num_tensorcores()
    steps = max(ncores, _cdiv(batch, TB_MAX))
    if steps % ncores:
        steps += ncores - steps % ncores
    # TB must be a multiple of 128: it is the lane dim of the output block.
    return _round_up(_cdiv(batch, steps), 128)


# ----------------------------------------------------------------------------
# Kernels
# ----------------------------------------------------------------------------
def continuous_eval_kernel(state_ref, action_ref, inv_var_ref,
                           w1_ref, b1_ref, w2_ref, b2_ref, w3_ref, b3_ref,
                           out_ref):
    x = state_ref[...].astype(jnp.bfloat16)                          # (TB, S)

    # fused layer 1: [actor(64) | pad(64) | critic(128)] -> 256 lanes.
    h1 = _leaky_relu(jnp.dot(x, w1_ref[...],
                             preferred_element_type=jnp.float32) + b1_ref[...])

    # fused block-diagonal layer 2: cols [0:64]=actor h2, [64]=value, rest 0.
    h2 = jnp.dot(h1.astype(jnp.bfloat16), w2_ref[...],
                 preferred_element_type=jnp.float32) + b2_ref[...]   # (TB,128)
    ha2 = _leaky_relu(h2[:, :C_HA])                                  # (TB, 64)

    # actor layer 3 -> action mean (the torch actor really ends in LeakyReLU).
    mean = _leaky_relu(jnp.dot(ha2.astype(jnp.bfloat16), w3_ref[...],
                               preferred_element_type=jnp.float32) + b3_ref[...])

    # Mahalanobis term of the diagonal-Gaussian log_prob; batch-independent
    # constants (sum log var, d*log2pi, entropy) are added on the host.
    diff = action_ref[...] - mean
    maha = jnp.sum(diff * diff * inv_var_ref[...], axis=-1, keepdims=True)

    # Fold maha into the unused lane 65 of h2 (lane 64 already holds value),
    # one clean (TB,128)->(128,TB) transpose, then store the aligned sublane
    # tile rows 64..71 as a lane-dense (OUT_W, TB) block:
    #   row 0 = value, row 1 = maha, rows 2..7 = exact zeros (w2f/b2f pad).
    lane = jax.lax.broadcasted_iota(jnp.int32, h2.shape, 1)
    pack = jnp.where(lane == C_MAHA_COL, maha, h2)
    pt = jnp.transpose(pack)                                         # (128,TB)
    out_ref[...] = pt[C_VAL_COL:C_VAL_COL + OUT_W, :]


def discrete_eval_kernel(state_ref, aidx_ref,
                         w1_ref, b1_ref, w2_ref, b2_ref,
                         out_ref, *, action_dim):
    x = state_ref[...].astype(jnp.bfloat16)                          # (TB, S)

    # fused layer 1: [actor(128) | critic(128)] -> 256 lanes.
    h1 = _leaky_relu(jnp.dot(x, w1_ref[...],
                             preferred_element_type=jnp.float32) + b1_ref[...])

    # fused block-diagonal layer 2: cols [0:A]=logits, [120]=value, rest 0.
    h2 = jnp.dot(h1.astype(jnp.bfloat16), w2_ref[...],
                 preferred_element_type=jnp.float32) + b2_ref[...]   # (TB,128)
    logits = h2[:, :action_dim]                                      # (TB, A)

    # stable softmax; single EUP approx reciprocal reused for entropy.
    m = jnp.max(logits, axis=-1, keepdims=True)
    e = jnp.exp(logits - m)
    z = jnp.sum(e, axis=-1, keepdims=True)
    inv_z = pl.reciprocal(z, approx=True)
    log_probs = (logits - m) - jnp.log(z)

    # in-kernel log-prob selection (no host one_hot, no (B,A) extra stream).
    sel = jax.lax.broadcasted_iota(jnp.int32, logits.shape, 1) == aidx_ref[...]
    logp = jnp.sum(jnp.where(sel, log_probs, 0.0), axis=-1, keepdims=True)
    ent = -jnp.sum(e * log_probs, axis=-1, keepdims=True) * inv_z

    # Fold logp/ent into unused lanes next to the value column, transpose
    # once, store the aligned tile rows 120..127:
    #   row 0 = value, row 1 = logp, row 2 = entropy, rows 3..7 = zeros.
    lane = jax.lax.broadcasted_iota(jnp.int32, h2.shape, 1)
    pack = jnp.where(lane == D_LOGP_COL, logp,
                     jnp.where(lane == D_ENT_COL, ent, h2))
    pt = jnp.transpose(pack)                                         # (128,TB)
    out_ref[...] = pt[D_VAL_COL:D_VAL_COL + OUT_W, :]


# ----------------------------------------------------------------------------
# Parameter init (PyTorch-Linear-style uniform(+-1/sqrt(fan_in))) + fusion
# ----------------------------------------------------------------------------
def _linear_params(key, fan_in, fan_out):
    kw, kb = jax.random.split(key)
    bound = 1.0 / math.sqrt(fan_in)
    w = jax.random.uniform(kw, (fan_in, fan_out), jnp.float32, -bound, bound)
    b = jax.random.uniform(kb, (1, fan_out), jnp.float32, -bound, bound)
    return w, b


def init_continuous_params(key, state_dim, action_dim):
    k = jax.random.split(key, 5)
    aw1, ab1 = _linear_params(k[0], state_dim, C_HA)
    aw2, ab2 = _linear_params(k[1], C_HA, C_HA)
    aw3, ab3 = _linear_params(k[2], C_HA, action_dim)
    cw1, cb1 = _linear_params(k[3], state_dim, C_HC)
    cw2, cb2 = _linear_params(k[4], C_HC, 1)

    # fused layer 1: (S, 256) = [actor64 | zeros64 | critic128]
    w1f = jnp.concatenate(
        [aw1, jnp.zeros((state_dim, C_HA_PAD - C_HA), jnp.float32), cw1], axis=1)
    b1f = jnp.concatenate(
        [ab1, jnp.zeros((1, C_HA_PAD - C_HA), jnp.float32), cb1], axis=1)

    # fused block-diagonal layer 2: (256, 128); value at col C_VAL_COL.
    w2f = jnp.zeros((C_F1, C_F2), jnp.float32)
    w2f = w2f.at[:C_HA, :C_HA].set(aw2)
    w2f = w2f.at[C_HA_PAD:, C_VAL_COL:C_VAL_COL + 1].set(cw2)
    b2f = jnp.zeros((1, C_F2), jnp.float32)
    b2f = b2f.at[:, :C_HA].set(ab2)
    b2f = b2f.at[:, C_VAL_COL:C_VAL_COL + 1].set(cb2)

    return {"w1f": w1f.astype(jnp.bfloat16), "b1f": b1f,
            "w2f": w2f.astype(jnp.bfloat16), "b2f": b2f,
            "w3": aw3.astype(jnp.bfloat16), "b3": ab3}


def init_discrete_params(key, state_dim, action_dim):
    assert action_dim <= D_VAL_COL, "discrete action_dim must be <= 120"
    k = jax.random.split(key, 4)
    aw1, ab1 = _linear_params(k[0], state_dim, D_HA)
    aw2, ab2 = _linear_params(k[1], D_HA, action_dim)
    cw1, cb1 = _linear_params(k[2], state_dim, D_HC)
    cw2, cb2 = _linear_params(k[3], D_HC, 1)

    # fused layer 1: (S, 256) = [actor128 | critic128]
    w1f = jnp.concatenate([aw1, cw1], axis=1)
    b1f = jnp.concatenate([ab1, cb1], axis=1)

    # fused block-diagonal layer 2: (256, 128); logits at [0:A], value at 120.
    w2f = jnp.zeros((D_F1, D_F2), jnp.float32)
    w2f = w2f.at[:D_HA, :action_dim].set(aw2)
    w2f = w2f.at[D_HA:, D_VAL_COL:D_VAL_COL + 1].set(cw2)
    b2f = jnp.zeros((1, D_F2), jnp.float32)
    b2f = b2f.at[:, :action_dim].set(ab2)
    b2f = b2f.at[:, D_VAL_COL:D_VAL_COL + 1].set(cb2)

    return {"w1f": w1f.astype(jnp.bfloat16), "b1f": b1f,
            "w2f": w2f.astype(jnp.bfloat16), "b2f": b2f}


# ----------------------------------------------------------------------------
# Pure-JAX references (same fused bf16 params): correctness + small-B fast path
# ----------------------------------------------------------------------------
def _ref_continuous(state, action, action_var, p):
    x = state.astype(jnp.bfloat16)
    h1 = _leaky_relu(jnp.dot(x, p["w1f"],
                             preferred_element_type=jnp.float32) + p["b1f"])
    h2 = jnp.dot(h1.astype(jnp.bfloat16), p["w2f"],
                 preferred_element_type=jnp.float32) + p["b2f"]
    value = h2[:, C_VAL_COL:C_VAL_COL + 1]
    mean = _leaky_relu(jnp.dot(_leaky_relu(h2[:, :C_HA]).astype(jnp.bfloat16),
                               p["w3"],
                               preferred_element_type=jnp.float32) + p["b3"])
    A = action.shape[-1]
    av = action_var.astype(jnp.float32).reshape(1, A)
    diff = action - mean
    maha = jnp.sum(diff * diff / av, axis=-1)
    sum_log_var = jnp.sum(jnp.log(av))
    logp = -0.5 * (maha + sum_log_var + A * LOG2PI)
    ent = jnp.broadcast_to(0.5 * A * (1.0 + LOG2PI) + 0.5 * sum_log_var,
                           (state.shape[0],))
    return logp, value, ent


def _ref_discrete(state, action_idx, p, action_dim):
    x = state.astype(jnp.bfloat16)
    h1 = _leaky_relu(jnp.dot(x, p["w1f"],
                             preferred_element_type=jnp.float32) + p["b1f"])
    h2 = jnp.dot(h1.astype(jnp.bfloat16), p["w2f"],
                 preferred_element_type=jnp.float32) + p["b2f"]
    logits = h2[:, :action_dim]
    value = h2[:, D_VAL_COL:D_VAL_COL + 1]
    log_probs = jax.nn.log_softmax(logits, axis=-1)
    probs = jnp.exp(log_probs)
    idx = action_idx.reshape(-1).astype(jnp.int32)
    logp = jnp.take_along_axis(log_probs, idx[:, None], axis=-1)[:, 0]
    ent = -jnp.sum(probs * log_probs, axis=-1)
    return logp, value, ent


# ----------------------------------------------------------------------------
# Wrappers around pallas_call
# ----------------------------------------------------------------------------
def _resident(arr):
    # weight / bias blocks: same full block every grid step -> VMEM-resident.
    return pl.BlockSpec(arr.shape, lambda i: (0, 0))


@jax.jit
def evaluate_continuous(state, action, action_var, params):
    B, S = state.shape
    if action.ndim == 1:                      # torch action_dim==1 reshape
        action = action[:, None]
    A = action.shape[-1]
    action_var = action_var.astype(jnp.float32).reshape(1, A)

    if B <= FAST_PATH_MAX_B:                  # rollout-time / tiny batches
        return _ref_continuous(state, action, action_var, params)

    TB = _pick_tile(B)
    Bp = _round_up(B, TB)
    if Bp != B:                               # rare: pad so blocks are exact
        state = jnp.pad(state, ((0, Bp - B), (0, 0)))
        action = jnp.pad(action, ((0, Bp - B), (0, 0)))
    grid = (Bp // TB,)

    inv_var = 1.0 / action_var                # hoisted: no divide in-kernel
    weight_bytes = sum(int(params[k].size) * params[k].dtype.itemsize
                       for k in params)
    cost = pl.CostEstimate(
        flops=2 * Bp * (S * C_F1 + C_F1 * C_F2 + C_HA * A) + 4 * Bp * A,
        transcendentals=0,
        bytes_accessed=Bp * (S + A + OUT_W) * 4 + weight_bytes)

    packed = pl.pallas_call(
        continuous_eval_kernel,
        grid=grid,
        in_specs=[pl.BlockSpec((TB, S), lambda i: (i, 0)),        # state
                  pl.BlockSpec((TB, A), lambda i: (i, 0)),        # action
                  _resident(inv_var),
                  _resident(params["w1f"]), _resident(params["b1f"]),
                  _resident(params["w2f"]), _resident(params["b2f"]),
                  _resident(params["w3"]), _resident(params["b3"])],
        out_specs=pl.BlockSpec((OUT_W, TB), lambda i: (0, i)),    # lane-dense
        out_shape=jax.ShapeDtypeStruct((OUT_W, Bp), jnp.float32),
        compiler_params=pltpu.CompilerParams(
            dimension_semantics=("parallel",)),
        cost_estimate=cost,
    )(state, action, inv_var,
      params["w1f"], params["b1f"], params["w2f"], params["b2f"],
      params["w3"], params["b3"])

    value = packed[0, :B][:, None]                                # (B, 1)
    maha = packed[1, :B]                                          # (B,)
    sum_log_var = jnp.sum(jnp.log(action_var))
    logp = -0.5 * (maha + sum_log_var + A * LOG2PI)
    ent = jnp.broadcast_to(0.5 * A * (1.0 + LOG2PI) + 0.5 * sum_log_var, (B,))
    # torch shapes: log_prob (B,), state_values (B,1), entropy (B,)
    return logp, value, ent


@functools.partial(jax.jit, static_argnames=("action_dim",))
def evaluate_discrete(state, action_idx, params, action_dim):
    B, S = state.shape

    if B <= FAST_PATH_MAX_B:
        return _ref_discrete(state, action_idx, params, action_dim)

    aidx = action_idx.reshape(B, 1).astype(jnp.int32)
    TB = _pick_tile(B)
    Bp = _round_up(B, TB)
    if Bp != B:
        state = jnp.pad(state, ((0, Bp - B), (0, 0)))
        aidx = jnp.pad(aidx, ((0, Bp - B), (0, 0)))
    grid = (Bp // TB,)

    weight_bytes = sum(int(params[k].size) * params[k].dtype.itemsize
                       for k in params)
    cost = pl.CostEstimate(
        flops=2 * Bp * (S * D_F1 + D_F1 * D_F2) + 8 * Bp * action_dim,
        transcendentals=Bp * (action_dim + 2),
        bytes_accessed=Bp * (S * 4 + 4 + OUT_W * 4) + weight_bytes)

    kernel = functools.partial(discrete_eval_kernel, action_dim=action_dim)
    packed = pl.pallas_call(
        kernel,
        grid=grid,
        in_specs=[pl.BlockSpec((TB, S), lambda i: (i, 0)),        # state
                  pl.BlockSpec((TB, 1), lambda i: (i, 0)),        # action idx
                  _resident(params["w1f"]), _resident(params["b1f"]),
                  _resident(params["w2f"]), _resident(params["b2f"])],
        out_specs=pl.BlockSpec((OUT_W, TB), lambda i: (0, i)),
        out_shape=jax.ShapeDtypeStruct((OUT_W, Bp), jnp.float32),
        compiler_params=pltpu.CompilerParams(
            dimension_semantics=("parallel",)),
        cost_estimate=cost,
    )(state, aidx, params["w1f"], params["b1f"],
      params["w2f"], params["b2f"])

    value = packed[0, :B][:, None]
    logp = packed[1, :B]
    ent = packed[2, :B]
    return logp, value, ent


# ----------------------------------------------------------------------------
if __name__ == "__main__":
    key = jax.random.PRNGKey(0)
    (k_pc, k_pd, k_s, k_ac, k_ad, k_ss, k_asc, k_asd) = jax.random.split(key, 8)

    STATE_DIM, ACTION_DIM = 32, 4
    ACTION_STD_INIT = 0.6
    action_var = jnp.full((1, ACTION_DIM),
                          ACTION_STD_INIT * ACTION_STD_INIT, jnp.float32)

    params_c = init_continuous_params(k_pc, STATE_DIM, ACTION_DIM)
    params_d = init_discrete_params(k_pd, STATE_DIM, ACTION_DIM)

    # ---- kernel path (PPO-update-sized batch) -------------------------------
    B = 1024
    state = jax.random.normal(k_s, (B, STATE_DIM), jnp.float32)
    action_cont = jax.random.normal(k_ac, (B, ACTION_DIM), jnp.float32)
    action_disc = jax.random.randint(k_ad, (B,), 0, ACTION_DIM)

    logp_c, val_c, ent_c = evaluate_continuous(state, action_cont,
                                               action_var, params_c)
    logp_d, val_d, ent_d = evaluate_discrete(state, action_disc, params_d,
                                             ACTION_DIM)
    jax.block_until_ready((logp_c, val_c, ent_c, logp_d, val_d, ent_d))

    # shapes match torch evaluate(): (B,), (B,1), (B,)
    assert logp_c.shape == (B,) and val_c.shape == (B, 1) and ent_c.shape == (B,)
    assert logp_d.shape == (B,) and val_d.shape == (B, 1) and ent_d.shape == (B,)

    # numerical check against pure-JAX reference using the same bf16 params
    r_logp_c, r_val_c, r_ent_c = _ref_continuous(state, action_cont,
                                                 action_var, params_c)
    r_logp_d, r_val_d, r_ent_d = _ref_discrete(state, action_disc, params_d,
                                               ACTION_DIM)
    assert jnp.allclose(logp_c, r_logp_c, atol=5e-2, rtol=5e-2)
    assert jnp.allclose(val_c, r_val_c, atol=5e-2, rtol=5e-2)
    assert jnp.allclose(ent_c, r_ent_c, atol=5e-2, rtol=5e-2)
    assert jnp.allclose(logp_d, r_logp_d, atol=5e-2, rtol=5e-2)
    assert jnp.allclose(val_d, r_val_d, atol=5e-2, rtol=5e-2)
    assert jnp.allclose(ent_d, r_ent_d, atol=5e-2, rtol=5e-2)

    # ---- small-batch fast path (rollout-time eval) ---------------------------
    Bs = 8
    state_s = jax.random.normal(k_ss, (Bs, STATE_DIM), jnp.float32)
    act_cs = jax.random.normal(k_asc, (Bs, ACTION_DIM), jnp.float32)
    act_ds = jax.random.randint(k_asd, (Bs,), 0, ACTION_DIM)
    sc = evaluate_continuous(state_s, act_cs, action_var, params_c)
    sd = evaluate_discrete(state_s, act_ds, params_d, ACTION_DIM)
    jax.block_until_ready((sc, sd))
    assert sc[0].shape == (Bs,) and sc[1].shape == (Bs, 1) and sc[2].shape == (Bs,)
    assert sd[0].shape == (Bs,) and sd[1].shape == (Bs, 1) and sd[2].shape == (Bs,)

    print("KERNEL_OK")
</pallas_src>

<mosaic_0001>
module attributes {stable_mosaic.version = 11 : i64} {
  func.func @continuous_eval_kernel(%arg0: i32, %arg1: memref<1024x32xf32, #tpu.memory_space<vmem>>, %arg2: memref<1024x4xf32, #tpu.memory_space<vmem>>, %arg3: memref<1x4xf32, #tpu.memory_space<vmem>>, %arg4: memref<32x256xbf16, #tpu.memory_space<vmem>>, %arg5: memref<1x256xf32, #tpu.memory_space<vmem>>, %arg6: memref<256x128xbf16, #tpu.memory_space<vmem>>, %arg7: memref<1x128xf32, #tpu.memory_space<vmem>>, %arg8: memref<64x4xbf16, #tpu.memory_space<vmem>>, %arg9: memref<1x4xf32, #tpu.memory_space<vmem>>, %arg10: memref<8x1024xf32, #tpu.memory_space<vmem>>) attributes {dimension_semantics = [#tpu.dimension_semantics<parallel>], iteration_bounds = array<i64: 1>, scalar_prefetch = 0 : i64, scratch_operands = 0 : i64, tpu.core_type = #tpu.core_type<tc>, window_params = [{transform_indices = @transform_0, window_bounds = array<i64: 1024, 32>}, {transform_indices = @transform_1, window_bounds = array<i64: 1024, 4>}, {pipeline_mode = #tpu.pipeline_mode<synchronous>, transform_indices = @transform_2, window_bounds = array<i64: 1, 4>}, {pipeline_mode = #tpu.pipeline_mode<synchronous>, transform_indices = @transform_3, window_bounds = array<i64: 32, 256>}, {pipeline_mode = #tpu.pipeline_mode<synchronous>, transform_indices = @transform_4, window_bounds = array<i64: 1, 256>}, {pipeline_mode = #tpu.pipeline_mode<synchronous>, transform_indices = @transform_5, window_bounds = array<i64: 256, 128>}, {pipeline_mode = #tpu.pipeline_mode<synchronous>, transform_indices = @transform_6, window_bounds = array<i64: 1, 128>}, {pipeline_mode = #tpu.pipeline_mode<synchronous>, transform_indices = @transform_7, window_bounds = array<i64: 64, 4>}, {pipeline_mode = #tpu.pipeline_mode<synchronous>, transform_indices = @transform_8, window_bounds = array<i64: 1, 4>}, {transform_indices = @transform_9, window_bounds = array<i64: 8, 1024>}]} {
    %c0 = arith.constant 0 : index
    %c0_0 = arith.constant 0 : index
    %0 = vector.load %arg1[%c0, %c0_0] : memref<1024x32xf32, #tpu.memory_space<vmem>>, vector<1024x32xf32>
    %1 = arith.truncf %0 : vector<1024x32xf32> to vector<1024x32xbf16>
    %c0_1 = arith.constant 0 : index
    %c0_2 = arith.constant 0 : index
    %2 = vector.load %arg4[%c0_1, %c0_2] : memref<32x256xbf16, #tpu.memory_space<vmem>>, vector<32x256xbf16>
    %cst = arith.constant dense<0.000000e+00> : vector<1024x256xf32>
    %3 = tpu.matmul %1, %2, %cst {dimension_numbers = #tpu.dot_dimension_numbers<[1], [0], [0], [1], [0, 0, 1, 1], [], []>} : vector<1024x32xbf16>, vector<32x256xbf16>, vector<1024x256xf32> -> vector<1024x256xf32>
    %c0_3 = arith.constant 0 : index
    %c0_4 = arith.constant 0 : index
    %4 = vector.load %arg5[%c0_3, %c0_4] : memref<1x256xf32, #tpu.memory_space<vmem>>, vector<1x256xf32>
    %5 = vector.broadcast %4 : vector<1x256xf32> to vector<1024x256xf32>
    %6 = arith.addf %3, %5 : vector<1024x256xf32>
    %cst_5 = arith.constant 0.000000e+00 : f32
    %7 = vector.broadcast %cst_5 : f32 to vector<1024x256xf32>
    %8 = arith.cmpf ogt, %6, %7 : vector<1024x256xf32>
    %cst_6 = arith.constant 0.00999999977 : f32
    %9 = vector.broadcast %cst_6 : f32 to vector<1024x256xf32>
    %10 = arith.mulf %9, %6 : vector<1024x256xf32>
    %11 = arith.select %8, %6, %10 : vector<1024x256xi1>, vector<1024x256xf32>
    %12 = arith.truncf %11 : vector<1024x256xf32> to vector<1024x256xbf16>
    %c0_7 = arith.constant 0 : index
    %c0_8 = arith.constant 0 : index
    %13 = vector.load %arg6[%c0_7, %c0_8] : memref<256x128xbf16, #tpu.memory_space<vmem>>, vector<256x128xbf16>
    %cst_9 = arith.constant dense<0.000000e+00> : vector<1024x128xf32>
    %14 = tpu.matmul %12, %13, %cst_9 {dimension_numbers = #tpu.dot_dimension_numbers<[1], [0], [0], [1], [0, 0, 1, 1], [], []>} : vector<1024x256xbf16>, vector<256x128xbf16>, vector<1024x128xf32> -> vector<1024x128xf32>
    %c0_10 = arith.constant 0 : index
    %c0_11 = arith.constant 0 : index
    %15 = vector.load %arg7[%c0_10, %c0_11] : memref<1x128xf32, #tpu.memory_space<vmem>>, vector<1x128xf32>
    %16 = vector.broadcast %15 : vector<1x128xf32> to vector<1024x128xf32>
    %17 = arith.addf %14, %16 : vector<1024x128xf32>
    %18 = vector.extract_strided_slice %17 {offsets = [0, 0], sizes = [1024, 64], strides = [1, 1]} : vector<1024x128xf32> to vector<1024x64xf32>
    %cst_12 = arith.constant 0.000000e+00 : f32
    %19 = vector.broadcast %cst_12 : f32 to vector<1024x64xf32>
    %20 = arith.cmpf ogt, %18, %19 : vector<1024x64xf32>
    %cst_13 = arith.constant 0.00999999977 : f32
    %21 = vector.broadcast %cst_13 : f32 to vector<1024x64xf32>
    %22 = arith.mulf %21, %18 : vector<1024x64xf32>
    %23 = arith.select %20, %18, %22 : vector<1024x64xi1>, vector<1024x64xf32>
    %24 = arith.truncf %23 : vector<1024x64xf32> to vector<1024x64xbf16>
    %c0_14 = arith.constant 0 : index
    %c0_15 = arith.constant 0 : index
    %25 = vector.load %arg8[%c0_14, %c0_15] : memref<64x4xbf16, #tpu.memory_space<vmem>>, vector<64x4xbf16>
    %cst_16 = arith.constant dense<0.000000e+00> : vector<1024x4xf32>
    %26 = tpu.matmul %24, %25, %cst_16 {dimension_numbers = #tpu.dot_dimension_numbers<[1], [0], [0], [1], [0, 0, 1, 1], [], []>} : vector<1024x64xbf16>, vector<64x4xbf16>, vector<1024x4xf32> -> vector<1024x4xf32>
    %c0_17 = arith.constant 0 : index
    %c0_18 = arith.constant 0 : index
    %27 = vector.load %arg9[%c0_17, %c0_18] : memref<1x4xf32, #tpu.memory_space<vmem>>, vector<1x4xf32>
    %28 = vector.broadcast %27 : vector<1x4xf32> to vector<1024x4xf32>
    %29 = arith.addf %26, %28 : vector<1024x4xf32>
    %cst_19 = arith.constant 0.000000e+00 : f32
    %30 = vector.broadcast %cst_19 : f32 to vector<1024x4xf32>
    %31 = arith.cmpf ogt, %29, %30 : vector<1024x4xf32>
    %cst_20 = arith.constant 0.00999999977 : f32
    %32 = vector.broadcast %cst_20 : f32 to vector<1024x4xf32>
    %33 = arith.mulf %32, %29 : vector<1024x4xf32>
    %34 = arith.select %31, %29, %33 : vector<1024x4xi1>, vector<1024x4xf32>
    %c0_21 = arith.constant 0 : index
    %c0_22 = arith.constant 0 : index
    %35 = vector.load %arg2[%c0_21, %c0_22] : memref<1024x4xf32, #tpu.memory_space<vmem>>, vector<1024x4xf32>
    %36 = arith.subf %35, %34 : vector<1024x4xf32>
    %37 = arith.mulf %36, %36 : vector<1024x4xf32>
    %c0_23 = arith.constant 0 : index
    %c0_24 = arith.constant 0 : index
    %38 = vector.load %arg3[%c0_23, %c0_24] : memref<1x4xf32, #tpu.memory_space<vmem>>, vector<1x4xf32>
    %39 = vector.broadcast %38 : vector<1x4xf32> to vector<1024x4xf32>
    %40 = arith.mulf %37, %39 : vector<1024x4xf32>
    %cst_25 = arith.constant dense<0.000000e+00> : vector<1024xf32>
    %41 = vector.multi_reduction <add>, %40, %cst_25 [1] : vector<1024x4xf32> to vector<1024xf32>
    %42 = vector.shape_cast %41 : vector<1024xf32> to vector<1024x1xf32>
    %43 = tpu.iota {dimensions = array<i32: 1>} : vector<1024x128xi32>
    %c65_i32 = arith.constant 65 : i32
    %44 = vector.broadcast %c65_i32 : i32 to vector<1024x128xi32>
    %45 = arith.cmpi eq, %43, %44 : vector<1024x128xi32>
    %46 = vector.shape_cast %42 : vector<1024x1xf32> to vector<1024x1xf32>
    %47 = vector.broadcast %46 : vector<1024x1xf32> to vector<1024x128xf32>
    %48 = arith.select %45, %47, %17 : vector<1024x128xi1>, vector<1024x128xf32>
    %49 = tpu.transpose %48, [1, 0] : vector<1024x128xf32> -> vector<128x1024xf32>
    %50 = vector.extract_strided_slice %49 {offsets = [64, 0], sizes = [8, 1024], strides = [1, 1]} : vector<128x1024xf32> to vector<8x1024xf32>
    %c0_26 = arith.constant 0 : index
    %c0_27 = arith.constant 0 : index
    %51 = vector.load %arg10[%c0_26, %c0_27] : memref<8x1024xf32, #tpu.memory_space<vmem>>, vector<8x1024xf32>
    tpu.vector_store %arg10[%c0_26, %c0_27], %50 {strides = array<i32>} : memref<8x1024xf32, #tpu.memory_space<vmem>>, vector<8x1024xf32>,
    return
  }
  func.func @transform_0(%arg0: i32) -> (i32, i32) {
    %c0_i32 = arith.constant 0 : i32
    %c0_i32_0 = arith.constant 0 : i32
    return %arg0, %c0_i32 : i32, i32
  }
  func.func @transform_1(%arg0: i32) -> (i32, i32) {
    %c0_i32 = arith.constant 0 : i32
    %c0_i32_0 = arith.constant 0 : i32
    return %arg0, %c0_i32 : i32, i32
  }
  func.func @transform_2(%arg0: i32) -> (i32, i32) {
    %c0_i32 = arith.constant 0 : i32
    %c0_i32_0 = arith.constant 0 : i32
    %c0_i32_1 = arith.constant 0 : i32
    return %c0_i32, %c0_i32_0 : i32, i32
  }
  func.func @transform_3(%arg0: i32) -> (i32, i32) {
    %c0_i32 = arith.constant 0 : i32
    %c0_i32_0 = arith.constant 0 : i32
    %c0_i32_1 = arith.constant 0 : i32
    return %c0_i32, %c0_i32_0 : i32, i32
  }
  func.func @transform_4(%arg0: i32) -> (i32, i32) {
    %c0_i32 = arith.constant 0 : i32
    %c0_i32_0 = arith.constant 0 : i32
    %c0_i32_1 = arith.constant 0 : i32
    return %c0_i32, %c0_i32_0 : i32, i32
  }
  func.func @transform_5(%arg0: i32) -> (i32, i32) {
    %c0_i32 = arith.constant 0 : i32
    %c0_i32_0 = arith.constant 0 : i32
    %c0_i32_1 = arith.constant 0 : i32
    return %c0_i32, %c0_i32_0 : i32, i32
  }
  func.func @transform_6(%arg0: i32) -> (i32, i32) {
    %c0_i32 = arith.constant 0 : i32
    %c0_i32_0 = arith.constant 0 : i32
    %c0_i32_1 = arith.constant 0 : i32
    return %c0_i32, %c0_i32_0 : i32, i32
  }
  func.func @transform_7(%arg0: i32) -> (i32, i32) {
    %c0_i32 = arith.constant 0 : i32
    %c0_i32_0 = arith.constant 0 : i32
    %c0_i32_1 = arith.constant 0 : i32
    return %c0_i32, %c0_i32_0 : i32, i32
  }
  func.func @transform_8(%arg0: i32) -> (i32, i32) {
    %c0_i32 = arith.constant 0 : i32
    %c0_i32_0 = arith.constant 0 : i32
    %c0_i32_1 = arith.constant 0 : i32
    return %c0_i32, %c0_i32_0 : i32, i32
  }
  func.func @transform_9(%arg0: i32) -> (i32, i32) {
    %c0_i32 = arith.constant 0 : i32
    %c0_i32_0 = arith.constant 0 : i32
    return %c0_i32, %arg0 : i32, i32
  }
}

</mosaic_0001>

<llo_original>
// kernel: evaluate_continuous.1
$region0: #{evaluate_continuous.1}
  #allocation0 [shape = 'u32[]', space=smem, size = 0x4, offset = 0x4, fixed_abs, tag = 'smem constant byte address 0x4 - core index']
  #allocation1 [shape = 'u32[144,128]{1,0:T(1,128)}', space=vmem, size = 0x12000, scoped, tag = 'internal scratch']
  %s0 = inlined_call_operand.vmem [shape: f32[1024,32], index: 0, kind: input, shape index: {}]
  %s1 = inlined_call_operand.vmem [shape: f32[1024,4], index: 1, kind: input, shape index: {}]
  %s2 = inlined_call_operand.vmem [shape: f32[1,4], index: 2, kind: input, shape index: {}]
  %s3 = inlined_call_operand.vmem [shape: bf16[32,256], index: 3, kind: input, shape index: {}]
  %s4 = inlined_call_operand.vmem [shape: f32[1,256], index: 4, kind: input, shape index: {}]
  %s5 = inlined_call_operand.vmem [shape: bf16[256,128], index: 5, kind: input, shape index: {}]
  %s6 = inlined_call_operand.vmem [shape: f32[1,128], index: 6, kind: input, shape index: {}]
  %s7 = inlined_call_operand.vmem [shape: bf16[64,4], index: 7, kind: input, shape index: {}]
  %s8 = inlined_call_operand.vmem [shape: f32[1,4], index: 8, kind: input, shape index: {}]
  %s9 = inlined_call_operand.vmem [shape: f32[8,1024], index: 9, kind: output, shape index: {}]
  %s10 = sld [smem:[#allocation0]]
  $region46: #{evaluate_continuous.1} parent=0
    _
  %s12 = ssub.s32 1, %s10
  %s13 = scalar_select 0, %s12, %s10
  // Predicated region
  $region2: #{evaluate_continuous.1} parent=0 // pred_check
    _
  $region3: #{evaluate_continuous.1} parent=0 // pred_check_branch
    %15 = sbr.rel (0) target = $region5
  $region4: #{evaluate_continuous.1} parent=0 // pred_region
    _
  $region5: #{evaluate_continuous.1} parent=0 // pred_fallthru
    _
  // Predicated region
  $region6: #{evaluate_continuous.1} parent=0 // pred_check
    _
  $region7: #{evaluate_continuous.1} parent=0 // pred_check_branch
    %17 = sbr.rel (0) target = $region9
  $region8: #{evaluate_continuous.1} parent=0 // pred_region
    _
  $region9: #{evaluate_continuous.1} parent=0 // pred_fallthru
    _
  // Predicated region
  $region10: #{evaluate_continuous.1} parent=0 // pred_check
    _
  $region11: #{evaluate_continuous.1} parent=0 // pred_check_branch
    %19 = sbr.rel (0) target = $region13
  $region12: #{evaluate_continuous.1} parent=0 // pred_region
    _
  $region13: #{evaluate_continuous.1} parent=0 // pred_fallthru
    _
  // Predicated region
  $region14: #{evaluate_continuous.1} parent=0 // pred_check
    _
  $region15: #{evaluate_continuous.1} parent=0 // pred_check_branch
    %21 = sbr.rel (0) target = $region17
  $region16: #{evaluate_continuous.1} parent=0 // pred_region
    _
  $region17: #{evaluate_continuous.1} parent=0 // pred_fallthru
    _
  // Predicated region
  $region18: #{evaluate_continuous.1} parent=0 // pred_check
    _
  $region19: #{evaluate_continuous.1} parent=0 // pred_check_branch
    %23 = sbr.rel (0) target = $region21
  $region20: #{evaluate_continuous.1} parent=0 // pred_region
    _
  $region21: #{evaluate_continuous.1} parent=0 // pred_fallthru
    _
  // Predicated region
  $region22: #{evaluate_continuous.1} parent=0 // pred_check
    _
  $region23: #{evaluate_continuous.1} parent=0 // pred_check_branch
    %25 = sbr.rel (0) target = $region25
  $region24: #{evaluate_continuous.1} parent=0 // pred_region
    _
  $region25: #{evaluate_continuous.1} parent=0 // pred_fallthru
    _
  // Predicated region
  $region26: #{evaluate_continuous.1} parent=0 // pred_check
    _
  $region27: #{evaluate_continuous.1} parent=0 // pred_check_branch
    %27 = sbr.rel (0) target = $region29
  $region28: #{evaluate_continuous.1} parent=0 // pred_region
    _
  $region29: #{evaluate_continuous.1} parent=0 // pred_fallthru
    _
  // Predicated region
  $region30: #{evaluate_continuous.1} parent=0 // pred_check
    _
  $region31: #{evaluate_continuous.1} parent=0 // pred_check_branch
    %29 = sbr.rel (0) target = $region33
  $region32: #{evaluate_continuous.1} parent=0 // pred_region
    _
  $region33: #{evaluate_continuous.1} parent=0 // pred_fallthru
    _
  // Predicated region
  $region34: #{evaluate_continuous.1} parent=0 // pred_check
    _
  $region35: #{evaluate_continuous.1} parent=0 // pred_check_branch
    %31 = sbr.rel (0) target = $region37
  $region36: #{evaluate_continuous.1} parent=0 // pred_region
    _
  $region37: #{evaluate_continuous.1} parent=0 // pred_fallthru
    _
  %v33 = vld [vmem:[%s0] sm:$0xff]
  %v34 = vld [vmem:[%s0 + $0x8] sm:$0xff]
  %v35 = vld [vmem:[%s0 + $0x10] sm:$0xff]
  %v36 = vld [vmem:[%s0 + $0x18] sm:$0xff]
  %v37 = vld [vmem:[%s0 + $0x20] sm:$0xff]
  %v38 = vld [vmem:[%s0 + $0x28] sm:$0xff]
  %v39 = vld [vmem:[%s0 + $0x30] sm:$0xff]
  %v40 = vld [vmem:[%s0 + $0x38] sm:$0xff]
  %v41 = vld [vmem:[%s0 + $0x40] sm:$0xff]
  %v42 = vld [vmem:[%s0 + $0x48] sm:$0xff]
  %v43 = vld [vmem:[%s0 + $0x50] sm:$0xff]
  %v44 = vld [vmem:[%s0 + $0x58] sm:$0xff]
  %v45 = vld [vmem:[%s0 + $0x60] sm:$0xff]
  %v46 = vld [vmem:[%s0 + $0x68] sm:$0xff]
  %v47 = vld [vmem:[%s0 + $0x70] sm:$0xff]
  %v48 = vld [vmem:[%s0 + $0x78] sm:$0xff]
  %v49 = vld [vmem:[%s0 + $0x80] sm:$0xff]
  %v50 = vld [vmem:[%s0 + $0x88] sm:$0xff]
  %v51 = vld [vmem:[%s0 + $0x90] sm:$0xff]
  %v52 = vld [vmem:[%s0 + $0x98] sm:$0xff]
  %v53 = vld [vmem:[%s0 + $0xa0] sm:$0xff]
  %v54 = vld [vmem:[%s0 + $0xa8] sm:$0xff]
  %v55 = vld [vmem:[%s0 + $0xb0] sm:$0xff]
  %v56 = vld [vmem:[%s0 + $0xb8] sm:$0xff]
  %v57 = vld [vmem:[%s0 + $0xc0] sm:$0xff]
  %v58 = vld [vmem:[%s0 + $0xc8] sm:$0xff]
  %v59 = vld [vmem:[%s0 + $0xd0] sm:$0xff]
  %v60 = vld [vmem:[%s0 + $0xd8] sm:$0xff]
  %v61 = vld [vmem:[%s0 + $0xe0] sm:$0xff]
  %v62 = vld [vmem:[%s0 + $0xe8] sm:$0xff]
  %v63 = vld [vmem:[%s0 + $0xf0] sm:$0xff]
  %v64 = vld [vmem:[%s0 + $0xf8] sm:$0xff]
  %v65 = vld [vmem:[%s0 + $0x100] sm:$0xff]
  %v66 = vld [vmem:[%s0 + $0x108] sm:$0xff]
  %v67 = vld [vmem:[%s0 + $0x110] sm:$0xff]
  %v68 = vld [vmem:[%s0 + $0x118] sm:$0xff]
  %v69 = vld [vmem:[%s0 + $0x120] sm:$0xff]
  %v70 = vld [vmem:[%s0 + $0x128] sm:$0xff]
  %v71 = vld [vmem:[%s0 + $0x130] sm:$0xff]
  %v72 = vld [vmem:[%s0 + $0x138] sm:$0xff]
  %v73 = vld [vmem:[%s0 + $0x140] sm:$0xff]
  %v74 = vld [vmem:[%s0 + $0x148] sm:$0xff]
  %v75 = vld [vmem:[%s0 + $0x150] sm:$0xff]
  %v76 = vld [vmem:[%s0 + $0x158] sm:$0xff]
  %v77 = vld [vmem:[%s0 + $0x160] sm:$0xff]
  %v78 = vld [vmem:[%s0 + $0x168] sm:$0xff]
  %v79 = vld [vmem:[%s0 + $0x170] sm:$0xff]
  %v80 = vld [vmem:[%s0 + $0x178] sm:$0xff]
  %v81 = vld [vmem:[%s0 + $0x180] sm:$0xff]
  %v82 = vld [vmem:[%s0 + $0x188] sm:$0xff]
  %v83 = vld [vmem:[%s0 + $0x190] sm:$0xff]
  %v84 = vld [vmem:[%s0 + $0x198] sm:$0xff]
  %v85 = vld [vmem:[%s0 + $0x1a0] sm:$0xff]
  %v86 = vld [vmem:[%s0 + $0x1a8] sm:$0xff]
  %v87 = vld [vmem:[%s0 + $0x1b0] sm:$0xff]
  %v88 = vld [vmem:[%s0 + $0x1b8] sm:$0xff]
  %v89 = vld [vmem:[%s0 + $0x1c0] sm:$0xff]
  %v90 = vld [vmem:[%s0 + $0x1c8] sm:$0xff]
  %v91 = vld [vmem:[%s0 + $0x1d0] sm:$0xff]
  %v92 = vld [vmem:[%s0 + $0x1d8] sm:$0xff]
  %v93 = vld [vmem:[%s0 + $0x1e0] sm:$0xff]
  %v94 = vld [vmem:[%s0 + $0x1e8] sm:$0xff]
  %v95 = vld [vmem:[%s0 + $0x1f0] sm:$0xff]
  %v96 = vld [vmem:[%s0 + $0x1f8] sm:$0xff]
  %v97 = vld [vmem:[%s0 + $0x200] sm:$0xff]
  %v98 = vld [vmem:[%s0 + $0x208] sm:$0xff]
  %v99 = vld [vmem:[%s0 + $0x210] sm:$0xff]
  %v100 = vld [vmem:[%s0 + $0x218] sm:$0xff]
  %v101 = vld [vmem:[%s0 + $0x220] sm:$0xff]
  %v102 = vld [vmem:[%s0 + $0x228] sm:$0xff]
  %v103 = vld [vmem:[%s0 + $0x230] sm:$0xff]
  %v104 = vld [vmem:[%s0 + $0x238] sm:$0xff]
  %v105 = vld [vmem:[%s0 + $0x240] sm:$0xff]
  %v106 = vld [vmem:[%s0 + $0x248] sm:$0xff]
  %v107 = vld [vmem:[%s0 + $0x250] sm:$0xff]
  %v108 = vld [vmem:[%s0 + $0x258] sm:$0xff]
  %v109 = vld [vmem:[%s0 + $0x260] sm:$0xff]
  %v110 = vld [vmem:[%s0 + $0x268] sm:$0xff]
  %v111 = vld [vmem:[%s0 + $0x270] sm:$0xff]
  %v112 = vld [vmem:[%s0 + $0x278] sm:$0xff]
  %v113 = vld [vmem:[%s0 + $0x280] sm:$0xff]
  %v114 = vld [vmem:[%s0 + $0x288] sm:$0xff]
  %v115 = vld [vmem:[%s0 + $0x290] sm:$0xff]
  %v116 = vld [vmem:[%s0 + $0x298] sm:$0xff]
  %v117 = vld [vmem:[%s0 + $0x2a0] sm:$0xff]
  %v118 = vld [vmem:[%s0 + $0x2a8] sm:$0xff]
  %v119 = vld [vmem:[%s0 + $0x2b0] sm:$0xff]
  %v120 = vld [vmem:[%s0 + $0x2b8] sm:$0xff]
  %v121 = vld [vmem:[%s0 + $0x2c0] sm:$0xff]
  %v122 = vld [vmem:[%s0 + $0x2c8] sm:$0xff]
  %v123 = vld [vmem:[%s0 + $0x2d0] sm:$0xff]
  %v124 = vld [vmem:[%s0 + $0x2d8] sm:$0xff]
  %v125 = vld [vmem:[%s0 + $0x2e0] sm:$0xff]
  %v126 = vld [vmem:[%s0 + $0x2e8] sm:$0xff]
  %v127 = vld [vmem:[%s0 + $0x2f0] sm:$0xff]
  %v128 = vld [vmem:[%s0 + $0x2f8] sm:$0xff]
  %v129 = vld [vmem:[%s0 + $0x300] sm:$0xff]
  %v130 = vld [vmem:[%s0 + $0x308] sm:$0xff]
  %v131 = vld [vmem:[%s0 + $0x310] sm:$0xff]
  %v132 = vld [vmem:[%s0 + $0x318] sm:$0xff]
  %v133 = vld [vmem:[%s0 + $0x320] sm:$0xff]
  %v134 = vld [vmem:[%s0 + $0x328] sm:$0xff]
  %v135 = vld [vmem:[%s0 + $0x330] sm:$0xff]
  %v136 = vld [vmem:[%s0 + $0x338] sm:$0xff]
  %v137 = vld [vmem:[%s0 + $0x340] sm:$0xff]
  %v138 = vld [vmem:[%s0 + $0x348] sm:$0xff]
  %v139 = vld [vmem:[%s0 + $0x350] sm:$0xff]
  %v140 = vld [vmem:[%s0 + $0x358] sm:$0xff]
  %v141 = vld [vmem:[%s0 + $0x360] sm:$0xff]
  %v142 = vld [vmem:[%s0 + $0x368] sm:$0xff]
  %v143 = vld [vmem:[%s0 + $0x370] sm:$0xff]
  %v144 = vld [vmem:[%s0 + $0x378] sm:$0xff]
  %v145 = vld [vmem:[%s0 + $0x380] sm:$0xff]
  %v146 = vld [vmem:[%s0 + $0x388] sm:$0xff]
  %v147 = vld [vmem:[%s0 + $0x390] sm:$0xff]
  %v148 = vld [vmem:[%s0 + $0x398] sm:$0xff]
  %v149 = vld [vmem:[%s0 + $0x3a0] sm:$0xff]
  %v150 = vld [vmem:[%s0 + $0x3a8] sm:$0xff]
  %v151 = vld [vmem:[%s0 + $0x3b0] sm:$0xff]
  %v152 = vld [vmem:[%s0 + $0x3b8] sm:$0xff]
  %v153 = vld [vmem:[%s0 + $0x3c0] sm:$0xff]
  %v154 = vld [vmem:[%s0 + $0x3c8] sm:$0xff]
  %v155 = vld [vmem:[%s0 + $0x3d0] sm:$0xff]
  %v156 = vld [vmem:[%s0 + $0x3d8] sm:$0xff]
  %v157 = vld [vmem:[%s0 + $0x3e0] sm:$0xff]
  %v158 = vld [vmem:[%s0 + $0x3e8] sm:$0xff]
  %v159 = vld [vmem:[%s0 + $0x3f0] sm:$0xff]
  %v160 = vld [vmem:[%s0 + $0x3f8] sm:$0xff]
  %v161 = vpack.c.bf16 %v34, %v33
  %v162 = vpack.c.bf16 %v36, %v35
  %v163 = vpack.c.bf16 %v38, %v37
  %v164 = vpack.c.bf16 %v40, %v39
  %v165 = vpack.c.bf16 %v42, %v41
  %v166 = vpack.c.bf16 %v44, %v43
  %v167 = vpack.c.bf16 %v46, %v45
  %v168 = vpack.c.bf16 %v48, %v47
  %v169 = vpack.c.bf16 %v50, %v49
  %v170 = vpack.c.bf16 %v52, %v51
  %v171 = vpack.c.bf16 %v54, %v53
  %v172 = vpack.c.bf16 %v56, %v55
  %v173 = vpack.c.bf16 %v58, %v57
  %v174 = vpack.c.bf16 %v60, %v59
  %v175 = vpack.c.bf16 %v62, %v61
  %v176 = vpack.c.bf16 %v64, %v63
  %v177 = vpack.c.bf16 %v66, %v65
  %v178 = vpack.c.bf16 %v68, %v67
  %v179 = vpack.c.bf16 %v70, %v69
  %v180 = vpack.c.bf16 %v72, %v71
  %v181 = vpack.c.bf16 %v74, %v73
  %v182 = vpack.c.bf16 %v76, %v75
  %v183 = vpack.c.bf16 %v78, %v77
  %v184 = vpack.c.bf16 %v80, %v79
  %v185 = vpack.c.bf16 %v82, %v81
  %v186 = vpack.c.bf16 %v84, %v83
  %v187 = vpack.c.bf16 %v86, %v85
  %v188 = vpack.c.bf16 %v88, %v87
  %v189 = vpack.c.bf16 %v90, %v89
  %v190 = vpack.c.bf16 %v92, %v91
  %v191 = vpack.c.bf16 %v94, %v93
  %v192 = vpack.c.bf16 %v96, %v95
  %v193 = vpack.c.bf16 %v98, %v97
  %v194 = vpack.c.bf16 %v100, %v99
  %v195 = vpack.c.bf16 %v102, %v101
  %v196 = vpack.c.bf16 %v104, %v103
  %v197 = vpack.c.bf16 %v106, %v105
  %v198 = vpack.c.bf16 %v108, %v107
  %v199 = vpack.c.bf16 %v110, %v109
  %v200 = vpack.c.bf16 %v112, %v111
  %v201 = vpack.c.bf16 %v114, %v113
  %v202 = vpack.c.bf16 %v116, %v115
  %v203 = vpack.c.bf16 %v118, %v117
  %v204 = vpack.c.bf16 %v120, %v119
  %v205 = vpack.c.bf16 %v122, %v121
  %v206 = vpack.c.bf16 %v124, %v123
  %v207 = vpack.c.bf16 %v126, %v125
  %v208 = vpack.c.bf16 %v128, %v127
  %v209 = vpack.c.bf16 %v130, %v129
  %v210 = vpack.c.bf16 %v132, %v131
  %v211 = vpack.c.bf16 %v134, %v133
  %v212 = vpack.c.bf16 %v136, %v135
  %v213 = vpack.c.bf16 %v138, %v137
  %v214 = vpack.c.bf16 %v140, %v139
  %v215 = vpack.c.bf16 %v142, %v141
  %v216 = vpack.c.bf16 %v144, %v143
  %v217 = vpack.c.bf16 %v146, %v145
  %v218 = vpack.c.bf16 %v148, %v147
  %v219 = vpack.c.bf16 %v150, %v149
  %v220 = vpack.c.bf16 %v152, %v151
  %v221 = vpack.c.bf16 %v154, %v153
  %v222 = vpack.c.bf16 %v156, %v155
  %v223 = vpack.c.bf16 %v158, %v157
  %v224 = vpack.c.bf16 %v160, %v159
  %v225 = vld [vmem:[%s3] sm:$0xff]
  %v226 = vld [vmem:[%s3 + $0x8] sm:$0xff]
  %v227 = vld [vmem:[%s3 + $0x10] sm:$0xff]
  %v228 = vld [vmem:[%s3 + $0x18] sm:$0xff]
  %v229 = vld [vmem:[%s4] sm:$0x3]
  %v231 = vlaneseq
  %v232 = vshrl.u32 %v231, 7
  %v233 = vsub.s32 0, %v232
  %v234 = vrot.slane %v229, %v233
  %v235 = vlaneseq
  %v236 = vshrl.u32 %v235, 7
  %v237 = vsub.s32 1, %v236
  %v238 = vrot.slane %v229, %v237
  %v245 = vunpack.c.l.b16 %v225
  %v246 = vunpack.c.h.b16 %v225
  %v247 = vunpack.c.l.b16 %v226
  %v248 = vunpack.c.h.b16 %v226
  %v249 = vunpack.c.l.b16 %v227
  %v250 = vunpack.c.h.b16 %v227
  %v251 = vunpack.c.l.b16 %v228
  %v252 = vunpack.c.h.b16 %v228
  %v253 = vpack.c.b16 %v247, %v245
  %v254 = vpack.c.b16 %v248, %v246
  %v255 = vpack.c.b16 %v251, %v249
  %v256 = vpack.c.b16 %v252, %v250
  %vm261 = vcmask 261120
  %v263 = vsel %vm261, %v161, 0
  %v266 = vsel %vm261, %v162, 0
  %v269 = vsel %vm261, %v163, 0
  %v272 = vsel %vm261, %v164, 0
  %v275 = vsel %vm261, %v165, 0
  %v278 = vsel %vm261, %v166, 0
  %v281 = vsel %vm261, %v167, 0
  %v284 = vsel %vm261, %v168, 0
  %v287 = vsel %vm261, %v169, 0
  %v290 = vsel %vm261, %v170, 0
  %v293 = vsel %vm261, %v171, 0
  %v296 = vsel %vm261, %v172, 0
  %v299 = vsel %vm261, %v173, 0
  %v302 = vsel %vm261, %v174, 0
  %v305 = vsel %vm261, %v175, 0
  %v308 = vsel %vm261, %v176, 0
  %v311 = vsel %vm261, %v177, 0
  %v314 = vsel %vm261, %v178, 0
  %v317 = vsel %vm261, %v179, 0
  %v320 = vsel %vm261, %v180, 0
  %v323 = vsel %vm261, %v181, 0
  %v326 = vsel %vm261, %v182, 0
  %v329 = vsel %vm261, %v183, 0
  %v332 = vsel %vm261, %v184, 0
  %v335 = vsel %vm261, %v185, 0
  %v338 = vsel %vm261, %v186, 0
  %v341 = vsel %vm261, %v187, 0
  %v344 = vsel %vm261, %v188, 0
  %v347 = vsel %vm261, %v189, 0
  %v350 = vsel %vm261, %v190, 0
  %v353 = vsel %vm261, %v191, 0
  %v356 = vsel %vm261, %v192, 0
  %v359 = vsel %vm261, %v193, 0
  %v362 = vsel %vm261, %v194, 0
  %v365 = vsel %vm261, %v195, 0
  %v368 = vsel %vm261, %v196, 0
  %v371 = vsel %vm261, %v197, 0
  %v374 = vsel %vm261, %v198, 0
  %v377 = vsel %vm261, %v199, 0
  %v380 = vsel %vm261, %v200, 0
  %v383 = vsel %vm261, %v201, 0
  %v386 = vsel %vm261, %v202, 0
  %v389 = vsel %vm261, %v203, 0
  %v392 = vsel %vm261, %v204, 0
  %v395 = vsel %vm261, %v205, 0
  %v398 = vsel %vm261, %v206, 0
  %v401 = vsel %vm261, %v207, 0
  %v404 = vsel %vm261, %v208, 0
  %v407 = vsel %vm261, %v209, 0
  %v410 = vsel %vm261, %v210, 0
  %v413 = vsel %vm261, %v211, 0
  %v416 = vsel %vm261, %v212, 0
  %v419 = vsel %vm261, %v213, 0
  %v422 = vsel %vm261, %v214, 0
  %v425 = vsel %vm261, %v215, 0
  %v428 = vsel %vm261, %v216, 0
  %v431 = vsel %vm261, %v217, 0
  %v434 = vsel %vm261, %v218, 0
  %v437 = vsel %vm261, %v219, 0
  %v440 = vsel %vm261, %v220, 0
  %v443 = vsel %vm261, %v221, 0
  %v446 = vsel %vm261, %v222, 0
  %v449 = vsel %vm261, %v223, 0
  %v452 = vsel %vm261, %v224, 0
  %454 = vmatprep.subr.bf16.mxu0 %v254
  %455 = vmatpush1.bf16.msra.mxu0 %v253
  %456 = vmatprep.subr.bf16.mxu0 %v256
  %457 = vmatpush1.bf16.msra.mxu0 %v255
  %458 = vmatprep.subr.bf16.mxu0 0
  %459 = vmatpush1.bf16.msra.mxu0 0
  %460 = vmatprep.subr.bf16.mxu0 0
  %461 = vmatpush1.bf16.msra.mxu0 0
  %462 = vmatprep.subr.bf16.mxu0 0
  %463 = vmatpush1.bf16.msra.mxu0 0
  %464 = vmatprep.subr.bf16.mxu0 0
  %465 = vmatpush1.bf16.msra.mxu0 0
  %466 = vmatprep.subr.bf16.mxu0 0
  %467 = vmatpush1.bf16.msra.mxu0 0
  %468 = vmatprep.subr.bf16.mxu0 0
  %469 = vmatpush1.bf16.msra.mxu0 0
  %470 = vmatprep.subr.bf16.mxu0 0
  %471 = vmatpush1.bf16.msra.mxu0 0
  %472 = vmatprep.subr.bf16.mxu0 0
  %473 = vmatpush1.bf16.msra.mxu0 0
  %474 = vmatprep.subr.bf16.mxu0 0
  %475 = vmatpush1.bf16.msra.mxu0 0
  %476 = vmatprep.subr.bf16.mxu0 0
  %477 = vmatpush1.bf16.msra.mxu0 0
  %478 = vmatprep.subr.bf16.mxu0 0
  %479 = vmatpush1.bf16.msra.mxu0 0
  %480 = vmatprep.subr.bf16.mxu0 0
  %481 = vmatpush1.bf16.msra.mxu0 0
  %482 = vmatprep.subr.bf16.mxu0 0
  %483 = vmatpush1.bf16.msra.mxu0 0
  %484 = vmatprep.subr.bf16.mxu0 0
  %485 = vmatpush1.bf16.msra.mxu0 0
  %486 = vmatprep.mubr.bf16.mxu0 0
  %487 = vmatmul.mubr.bf16.gmra.mrb[0].mxu0 %v263
  %v488 = vpop.f32.mrb[0].mxu0
  %v489 = vadd.f32 %v234, %v488
  %v490 = vpop.f32.mrb[0].mxu0
  %v491 = vadd.f32 %v238, %v490
  %v492 = vpop.f32.mrb[0].mxu0
  %v493 = vadd.f32 %v234, %v492
  %v494 = vpop.f32.mrb[0].mxu0
  %v495 = vadd.f32 %v238, %v494
  %496 = vmatprep.mubr.bf16.mxu0 0
  %497 = vmatmul.mubr.bf16.gmra.mrb[0].mxu0 %v266
  %v498 = vpop.f32.mrb[0].mxu0
  %v499 = vadd.f32 %v234, %v498
  %v500 = vpop.f32.mrb[0].mxu0
  %v501 = vadd.f32 %v238, %v500
  %v502 = vpop.f32.mrb[0].mxu0
  %v503 = vadd.f32 %v234, %v502
  %v504 = vpop.f32.mrb[0].mxu0
  %v505 = vadd.f32 %v238, %v504
  %506 = vmatprep.mubr.bf16.mxu0 0
  %507 = vmatmul.mubr.bf16.gmra.mrb[0].mxu0 %v269
  %v508 = vpop.f32.mrb[0].mxu0
  %v509 = vadd.f32 %v234, %v508
  %v510 = vpop.f32.mrb[0].mxu0
  %v511 = vadd.f32 %v238, %v510
  %v512 = vpop.f32.mrb[0].mxu0
  %v513 = vadd.f32 %v234, %v512
  %v514 = vpop.f32.mrb[0].mxu0
  %v515 = vadd.f32 %v238, %v514
  %516 = vmatprep.mubr.bf16.mxu0 0
  %517 = vmatmul.mubr.bf16.gmra.mrb[0].mxu0 %v272
  %v518 = vpop.f32.mrb[0].mxu0
  %v519 = vadd.f32 %v234, %v518
  %v520 = vpop.f32.mrb[0].mxu0
  %v521 = vadd.f32 %v238, %v520
  %v522 = vpop.f32.mrb[0].mxu0
  %v523 = vadd.f32 %v234, %v522
  %v524 = vpop.f32.mrb[0].mxu0
  %v525 = vadd.f32 %v238, %v524
  %526 = vmatprep.mubr.bf16.mxu0 0
  %527 = vmatmul.mubr.bf16.gmra.mrb[0].mxu0 %v275
  %v528 = vpop.f32.mrb[0].mxu0
  %v529 = vadd.f32 %v234, %v528
  %v530 = vpop.f32.mrb[0].mxu0
  %v531 = vadd.f32 %v238, %v530
  %v532 = vpop.f32.mrb[0].mxu0
  %v533 = vadd.f32 %v234, %v532
  %v534 = vpop.f32.mrb[0].mxu0
  %v535 = vadd.f32 %v238, %v534
  %536 = vmatprep.mubr.bf16.mxu0 0
  %537 = vmatmul.mubr.bf16.gmra.mrb[0].mxu0 %v278
  %v538 = vpop.f32.mrb[0].mxu0
  %v539 = vadd.f32 %v234, %v538
  %v540 = vpop.f32.mrb[0].mxu0
  %v541 = vadd.f32 %v238, %v540
  %v542 = vpop.f32.mrb[0].mxu0
  %v543 = vadd.f32 %v234, %v542
  %v544 = vpop.f32.mrb[0].mxu0
  %v545 = vadd.f32 %v238, %v544
  %546 = vmatprep.mubr.bf16.mxu0 0
  %547 = vmatmul.mubr.bf16.gmra.mrb[0].mxu0 %v281
  %v548 = vpop.f32.mrb[0].mxu0
  %v549 = vadd.f32 %v234, %v548
  %v550 = vpop.f32.mrb[0].mxu0
  %v551 = vadd.f32 %v238, %v550
  %v552 = vpop.f32.mrb[0].mxu0
  %v553 = vadd.f32 %v234, %v552
  %v554 = vpop.f32.mrb[0].mxu0
  %v555 = vadd.f32 %v238, %v554
  %556 = vmatprep.mubr.bf16.mxu0 0
  %557 = vmatmul.mubr.bf16.gmra.mrb[0].mxu0 %v284
  %v558 = vpop.f32.mrb[0].mxu0
  %v559 = vadd.f32 %v234, %v558
  %v560 = vpop.f32.mrb[0].mxu0
  %v561 = vadd.f32 %v238, %v560
  %v562 = vpop.f32.mrb[0].mxu0
  %v563 = vadd.f32 %v234, %v562
  %v564 = vpop.f32.mrb[0].mxu0
  %v565 = vadd.f32 %v238, %v564
  %566 = vmatprep.mubr.bf16.mxu0 0
  %567 = vmatmul.mubr.bf16.gmra.mrb[0].mxu0 %v287
  %v568 = vpop.f32.mrb[0].mxu0
  %v569 = vadd.f32 %v234, %v568
  %v570 = vpop.f32.mrb[0].mxu0
  %v571 = vadd.f32 %v238, %v570
  %v572 = vpop.f32.mrb[0].mxu0
  %v573 = vadd.f32 %v234, %v572
  %v574 = vpop.f32.mrb[0].mxu0
  %v575 = vadd.f32 %v238, %v574
  %576 = vmatprep.mubr.bf16.mxu0 0
  %577 = vmatmul.mubr.bf16.gmra.mrb[0].mxu0 %v290
  %v578 = vpop.f32.mrb[0].mxu0
  %v579 = vadd.f32 %v234, %v578
  %v580 = vpop.f32.mrb[0].mxu0
  %v581 = vadd.f32 %v238, %v580
  %v582 = vpop.f32.mrb[0].mxu0
  %v583 = vadd.f32 %v234, %v582
  %v584 = vpop.f32.mrb[0].mxu0
  %v585 = vadd.f32 %v238, %v584
  %586 = vmatprep.mubr.bf16.mxu0 0
  %587 = vmatmul.mubr.bf16.gmra.mrb[0].mxu0 %v293
  %v588 = vpop.f32.mrb[0].mxu0
  %v589 = vadd.f32 %v234, %v588
  %v590 = vpop.f32.mrb[0].mxu0
  %v591 = vadd.f32 %v238, %v590
  %v592 = vpop.f32.mrb[0].mxu0
  %v593 = vadd.f32 %v234, %v592
  %v594 = vpop.f32.mrb[0].mxu0
  %v595 = vadd.f32 %v238, %v594
  %596 = vmatprep.mubr.bf16.mxu0 0
  %597 = vmatmul.mubr.bf16.gmra.mrb[0].mxu0 %v296
  %v598 = vpop.f32.mrb[0].mxu0
  %v599 = vadd.f32 %v234, %v598
  %v600 = vpop.f32.mrb[0].mxu0
  %v601 = vadd.f32 %v238, %v600
  %v602 = vpop.f32.mrb[0].mxu0
  %v603 = vadd.f32 %v234, %v602
  %v604 = vpop.f32.mrb[0].mxu0
  %v605 = vadd.f32 %v238, %v604
  %606 = vmatprep.mubr.bf16.mxu0 0
  %607 = vmatmul.mubr.bf16.gmra.mrb[0].mxu0 %v299
  %v608 = vpop.f32.mrb[0].mxu0
  %v609 = vadd.f32 %v234, %v608
  %v610 = vpop.f32.mrb[0].mxu0
  %v611 = vadd.f32 %v238, %v610
  %v612 = vpop.f32.mrb[0].mxu0
  %v613 = vadd.f32 %v234, %v612
  %v614 = vpop.f32.mrb[0].mxu0
  %v615 = vadd.f32 %v238, %v614
  %616 = vmatprep.mubr.bf16.mxu0 0
  %617 = vmatmul.mubr.bf16.gmra.mrb[0].mxu0 %v302
  %v618 = vpop.f32.mrb[0].mxu0
  %v619 = vadd.f32 %v234, %v618
  %v620 = vpop.f32.mrb[0].mxu0
  %v621 = vadd.f32 %v238, %v620
  %v622 = vpop.f32.mrb[0].mxu0
  %v623 = vadd.f32 %v234, %v622
  %v624 = vpop.f32.mrb[0].mxu0
  %v625 = vadd.f32 %v238, %v624
  %626 = vmatprep.mubr.bf16.mxu0 0
  %627 = vmatmul.mubr.bf16.gmra.mrb[0].mxu0 %v305
  %v628 = vpop.f32.mrb[0].mxu0
  %v629 = vadd.f32 %v234, %v628
  %v630 = vpop.f32.mrb[0].mxu0
  %v631 = vadd.f32 %v238, %v630
  %v632 = vpop.f32.mrb[0].mxu0
  %v633 = vadd.f32 %v234, %v632
  %v634 = vpop.f32.mrb[0].mxu0
  %v635 = vadd.f32 %v238, %v634
  %636 = vmatprep.mubr.bf16.mxu0 0
  %637 = vmatmul.mubr.bf16.gmra.mrb[0].mxu0 %v308
  %v638 = vpop.f32.mrb[0].mxu0
  %v639 = vadd.f32 %v234, %v638
  %v640 = vpop.f32.mrb[0].mxu0
  %v641 = vadd.f32 %v238, %v640
  %v642 = vpop.f32.mrb[0].mxu0
  %v643 = vadd.f32 %v234, %v642
  %v644 = vpop.f32.mrb[0].mxu0
  %v645 = vadd.f32 %v238, %v644
  %646 = vmatprep.mubr.bf16.mxu0 0
  %647 = vmatmul.mubr.bf16.gmra.mrb[0].mxu0 %v311
  %v648 = vpop.f32.mrb[0].mxu0
  %v649 = vadd.f32 %v234, %v648
  %v650 = vpop.f32.mrb[0].mxu0
  %v651 = vadd.f32 %v238, %v650
  %v652 = vpop.f32.mrb[0].mxu0
  %v653 = vadd.f32 %v234, %v652
  %v654 = vpop.f32.mrb[0].mxu0
  %v655 = vadd.f32 %v238, %v654
  %656 = vmatprep.mubr.bf16.mxu0 0
  %657 = vmatmul.mubr.bf16.gmra.mrb[0].mxu0 %v314
  %v658 = vpop.f32.mrb[0].mxu0
  %v659 = vadd.f32 %v234, %v658
  %v660 = vpop.f32.mrb[0].mxu0
  %v661 = vadd.f32 %v238, %v660
  %v662 = vpop.f32.mrb[0].mxu0
  %v663 = vadd.f32 %v234, %v662
  %v664 = vpop.f32.mrb[0].mxu0
  %v665 = vadd.f32 %v238, %v664
  %666 = vmatprep.mubr.bf16.mxu0 0
  %667 = vmatmul.mubr.bf16.gmra.mrb[0].mxu0 %v317
  %v668 = vpop.f32.mrb[0].mxu0
  %v669 = vadd.f32 %v234, %v668
  %v670 = vpop.f32.mrb[0].mxu0
  %v671 = vadd.f32 %v238, %v670
  %v672 = vpop.f32.mrb[0].mxu0
  %v673 = vadd.f32 %v234, %v672
  %v674 = vpop.f32.mrb[0].mxu0
  %v675 = vadd.f32 %v238, %v674
  %676 = vmatprep.mubr.bf16.mxu0 0
  %677 = vmatmul.mubr.bf16.gmra.mrb[0].mxu0 %v320
  %v678 = vpop.f32.mrb[0].mxu0
  %v679 = vadd.f32 %v234, %v678
  %v680 = vpop.f32.mrb[0].mxu0
  %v681 = vadd.f32 %v238, %v680
  %v682 = vpop.f32.mrb[0].mxu0
  %v683 = vadd.f32 %v234, %v682
  %v684 = vpop.f32.mrb[0].mxu0
  %v685 = vadd.f32 %v238, %v684
  %686 = vmatprep.mubr.bf16.mxu0 0
  %687 = vmatmul.mubr.bf16.gmra.mrb[0].mxu0 %v323
  %v688 = vpop.f32.mrb[0].mxu0
  %v689 = vadd.f32 %v234, %v688
  %v690 = vpop.f32.mrb[0].mxu0
  %v691 = vadd.f32 %v238, %v690
  %v692 = vpop.f32.mrb[0].mxu0
  %v693 = vadd.f32 %v234, %v692
  %v694 = vpop.f32.mrb[0].mxu0
  %v695 = vadd.f32 %v238, %v694
  %696 = vmatprep.mubr.bf16.mxu0 0
  %697 = vmatmul.mubr.bf16.gmra.mrb[0].mxu0 %v326
  %v698 = vpop.f32.mrb[0].mxu0
  %v699 = vadd.f32 %v234, %v698
  %v700 = vpop.f32.mrb[0].mxu0
  %v701 = vadd.f32 %v238, %v700
  %v702 = vpop.f32.mrb[0].mxu0
  %v703 = vadd.f32 %v234, %v702
  %v704 = vpop.f32.mrb[0].mxu0
  %v705 = vadd.f32 %v238, %v704
  %706 = vmatprep.mubr.bf16.mxu0 0
  %707 = vmatmul.mubr.bf16.gmra.mrb[0].mxu0 %v329
  %v708 = vpop.f32.mrb[0].mxu0
  %v709 = vadd.f32 %v234, %v708
  %v710 = vpop.f32.mrb[0].mxu0
  %v711 = vadd.f32 %v238, %v710
  %v712 = vpop.f32.mrb[0].mxu0
  %v713 = vadd.f32 %v234, %v712
  %v714 = vpop.f32.mrb[0].mxu0
  %v715 = vadd.f32 %v238, %v714
  %716 = vmatprep.mubr.bf16.mxu0 0
  %717 = vmatmul.mubr.bf16.gmra.mrb[0].mxu0 %v332
  %v718 = vpop.f32.mrb[0].mxu0
  %v719 = vadd.f32 %v234, %v718
  %v720 = vpop.f32.mrb[0].mxu0
  %v721 = vadd.f32 %v238, %v720
  %v722 = vpop.f32.mrb[0].mxu0
  %v723 = vadd.f32 %v234, %v722
  %v724 = vpop.f32.mrb[0].mxu0
  %v725 = vadd.f32 %v238, %v724
  %726 = vmatprep.mubr.bf16.mxu0 0
  %727 = vmatmul.mubr.bf16.gmra.mrb[0].mxu0 %v335
  %v728 = vpop.f32.mrb[0].mxu0
  %v729 = vadd.f32 %v234, %v728
  %v730 = vpop.f32.mrb[0].mxu0
  %v731 = vadd.f32 %v238, %v730
  %v732 = vpop.f32.mrb[0].mxu0
  %v733 = vadd.f32 %v234, %v732
  %v734 = vpop.f32.mrb[0].mxu0
  %v735 = vadd.f32 %v238, %v734
  %736 = vmatprep.mubr.bf16.mxu0 0
  %737 = vmatmul.mubr.bf16.gmra.mrb[0].mxu0 %v338
  %v738 = vpop.f32.mrb[0].mxu0
  %v739 = vadd.f32 %v234, %v738
  %v740 = vpop.f32.mrb[0].mxu0
  %v741 = vadd.f32 %v238, %v740
  %v742 = vpop.f32.mrb[0].mxu0
  %v743 = vadd.f32 %v234, %v742
  %v744 = vpop.f32.mrb[0].mxu0
  %v745 = vadd.f32 %v238, %v744
  %746 = vmatprep.mubr.bf16.mxu0 0
  %747 = vmatmul.mubr.bf16.gmra.mrb[0].mxu0 %v341
  %v748 = vpop.f32.mrb[0].mxu0
  %v749 = vadd.f32 %v234, %v748
  %v750 = vpop.f32.mrb[0].mxu0
  %v751 = vadd.f32 %v238, %v750
  %v752 = vpop.f32.mrb[0].mxu0
  %v753 = vadd.f32 %v234, %v752
  %v754 = vpop.f32.mrb[0].mxu0
  %v755 = vadd.f32 %v238, %v754
  %756 = vmatprep.mubr.bf16.mxu0 0
  %757 = vmatmul.mubr.bf16.gmra.mrb[0].mxu0 %v344
  %v758 = vpop.f32.mrb[0].mxu0
  %v759 = vadd.f32 %v234, %v758
  %v760 = vpop.f32.mrb[0].mxu0
  %v761 = vadd.f32 %v238, %v760
  %v762 = vpop.f32.mrb[0].mxu0
  %v763 = vadd.f32 %v234, %v762
  %v764 = vpop.f32.mrb[0].mxu0
  %v765 = vadd.f32 %v238, %v764
  %766 = vmatprep.mubr.bf16.mxu0 0
  %767 = vmatmul.mubr.bf16.gmra.mrb[0].mxu0 %v347
  %v768 = vpop.f32.mrb[0].mxu0
  %v769 = vadd.f32 %v234, %v768
  %v770 = vpop.f32.mrb[0].mxu0
  %v771 = vadd.f32 %v238, %v770
  %v772 = vpop.f32.mrb[0].mxu0
  %v773 = vadd.f32 %v234, %v772
  %v774 = vpop.f32.mrb[0].mxu0
  %v775 = vadd.f32 %v238, %v774
  %776 = vmatprep.mubr.bf16.mxu0 0
  %777 = vmatmul.mubr.bf16.gmra.mrb[0].mxu0 %v350
  %v778 = vpop.f32.mrb[0].mxu0
  %v779 = vadd.f32 %v234, %v778
  %v780 = vpop.f32.mrb[0].mxu0
  %v781 = vadd.f32 %v238, %v780
  %v782 = vpop.f32.mrb[0].mxu0
  %v783 = vadd.f32 %v234, %v782
  %v784 = vpop.f32.mrb[0].mxu0
  %v785 = vadd.f32 %v238, %v784
  %786 = vmatprep.mubr.bf16.mxu0 0
  %787 = vmatmul.mubr.bf16.gmra.mrb[0].mxu0 %v353
  %v788 = vpop.f32.mrb[0].mxu0
  %v789 = vadd.f32 %v234, %v788
  %v790 = vpop.f32.mrb[0].mxu0
  %v791 = vadd.f32 %v238, %v790
  %v792 = vpop.f32.mrb[0].mxu0
  %v793 = vadd.f32 %v234, %v792
  %v794 = vpop.f32.mrb[0].mxu0
  %v795 = vadd.f32 %v238, %v794
  %796 = vmatprep.mubr.bf16.mxu0 0
  %797 = vmatmul.mubr.bf16.gmra.mrb[0].mxu0 %v356
  %v798 = vpop.f32.mrb[0].mxu0
  %v799 = vadd.f32 %v234, %v798
  %v800 = vpop.f32.mrb[0].mxu0
  %v801 = vadd.f32 %v238, %v800
  %v802 = vpop.f32.mrb[0].mxu0
  %v803 = vadd.f32 %v234, %v802
  %v804 = vpop.f32.mrb[0].mxu0
  %v805 = vadd.f32 %v238, %v804
  %806 = vmatprep.mubr.bf16.mxu0 0
  %807 = vmatmul.mubr.bf16.gmra.mrb[0].mxu0 %v359
  %v808 = vpop.f32.mrb[0].mxu0
  %v809 = vadd.f32 %v234, %v808
  %v810 = vpop.f32.mrb[0].mxu0
  %v811 = vadd.f32 %v238, %v810
  %v812 = vpop.f32.mrb[0].mxu0
  %v813 = vadd.f32 %v234, %v812
  %v814 = vpop.f32.mrb[0].mxu0
  %v815 = vadd.f32 %v238, %v814
  %816 = vmatprep.mubr.bf16.mxu0 0
  %817 = vmatmul.mubr.bf16.gmra.mrb[0].mxu0 %v362
  %v818 = vpop.f32.mrb[0].mxu0
  %v819 = vadd.f32 %v234, %v818
  %v820 = vpop.f32.mrb[0].mxu0
  %v821 = vadd.f32 %v238, %v820
  %v822 = vpop.f32.mrb[0].mxu0
  %v823 = vadd.f32 %v234, %v822
  %v824 = vpop.f32.mrb[0].mxu0
  %v825 = vadd.f32 %v238, %v824
  %826 = vmatprep.mubr.bf16.mxu0 0
  %827 = vmatmul.mubr.bf16.gmra.mrb[0].mxu0 %v365
  %v828 = vpop.f32.mrb[0].mxu0
  %v829 = vadd.f32 %v234, %v828
  %v830 = vpop.f32.mrb[0].mxu0
  %v831 = vadd.f32 %v238, %v830
  %v832 = vpop.f32.mrb[0].mxu0
  %v833 = vadd.f32 %v234, %v832
  %v834 = vpop.f32.mrb[0].mxu0
  %v835 = vadd.f32 %v238, %v834
  %836 = vmatprep.mubr.bf16.mxu0 0
  %837 = vmatmul.mubr.bf16.gmra.mrb[0].mxu0 %v368
  %v838 = vpop.f32.mrb[0].mxu0
  %v839 = vadd.f32 %v234, %v838
  %v840 = vpop.f32.mrb[0].mxu0
  %v841 = vadd.f32 %v238, %v840
  %v842 = vpop.f32.mrb[0].mxu0
  %v843 = vadd.f32 %v234, %v842
  %v844 = vpop.f32.mrb[0].mxu0
  %v845 = vadd.f32 %v238, %v844
  %846 = vmatprep.mubr.bf16.mxu0 0
  %847 = vmatmul.mubr.bf16.gmra.mrb[0].mxu0 %v371
  %v848 = vpop.f32.mrb[0].mxu0
  %v849 = vadd.f32 %v234, %v848
  %v850 = vpop.f32.mrb[0].mxu0
  %v851 = vadd.f32 %v238, %v850
  %v852 = vpop.f32.mrb[0].mxu0
  %v853 = vadd.f32 %v234, %v852
  %v854 = vpop.f32.mrb[0].mxu0
  %v855 = vadd.f32 %v238, %v854
  %856 = vmatprep.mubr.bf16.mxu0 0
  %857 = vmatmul.mubr.bf16.gmra.mrb[0].mxu0 %v374
  %v858 = vpop.f32.mrb[0].mxu0
  %v859 = vadd.f32 %v234, %v858
  %v860 = vpop.f32.mrb[0].mxu0
  %v861 = vadd.f32 %v238, %v860
  %v862 = vpop.f32.mrb[0].mxu0
  %v863 = vadd.f32 %v234, %v862
  %v864 = vpop.f32.mrb[0].mxu0
  %v865 = vadd.f32 %v238, %v864
  %866 = vmatprep.mubr.bf16.mxu0 0
  %867 = vmatmul.mubr.bf16.gmra.mrb[0].mxu0 %v377
  %v868 = vpop.f32.mrb[0].mxu0
  %v869 = vadd.f32 %v234, %v868
  %v870 = vpop.f32.mrb[0].mxu0
  %v871 = vadd.f32 %v238, %v870
  %v872 = vpop.f32.mrb[0].mxu0
  %v873 = vadd.f32 %v234, %v872
  %v874 = vpop.f32.mrb[0].mxu0
  %v875 = vadd.f32 %v238, %v874
  %876 = vmatprep.mubr.bf16.mxu0 0
  %877 = vmatmul.mubr.bf16.gmra.mrb[0].mxu0 %v380
  %v878 = vpop.f32.mrb[0].mxu0
  %v879 = vadd.f32 %v234, %v878
  %v880 = vpop.f32.mrb[0].mxu0
  %v881 = vadd.f32 %v238, %v880
  %v882 = vpop.f32.mrb[0].mxu0
  %v883 = vadd.f32 %v234, %v882
  %v884 = vpop.f32.mrb[0].mxu0
  %v885 = vadd.f32 %v238, %v884
  %886 = vmatprep.mubr.bf16.mxu0 0
  %887 = vmatmul.mubr.bf16.gmra.mrb[0].mxu0 %v383
  %v888 = vpop.f32.mrb[0].mxu0
  %v889 = vadd.f32 %v234, %v888
  %v890 = vpop.f32.mrb[0].mxu0
  %v891 = vadd.f32 %v238, %v890
  %v892 = vpop.f32.mrb[0].mxu0
  %v893 = vadd.f32 %v234, %v892
  %v894 = vpop.f32.mrb[0].mxu0
  %v895 = vadd.f32 %v238, %v894
  %896 = vmatprep.mubr.bf16.mxu0 0
  %897 = vmatmul.mubr.bf16.gmra.mrb[0].mxu0 %v386
  %v898 = vpop.f32.mrb[0].mxu0
  %v899 = vadd.f32 %v234, %v898
  %v900 = vpop.f32.mrb[0].mxu0
  %v901 = vadd.f32 %v238, %v900
  %v902 = vpop.f32.mrb[0].mxu0
  %v903 = vadd.f32 %v234, %v902
  %v904 = vpop.f32.mrb[0].mxu0
  %v905 = vadd.f32 %v238, %v904
  %906 = vmatprep.mubr.bf16.mxu0 0
  %907 = vmatmul.mubr.bf16.gmra.mrb[0].mxu0 %v389
  %v908 = vpop.f32.mrb[0].mxu0
  %v909 = vadd.f32 %v234, %v908
  %v910 = vpop.f32.mrb[0].mxu0
  %v911 = vadd.f32 %v238, %v910
  %v912 = vpop.f32.mrb[0].mxu0
  %v913 = vadd.f32 %v234, %v912
  %v914 = vpop.f32.mrb[0].mxu0
  %v915 = vadd.f32 %v238, %v914
  %916 = vmatprep.mubr.bf16.mxu0 0
  %917 = vmatmul.mubr.bf16.gmra.mrb[0].mxu0 %v392
  %v918 = vpop.f32.mrb[0].mxu0
  %v919 = vadd.f32 %v234, %v918
  %v920 = vpop.f32.mrb[0].mxu0
  %v921 = vadd.f32 %v238, %v920
  %v922 = vpop.f32.mrb[0].mxu0
  %v923 = vadd.f32 %v234, %v922
  %v924 = vpop.f32.mrb[0].mxu0
  %v925 = vadd.f32 %v238, %v924
  %926 = vmatprep.mubr.bf16.mxu0 0
  %927 = vmatmul.mubr.bf16.gmra.mrb[0].mxu0 %v395
  %v928 = vpop.f32.mrb[0].mxu0
  %v929 = vadd.f32 %v234, %v928
  %v930 = vpop.f32.mrb[0].mxu0
  %v931 = vadd.f32 %v238, %v930
  %v932 = vpop.f32.mrb[0].mxu0
  %v933 = vadd.f32 %v234, %v932
  %v934 = vpop.f32.mrb[0].mxu0
  %v935 = vadd.f32 %v238, %v934
  %936 = vmatprep.mubr.bf16.mxu0 0
  %937 = vmatmul.mubr.bf16.gmra.mrb[0].mxu0 %v398
  %v938 = vpop.f32.mrb[0].mxu0
  %v939 = vadd.f32 %v234, %v938
  %v940 = vpop.f32.mrb[0].mxu0
  %v941 = vadd.f32 %v238, %v940
  %v942 = vpop.f32.mrb[0].mxu0
  %v943 = vadd.f32 %v234, %v942
  %v944 = vpop.f32.mrb[0].mxu0
  %v945 = vadd.f32 %v238, %v944
  %946 = vmatprep.mubr.bf16.mxu0 0
  %947 = vmatmul.mubr.bf16.gmra.mrb[0].mxu0 %v401
  %v948 = vpop.f32.mrb[0].mxu0
  %v949 = vadd.f32 %v234, %v948
  %v950 = vpop.f32.mrb[0].mxu0
  %v951 = vadd.f32 %v238, %v950
  %v952 = vpop.f32.mrb[0].mxu0
  %v953 = vadd.f32 %v234, %v952
  %v954 = vpop.f32.mrb[0].mxu0
  %v955 = vadd.f32 %v238, %v954
  %956 = vmatprep.mubr.bf16.mxu0 0
  %957 = vmatmul.mubr.bf16.gmra.mrb[0].mxu0 %v404
  %v958 = vpop.f32.mrb[0].mxu0
  %v959 = vadd.f32 %v234, %v958
  %v960 = vpop.f32.mrb[0].mxu0
  %v961 = vadd.f32 %v238, %v960
  %v962 = vpop.f32.mrb[0].mxu0
  %v963 = vadd.f32 %v234, %v962
  %v964 = vpop.f32.mrb[0].mxu0
  %v965 = vadd.f32 %v238, %v964
  %966 = vmatprep.mubr.bf16.mxu0 0
  %967 = vmatmul.mubr.bf16.gmra.mrb[0].mxu0 %v407
  %v968 = vpop.f32.mrb[0].mxu0
  %v969 = vadd.f32 %v234, %v968
  %v970 = vpop.f32.mrb[0].mxu0
  %v971 = vadd.f32 %v238, %v970
  %v972 = vpop.f32.mrb[0].mxu0
  %v973 = vadd.f32 %v234, %v972
  %v974 = vpop.f32.mrb[0].mxu0
  %v975 = vadd.f32 %v238, %v974
  %976 = vmatprep.mubr.bf16.mxu0 0
  %977 = vmatmul.mubr.bf16.gmra.mrb[0].mxu0 %v410
  %v978 = vpop.f32.mrb[0].mxu0
  %v979 = vadd.f32 %v234, %v978
  %v980 = vpop.f32.mrb[0].mxu0
  %v981 = vadd.f32 %v238, %v980
  %v982 = vpop.f32.mrb[0].mxu0
  %v983 = vadd.f32 %v234, %v982
  %v984 = vpop.f32.mrb[0].mxu0
  %v985 = vadd.f32 %v238, %v984
  %986 = vmatprep.mubr.bf16.mxu0 0
  %987 = vmatmul.mubr.bf16.gmra.mrb[0].mxu0 %v413
  %v988 = vpop.f32.mrb[0].mxu0
  %v989 = vadd.f32 %v234, %v988
  %v990 = vpop.f32.mrb[0].mxu0
  %v991 = vadd.f32 %v238, %v990
  %v992 = vpop.f32.mrb[0].mxu0
  %v993 = vadd.f32 %v234, %v992
  %v994 = vpop.f32.mrb[0].mxu0
  %v995 = vadd.f32 %v238, %v994
  %996 = vmatprep.mubr.bf16.mxu0 0
  %997 = vmatmul.mubr.bf16.gmra.mrb[0].mxu0 %v416
  %v998 = vpop.f32.mrb[0].mxu0
  %v999 = vadd.f32 %v234, %v998
  %v1000 = vpop.f32.mrb[0].mxu0
  %v1001 = vadd.f32 %v238, %v1000
  %v1002 = vpop.f32.mrb[0].mxu0
  %v1003 = vadd.f32 %v234, %v1002
  %v1004 = vpop.f32.mrb[0].mxu0
  %v1005 = vadd.f32 %v238, %v1004
  %1006 = vmatprep.mubr.bf16.mxu0 0
  %1007 = vmatmul.mubr.bf16.gmra.mrb[0].mxu0 %v419
  %v1008 = vpop.f32.mrb[0].mxu0
  %v1009 = vadd.f32 %v234, %v1008
  %v1010 = vpop.f32.mrb[0].mxu0
  %v1011 = vadd.f32 %v238, %v1010
  %v1012 = vpop.f32.mrb[0].mxu0
  %v1013 = vadd.f32 %v234, %v1012
  %v1014 = vpop.f32.mrb[0].mxu0
  %v1015 = vadd.f32 %v238, %v1014
  %1016 = vmatprep.mubr.bf16.mxu0 0
  %1017 = vmatmul.mubr.bf16.gmra.mrb[0].mxu0 %v422
  %v1018 = vpop.f32.mrb[0].mxu0
  %v1019 = vadd.f32 %v234, %v1018
  %v1020 = vpop.f32.mrb[0].mxu0
  %v1021 = vadd.f32 %v238, %v1020
  %v1022 = vpop.f32.mrb[0].mxu0
  %v1023 = vadd.f32 %v234, %v1022
  %v1024 = vpop.f32.mrb[0].mxu0
  %v1025 = vadd.f32 %v238, %v1024
  %1026 = vmatprep.mubr.bf16.mxu0 0
  %1027 = vmatmul.mubr.bf16.gmra.mrb[0].mxu0 %v425
  %v1028 = vpop.f32.mrb[0].mxu0
  %v1029 = vadd.f32 %v234, %v1028
  %v1030 = vpop.f32.mrb[0].mxu0
  %v1031 = vadd.f32 %v238, %v1030
  %v1032 = vpop.f32.mrb[0].mxu0
  %v1033 = vadd.f32 %v234, %v1032
  %v1034 = vpop.f32.mrb[0].mxu0
  %v1035 = vadd.f32 %v238, %v1034
  %1036 = vmatprep.mubr.bf16.mxu0 0
  %1037 = vmatmul.mubr.bf16.gmra.mrb[0].mxu0 %v428
  %v1038 = vpop.f32.mrb[0].mxu0
  %v1039 = vadd.f32 %v234, %v1038
  %v1040 = vpop.f32.mrb[0].mxu0
  %v1041 = vadd.f32 %v238, %v1040
  %v1042 = vpop.f32.mrb[0].mxu0
  %v1043 = vadd.f32 %v234, %v1042
  %v1044 = vpop.f32.mrb[0].mxu0
  %v1045 = vadd.f32 %v238, %v1044
  %1046 = vmatprep.mubr.bf16.mxu0 0
  %1047 = vmatmul.mubr.bf16.gmra.mrb[0].mxu0 %v431
  %v1048 = vpop.f32.mrb[0].mxu0
  %v1049 = vadd.f32 %v234, %v1048
  %v1050 = vpop.f32.mrb[0].mxu0
  %v1051 = vadd.f32 %v238, %v1050
  %v1052 = vpop.f32.mrb[0].mxu0
  %v1053 = vadd.f32 %v234, %v1052
  %v1054 = vpop.f32.mrb[0].mxu0
  %v1055 = vadd.f32 %v238, %v1054
  %1056 = vmatprep.mubr.bf16.mxu0 0
  %1057 = vmatmul.mubr.bf16.gmra.mrb[0].mxu0 %v434
  %v1058 = vpop.f32.mrb[0].mxu0
  %v1059 = vadd.f32 %v234, %v1058
  %v1060 = vpop.f32.mrb[0].mxu0
  %v1061 = vadd.f32 %v238, %v1060
  %v1062 = vpop.f32.mrb[0].mxu0
  %v1063 = vadd.f32 %v234, %v1062
  %v1064 = vpop.f32.mrb[0].mxu0
  %v1065 = vadd.f32 %v238, %v1064
  %1066 = vmatprep.mubr.bf16.mxu0 0
  %1067 = vmatmul.mubr.bf16.gmra.mrb[0].mxu0 %v437
  %v1068 = vpop.f32.mrb[0].mxu0
  %v1069 = vadd.f32 %v234, %v1068
  %v1070 = vpop.f32.mrb[0].mxu0
  %v1071 = vadd.f32 %v238, %v1070
  %v1072 = vpop.f32.mrb[0].mxu0
  %v1073 = vadd.f32 %v234, %v1072
  %v1074 = vpop.f32.mrb[0].mxu0
  %v1075 = vadd.f32 %v238, %v1074
  %1076 = vmatprep.mubr.bf16.mxu0 0
  %1077 = vmatmul.mubr.bf16.gmra.mrb[0].mxu0 %v440
  %v1078 = vpop.f32.mrb[0].mxu0
  %v1079 = vadd.f32 %v234, %v1078
  %v1080 = vpop.f32.mrb[0].mxu0
  %v1081 = vadd.f32 %v238, %v1080
  %v1082 = vpop.f32.mrb[0].mxu0
  %v1083 = vadd.f32 %v234, %v1082
  %v1084 = vpop.f32.mrb[0].mxu0
  %v1085 = vadd.f32 %v238, %v1084
  %1086 = vmatprep.mubr.bf16.mxu0 0
  %1087 = vmatmul.mubr.bf16.gmra.mrb[0].mxu0 %v443
  %v1088 = vpop.f32.mrb[0].mxu0
  %v1089 = vadd.f32 %v234, %v1088
  %v1090 = vpop.f32.mrb[0].mxu0
  %v1091 = vadd.f32 %v238, %v1090
  %v1092 = vpop.f32.mrb[0].mxu0
  %v1093 = vadd.f32 %v234, %v1092
  %v1094 = vpop.f32.mrb[0].mxu0
  %v1095 = vadd.f32 %v238, %v1094
  %1096 = vmatprep.mubr.bf16.mxu0 0
  %1097 = vmatmul.mubr.bf16.gmra.mrb[0].mxu0 %v446
  %v1098 = vpop.f32.mrb[0].mxu0
  %v1099 = vadd.f32 %v234, %v1098
  %v1100 = vpop.f32.mrb[0].mxu0
  %v1101 = vadd.f32 %v238, %v1100
  %v1102 = vpop.f32.mrb[0].mxu0
  %v1103 = vadd.f32 %v234, %v1102
  %v1104 = vpop.f32.mrb[0].mxu0
  %v1105 = vadd.f32 %v238, %v1104
  %1106 = vmatprep.mubr.bf16.mxu0 0
  %1107 = vmatmul.mubr.bf16.gmra.mrb[0].mxu0 %v449
  %v1108 = vpop.f32.mrb[0].mxu0
  %v1109 = vadd.f32 %v234, %v1108
  %v1110 = vpop.f32.mrb[0].mxu0
  %v1111 = vadd.f32 %v238, %v1110
  %v1112 = vpop.f32.mrb[0].mxu0
  %v1113 = vadd.f32 %v234, %v1112
  %v1114 = vpop.f32.mrb[0].mxu0
  %v1115 = vadd.f32 %v238, %v1114
  %1116 = vmatprep.mubr.bf16.mxu0 0
  %1117 = vmatmul.mubr.bf16.gmra.mrb[0].mxu0 %v452
  %v1118 = vpop.f32.mrb[0].mxu0
  %v1119 = vadd.f32 %v234, %v1118
  %v1120 = vpop.f32.mrb[0].mxu0
  %v1121 = vadd.f32 %v238, %v1120
  %v1122 = vpop.f32.mrb[0].mxu0
  %v1123 = vadd.f32 %v234, %v1122
  %v1124 = vpop.f32.mrb[0].mxu0
  %v1125 = vadd.f32 %v238, %v1124
  %1126 = vdwg.mxu0
  %vm1127 = vcmp.gt.f32.partialorder %v489, 0.0
  %vm1128 = vcmp.gt.f32.partialorder %v491, 0.0
  %vm1129 = vcmp.gt.f32.partialorder %v493, 0.0
  %vm1130 = vcmp.gt.f32.partialorder %v495, 0.0
  %vm1131 = vcmp.gt.f32.partialorder %v499, 0.0
  %vm1132 = vcmp.gt.f32.partialorder %v501, 0.0
  %vm1133 = vcmp.gt.f32.partialorder %v503, 0.0
  %vm1134 = vcmp.gt.f32.partialorder %v505, 0.0
  %vm1135 = vcmp.gt.f32.partialorder %v509, 0.0
  %vm1136 = vcmp.gt.f32.partialorder %v511, 0.0
  %vm1137 = vcmp.gt.f32.partialorder %v513, 0.0
  %vm1138 = vcmp.gt.f32.partialorder %v515, 0.0
  %vm1139 = vcmp.gt.f32.partialorder %v519, 0.0
  %vm1140 = vcmp.gt.f32.partialorder %v521, 0.0
  %vm1141 = vcmp.gt.f32.partialorder %v523, 0.0
  %vm1142 = vcmp.gt.f32.partialorder %v525, 0.0
  %vm1143 = vcmp.gt.f32.partialorder %v529, 0.0
  %vm1144 = vcmp.gt.f32.partialorder %v531, 0.0
  %vm1145 = vcmp.gt.f32.partialorder %v533, 0.0
  %vm1146 = vcmp.gt.f32.partialorder %v535, 0.0
  %vm1147 = vcmp.gt.f32.partialorder %v539, 0.0
  %vm1148 = vcmp.gt.f32.partialorder %v541, 0.0
  %vm1149 = vcmp.gt.f32.partialorder %v543, 0.0
  %vm1150 = vcmp.gt.f32.partialorder %v545, 0.0
  %vm1151 = vcmp.gt.f32.partialorder %v549, 0.0
  %vm1152 = vcmp.gt.f32.partialorder %v551, 0.0
  %vm1153 = vcmp.gt.f32.partialorder %v553, 0.0
  %vm1154 = vcmp.gt.f32.partialorder %v555, 0.0
  %vm1155 = vcmp.gt.f32.partialorder %v559, 0.0
  %vm1156 = vcmp.gt.f32.partialorder %v561, 0.0
  %vm1157 = vcmp.gt.f32.partialorder %v563, 0.0
  %vm1158 = vcmp.gt.f32.partialorder %v565, 0.0
  %vm1159 = vcmp.gt.f32.partialorder %v569, 0.0
  %vm1160 = vcmp.gt.f32.partialorder %v571, 0.0
  %vm1161 = vcmp.gt.f32.partialorder %v573, 0.0
  %vm1162 = vcmp.gt.f32.partialorder %v575, 0.0
  %vm1163 = vcmp.gt.f32.partialorder %v579, 0.0
  %vm1164 = vcmp.gt.f32.partialorder %v581, 0.0
  %vm1165 = vcmp.gt.f32.partialorder %v583, 0.0
  %vm1166 = vcmp.gt.f32.partialorder %v585, 0.0
  %vm1167 = vcmp.gt.f32.partialorder %v589, 0.0
  %vm1168 = vcmp.gt.f32.partialorder %v591, 0.0
  %vm1169 = vcmp.gt.f32.partialorder %v593, 0.0
  %vm1170 = vcmp.gt.f32.partialorder %v595, 0.0
  %vm1171 = vcmp.gt.f32.partialorder %v599, 0.0
  %vm1172 = vcmp.gt.f32.partialorder %v601, 0.0
  %vm1173 = vcmp.gt.f32.partialorder %v603, 0.0
  %vm1174 = vcmp.gt.f32.partialorder %v605, 0.0
  %vm1175 = vcmp.gt.f32.partialorder %v609, 0.0
  %vm1176 = vcmp.gt.f32.partialorder %v611, 0.0
  %vm1177 = vcmp.gt.f32.partialorder %v613, 0.0
  %vm1178 = vcmp.gt.f32.partialorder %v615, 0.0
  %vm1179 = vcmp.gt.f32.partialorder %v619, 0.0
  %vm1180 = vcmp.gt.f32.partialorder %v621, 0.0
  %vm1181 = vcmp.gt.f32.partialorder %v623, 0.0
  %vm1182 = vcmp.gt.f32.partialorder %v625, 0.0
  %vm1183 = vcmp.gt.f32.partialorder %v629, 0.0
  %vm1184 = vcmp.gt.f32.partialorder %v631, 0.0
  %vm1185 = vcmp.gt.f32.partialorder %v633, 0.0
  %vm1186 = vcmp.gt.f32.partialorder %v635, 0.0
  %vm1187 = vcmp.gt.f32.partialorder %v639, 0.0
  %vm1188 = vcmp.gt.f32.partialorder %v641, 0.0
  %vm1189 = vcmp.gt.f32.partialorder %v643, 0.0
  %vm1190 = vcmp.gt.f32.partialorder %v645, 0.0
  %vm1191 = vcmp.gt.f32.partialorder %v649, 0.0
  %vm1192 = vcmp.gt.f32.partialorder %v651, 0.0
  %vm1193 = vcmp.gt.f32.partialorder %v653, 0.0
  %vm1194 = vcmp.gt.f32.partialorder %v655, 0.0
  %vm1195 = vcmp.gt.f32.partialorder %v659, 0.0
  %vm1196 = vcmp.gt.f32.partialorder %v661, 0.0
  %vm1197 = vcmp.gt.f32.partialorder %v663, 0.0
  %vm1198 = vcmp.gt.f32.partialorder %v665, 0.0
  %vm1199 = vcmp.gt.f32.partialorder %v669, 0.0
  %vm1200 = vcmp.gt.f32.partialorder %v671, 0.0
  %vm1201 = vcmp.gt.f32.partialorder %v673, 0.0
  %vm1202 = vcmp.gt.f32.partialorder %v675, 0.0
  %vm1203 = vcmp.gt.f32.partialorder %v679, 0.0
  %vm1204 = vcmp.gt.f32.partialorder %v681, 0.0
  %vm1205 = vcmp.gt.f32.partialorder %v683, 0.0
  %vm1206 = vcmp.gt.f32.partialorder %v685, 0.0
  %vm1207 = vcmp.gt.f32.partialorder %v689, 0.0
  %vm1208 = vcmp.gt.f32.partialorder %v691, 0.0
  %vm1209 = vcmp.gt.f32.partialorder %v693, 0.0
  %vm1210 = vcmp.gt.f32.partialorder %v695, 0.0
  %vm1211 = vcmp.gt.f32.partialorder %v699, 0.0
  %vm1212 = vcmp.gt.f32.partialorder %v701, 0.0
  %vm1213 = vcmp.gt.f32.partialorder %v703, 0.0
  %vm1214 = vcmp.gt.f32.partialorder %v705, 0.0
  %vm1215 = vcmp.gt.f32.partialorder %v709, 0.0
  %vm1216 = vcmp.gt.f32.partialorder %v711, 0.0
  %vm1217 = vcmp.gt.f32.partialorder %v713, 0.0
  %vm1218 = vcmp.gt.f32.partialorder %v715, 0.0
  %vm1219 = vcmp.gt.f32.partialorder %v719, 0.0
  %vm1220 = vcmp.gt.f32.partialorder %v721, 0.0
  %vm1221 = vcmp.gt.f32.partialorder %v723, 0.0
  %vm1222 = vcmp.gt.f32.partialorder %v725, 0.0
  %vm1223 = vcmp.gt.f32.partialorder %v729, 0.0
  %vm1224 = vcmp.gt.f32.partialorder %v731, 0.0
  %vm1225 = vcmp.gt.f32.partialorder %v733, 0.0
  %vm1226 = vcmp.gt.f32.partialorder %v735, 0.0
  %vm1227 = vcmp.gt.f32.partialorder %v739, 0.0
  %vm1228 = vcmp.gt.f32.partialorder %v741, 0.0
  %vm1229 = vcmp.gt.f32.partialorder %v743, 0.0
  %vm1230 = vcmp.gt.f32.partialorder %v745, 0.0
  %vm1231 = vcmp.gt.f32.partialorder %v749, 0.0
  %vm1232 = vcmp.gt.f32.partialorder %v751, 0.0
  %vm1233 = vcmp.gt.f32.partialorder %v753, 0.0
  %vm1234 = vcmp.gt.f32.partialorder %v755, 0.0
  %vm1235 = vcmp.gt.f32.partialorder %v759, 0.0
  %vm1236 = vcmp.gt.f32.partialorder %v761, 0.0
  %vm1237 = vcmp.gt.f32.partialorder %v763, 0.0
  %vm1238 = vcmp.gt.f32.partialorder %v765, 0.0
  %vm1239 = vcmp.gt.f32.partialorder %v769, 0.0
  %vm1240 = vcmp.gt.f32.partialorder %v771, 0.0
  %vm1241 = vcmp.gt.f32.partialorder %v773, 0.0
  %vm1242 = vcmp.gt.f32.partialorder %v775, 0.0
  %vm1243 = vcmp.gt.f32.partialorder %v779, 0.0
  %vm1244 = vcmp.gt.f32.partialorder %v781, 0.0
  %vm1245 = vcmp.gt.f32.partialorder %v783, 0.0
  %vm1246 = vcmp.gt.f32.partialorder %v785, 0.0
  %vm1247 = vcmp.gt.f32.partialorder %v789, 0.0
  %vm1248 = vcmp.gt.f32.partialorder %v791, 0.0
  %vm1249 = vcmp.gt.f32.partialorder %v793, 0.0
  %vm1250 = vcmp.gt.f32.partialorder %v795, 0.0
  %vm1251 = vcmp.gt.f32.partialorder %v799, 0.0
  %vm1252 = vcmp.gt.f32.partialorder %v801, 0.0
  %vm1253 = vcmp.gt.f32.partialorder %v803, 0.0
  %vm1254 = vcmp.gt.f32.partialorder %v805, 0.0
  %vm1255 = vcmp.gt.f32.partialorder %v809, 0.0
  %vm1256 = vcmp.gt.f32.partialorder %v811, 0.0
  %vm1257 = vcmp.gt.f32.partialorder %v813, 0.0
  %vm1258 = vcmp.gt.f32.partialorder %v815, 0.0
  %vm1259 = vcmp.gt.f32.partialorder %v819, 0.0
  %vm1260 = vcmp.gt.f32.partialorder %v821, 0.0
  %vm1261 = vcmp.gt.f32.partialorder %v823, 0.0
  %vm1262 = vcmp.gt.f32.partialorder %v825, 0.0
  %vm1263 = vcmp.gt.f32.partialorder %v829, 0.0
  %vm1264 = vcmp.gt.f32.partialorder %v831, 0.0
  %vm1265 = vcmp.gt.f32.partialorder %v833, 0.0
  %vm1266 = vcmp.gt.f32.partialorder %v835, 0.0
  %vm1267 = vcmp.gt.f32.partialorder %v839, 0.0
  %vm1268 = vcmp.gt.f32.partialorder %v841, 0.0
  %vm1269 = vcmp.gt.f32.partialorder %v843, 0.0
  %vm1270 = vcmp.gt.f32.partialorder %v845, 0.0
  %vm1271 = vcmp.gt.f32.partialorder %v849, 0.0
  %vm1272 = vcmp.gt.f32.partialorder %v851, 0.0
  %vm1273 = vcmp.gt.f32.partialorder %v853, 0.0
  %vm1274 = vcmp.gt.f32.partialorder %v855, 0.0
  %vm1275 = vcmp.gt.f32.partialorder %v859, 0.0
  %vm1276 = vcmp.gt.f32.partialorder %v861, 0.0
  %vm1277 = vcmp.gt.f32.partialorder %v863, 0.0
  %vm1278 = vcmp.gt.f32.partialorder %v865, 0.0
  %vm1279 = vcmp.gt.f32.partialorder %v869, 0.0
  %vm1280 = vcmp.gt.f32.partialorder %v871, 0.0
  %vm1281 = vcmp.gt.f32.partialorder %v873, 0.0
  %vm1282 = vcmp.gt.f32.partialorder %v875, 0.0
  %vm1283 = vcmp.gt.f32.partialorder %v879, 0.0
  %vm1284 = vcmp.gt.f32.partialorder %v881, 0.0
  %vm1285 = vcmp.gt.f32.partialorder %v883, 0.0
  %vm1286 = vcmp.gt.f32.partialorder %v885, 0.0
  %vm1287 = vcmp.gt.f32.partialorder %v889, 0.0
  %vm1288 = vcmp.gt.f32.partialorder %v891, 0.0
  %vm1289 = vcmp.gt.f32.partialorder %v893, 0.0
  %vm1290 = vcmp.gt.f32.partialorder %v895, 0.0
  %vm1291 = vcmp.gt.f32.partialorder %v899, 0.0
  %vm1292 = vcmp.gt.f32.partialorder %v901, 0.0
  %vm1293 = vcmp.gt.f32.partialorder %v903, 0.0
  %vm1294 = vcmp.gt.f32.partialorder %v905, 0.0
  %vm1295 = vcmp.gt.f32.partialorder %v909, 0.0
  %vm1296 = vcmp.gt.f32.partialorder %v911, 0.0
  %vm1297 = vcmp.gt.f32.partialorder %v913, 0.0
  %vm1298 = vcmp.gt.f32.partialorder %v915, 0.0
  %vm1299 = vcmp.gt.f32.partialorder %v919, 0.0
  %vm1300 = vcmp.gt.f32.partialorder %v921, 0.0
  %vm1301 = vcmp.gt.f32.partialorder %v923, 0.0
  %vm1302 = vcmp.gt.f32.partialorder %v925, 0.0
  %vm1303 = vcmp.gt.f32.partialorder %v929, 0.0
  %vm1304 = vcmp.gt.f32.partialorder %v931, 0.0
  %vm1305 = vcmp.gt.f32.partialorder %v933, 0.0
  %vm1306 = vcmp.gt.f32.partialorder %v935, 0.0
  %vm1307 = vcmp.gt.f32.partialorder %v939, 0.0
  %vm1308 = vcmp.gt.f32.partialorder %v941, 0.0
  %vm1309 = vcmp.gt.f32.partialorder %v943, 0.0
  %vm1310 = vcmp.gt.f32.partialorder %v945, 0.0
  %vm1311 = vcmp.gt.f32.partialorder %v949, 0.0
  %vm1312 = vcmp.gt.f32.partialorder %v951, 0.0
  %vm1313 = vcmp.gt.f32.partialorder %v953, 0.0
  %vm1314 = vcmp.gt.f32.partialorder %v955, 0.0
  %vm1315 = vcmp.gt.f32.partialorder %v959, 0.0
  %vm1316 = vcmp.gt.f32.partialorder %v961, 0.0
  %vm1317 = vcmp.gt.f32.partialorder %v963, 0.0
  %vm1318 = vcmp.gt.f32.partialorder %v965, 0.0
  %vm1319 = vcmp.gt.f32.partialorder %v969, 0.0
  %vm1320 = vcmp.gt.f32.partialorder %v971, 0.0
  %vm1321 = vcmp.gt.f32.partialorder %v973, 0.0
  %vm1322 = vcmp.gt.f32.partialorder %v975, 0.0
  %vm1323 = vcmp.gt.f32.partialorder %v979, 0.0
  %vm1324 = vcmp.gt.f32.partialorder %v981, 0.0
  %vm1325 = vcmp.gt.f32.partialorder %v983, 0.0
  %vm1326 = vcmp.gt.f32.partialorder %v985, 0.0
  %vm1327 = vcmp.gt.f32.partialorder %v989, 0.0
  %vm1328 = vcmp.gt.f32.partialorder %v991, 0.0
  %vm1329 = vcmp.gt.f32.partialorder %v993, 0.0
  %vm1330 = vcmp.gt.f32.partialorder %v995, 0.0
  %vm1331 = vcmp.gt.f32.partialorder %v999, 0.0
  %vm1332 = vcmp.gt.f32.partialorder %v1001, 0.0
  %vm1333 = vcmp.gt.f32.partialorder %v1003, 0.0
  %vm1334 = vcmp.gt.f32.partialorder %v1005, 0.0
  %vm1335 = vcmp.gt.f32.partialorder %v1009, 0.0
  %vm1336 = vcmp.gt.f32.partialorder %v1011, 0.0
  %vm1337 = vcmp.gt.f32.partialorder %v1013, 0.0
  %vm1338 = vcmp.gt.f32.partialorder %v1015, 0.0
  %vm1339 = vcmp.gt.f32.partialorder %v1019, 0.0
  %vm1340 = vcmp.gt.f32.partialorder %v1021, 0.0
  %vm1341 = vcmp.gt.f32.partialorder %v1023, 0.0
  %vm1342 = vcmp.gt.f32.partialorder %v1025, 0.0
  %vm1343 = vcmp.gt.f32.partialorder %v1029, 0.0
  %vm1344 = vcmp.gt.f32.partialorder %v1031, 0.0
  %vm1345 = vcmp.gt.f32.partialorder %v1033, 0.0
  %vm1346 = vcmp.gt.f32.partialorder %v1035, 0.0
  %vm1347 = vcmp.gt.f32.partialorder %v1039, 0.0
  %vm1348 = vcmp.gt.f32.partialorder %v1041, 0.0
  %vm1349 = vcmp.gt.f32.partialorder %v1043, 0.0
  %vm1350 = vcmp.gt.f32.partialorder %v1045, 0.0
  %vm1351 = vcmp.gt.f32.partialorder %v1049, 0.0
  %vm1352 = vcmp.gt.f32.partialorder %v1051, 0.0
  %vm1353 = vcmp.gt.f32.partialorder %v1053, 0.0
  %vm1354 = vcmp.gt.f32.partialorder %v1055, 0.0
  %vm1355 = vcmp.gt.f32.partialorder %v1059, 0.0
  %vm1356 = vcmp.gt.f32.partialorder %v1061, 0.0
  %vm1357 = vcmp.gt.f32.partialorder %v1063, 0.0
  %vm1358 = vcmp.gt.f32.partialorder %v1065, 0.0
  %vm1359 = vcmp.gt.f32.partialorder %v1069, 0.0
  %vm1360 = vcmp.gt.f32.partialorder %v1071, 0.0
  %vm1361 = vcmp.gt.f32.partialorder %v1073, 0.0
  %vm1362 = vcmp.gt.f32.partialorder %v1075, 0.0
  %vm1363 = vcmp.gt.f32.partialorder %v1079, 0.0
  %vm1364 = vcmp.gt.f32.partialorder %v1081, 0.0
  %vm1365 = vcmp.gt.f32.partialorder %v1083, 0.0
  %vm1366 = vcmp.gt.f32.partialorder %v1085, 0.0
  %vm1367 = vcmp.gt.f32.partialorder %v1089, 0.0
  %vm1368 = vcmp.gt.f32.partialorder %v1091, 0.0
  %vm1369 = vcmp.gt.f32.partialorder %v1093, 0.0
  %vm1370 = vcmp.gt.f32.partialorder %v1095, 0.0
  %vm1371 = vcmp.gt.f32.partialorder %v1099, 0.0
  %vm1372 = vcmp.gt.f32.partialorder %v1101, 0.0
  %vm1373 = vcmp.gt.f32.partialorder %v1103, 0.0
  %vm1374 = vcmp.gt.f32.partialorder %v1105, 0.0
  %vm1375 = vcmp.gt.f32.partialorder %v1109, 0.0
  %vm1376 = vcmp.gt.f32.partialorder %v1111, 0.0
  %vm1377 = vcmp.gt.f32.partialorder %v1113, 0.0
  %vm1378 = vcmp.gt.f32.partialorder %v1115, 0.0
  %vm1379 = vcmp.gt.f32.partialorder %v1119, 0.0
  %vm1380 = vcmp.gt.f32.partialorder %v1121, 0.0
  %vm1381 = vcmp.gt.f32.partialorder %v1123, 0.0
  %vm1382 = vcmp.gt.f32.partialorder %v1125, 0.0
  %v1383 = vmul.f32 %v489, 0.01
  %v1384 = vmul.f32 %v491, 0.01
  %v1385 = vmul.f32 %v493, 0.01
  %v1386 = vmul.f32 %v495, 0.01
  %v1387 = vmul.f32 %v499, 0.01
  %v1388 = vmul.f32 %v501, 0.01
  %v1389 = vmul.f32 %v503, 0.01
  %v1390 = vmul.f32 %v505, 0.01
  %v1391 = vmul.f32 %v509, 0.01
  %v1392 = vmul.f32 %v511, 0.01
  %v1393 = vmul.f32 %v513, 0.01
  %v1394 = vmul.f32 %v515, 0.01
  %v1395 = vmul.f32 %v519, 0.01
  %v1396 = vmul.f32 %v521, 0.01
  %v1397 = vmul.f32 %v523, 0.01
  %v1398 = vmul.f32 %v525, 0.01
  %v1399 = vmul.f32 %v529, 0.01
  %v1400 = vmul.f32 %v531, 0.01
  %v1401 = vmul.f32 %v533, 0.01
  %v1402 = vmul.f32 %v535, 0.01
  %v1403 = vmul.f32 %v539, 0.01
  %v1404 = vmul.f32 %v541, 0.01
  %v1405 = vmul.f32 %v543, 0.01
  %v1406 = vmul.f32 %v545, 0.01
  %v1407 = vmul.f32 %v549, 0.01
  %v1408 = vmul.f32 %v551, 0.01
  %v1409 = vmul.f32 %v553, 0.01
  %v1410 = vmul.f32 %v555, 0.01
  %v1411 = vmul.f32 %v559, 0.01
  %v1412 = vmul.f32 %v561, 0.01
  %v1413 = vmul.f32 %v563, 0.01
  %v1414 = vmul.f32 %v565, 0.01
  %v1415 = vmul.f32 %v569, 0.01
  %v1416 = vmul.f32 %v571, 0.01
  %v1417 = vmul.f32 %v573, 0.01
  %v1418 = vmul.f32 %v575, 0.01
  %v1419 = vmul.f32 %v579, 0.01
  %v1420 = vmul.f32 %v581, 0.01
  %v1421 = vmul.f32 %v583, 0.01
  %v1422 = vmul.f32 %v585, 0.01
  %v1423 = vmul.f32 %v589, 0.01
  %v1424 = vmul.f32 %v591, 0.01
  %v1425 = vmul.f32 %v593, 0.01
  %v1426 = vmul.f32 %v595, 0.01
  %v1427 = vmul.f32 %v599, 0.01
  %v1428 = vmul.f32 %v601, 0.01
  %v1429 = vmul.f32 %v603, 0.01
  %v1430 = vmul.f32 %v605, 0.01
  %v1431 = vmul.f32 %v609, 0.01
  %v1432 = vmul.f32 %v611, 0.01
  %v1433 = vmul.f32 %v613, 0.01
  %v1434 = vmul.f32 %v615, 0.01
  %v1435 = vmul.f32 %v619, 0.01
  %v1436 = vmul.f32 %v621, 0.01
  %v1437 = vmul.f32 %v623, 0.01
  %v1438 = vmul.f32 %v625, 0.01
  %v1439 = vmul.f32 %v629, 0.01
  %v1440 = vmul.f32 %v631, 0.01
  %v1441 = vmul.f32 %v633, 0.01
  %v1442 = vmul.f32 %v635, 0.01
  %v1443 = vmul.f32 %v639, 0.01
  %v1444 = vmul.f32 %v641, 0.01
  %v1445 = vmul.f32 %v643, 0.01
  %v1446 = vmul.f32 %v645, 0.01
  %v1447 = vmul.f32 %v649, 0.01
  %v1448 = vmul.f32 %v651, 0.01
  %v1449 = vmul.f32 %v653, 0.01
  %v1450 = vmul.f32 %v655, 0.01
  %v1451 = vmul.f32 %v659, 0.01
  %v1452 = vmul.f32 %v661, 0.01
  %v1453 = vmul.f32 %v663, 0.01
  %v1454 = vmul.f32 %v665, 0.01
  %v1455 = vmul.f32 %v669, 0.01
  %v1456 = vmul.f32 %v671, 0.01
  %v1457 = vmul.f32 %v673, 0.01
  %v1458 = vmul.f32 %v675, 0.01
  %v1459 = vmul.f32 %v679, 0.01
  %v1460 = vmul.f32 %v681, 0.01
  %v1461 = vmul.f32 %v683, 0.01
  %v1462 = vmul.f32 %v685, 0.01
  %v1463 = vmul.f32 %v689, 0.01
  %v1464 = vmul.f32 %v691, 0.01
  %v1465 = vmul.f32 %v693, 0.01
  %v1466 = vmul.f32 %v695, 0.01
  %v1467 = vmul.f32 %v699, 0.01
  %v1468 = vmul.f32 %v701, 0.01
  %v1469 = vmul.f32 %v703, 0.01
  %v1470 = vmul.f32 %v705, 0.01
  %v1471 = vmul.f32 %v709, 0.01
  %v1472 = vmul.f32 %v711, 0.01
  %v1473 = vmul.f32 %v713, 0.01
  %v1474 = vmul.f32 %v715, 0.01
  %v1475 = vmul.f32 %v719, 0.01
  %v1476 = vmul.f32 %v721, 0.01
  %v1477 = vmul.f32 %v723, 0.01
  %v1478 = vmul.f32 %v725, 0.01
  %v1479 = vmul.f32 %v729, 0.01
  %v1480 = vmul.f32 %v731, 0.01
  %v1481 = vmul.f32 %v733, 0.01
  %v1482 = vmul.f32 %v735, 0.01
  %v1483 = vmul.f32 %v739, 0.01
  %v1484 = vmul.f32 %v741, 0.01
  %v1485 = vmul.f32 %v743, 0.01
  %v1486 = vmul.f32 %v745, 0.01
  %v1487 = vmul.f32 %v749, 0.01
  %v1488 = vmul.f32 %v751, 0.01
  %v1489 = vmul.f32 %v753, 0.01
  %v1490 = vmul.f32 %v755, 0.01
  %v1491 = vmul.f32 %v759, 0.01
  %v1492 = vmul.f32 %v761, 0.01
  %v1493 = vmul.f32 %v763, 0.01
  %v1494 = vmul.f32 %v765, 0.01
  %v1495 = vmul.f32 %v769, 0.01
  %v1496 = vmul.f32 %v771, 0.01
  %v1497 = vmul.f32 %v773, 0.01
  %v1498 = vmul.f32 %v775, 0.01
  %v1499 = vmul.f32 %v779, 0.01
  %v1500 = vmul.f32 %v781, 0.01
  %v1501 = vmul.f32 %v783, 0.01
  %v1502 = vmul.f32 %v785, 0.01
  %v1503 = vmul.f32 %v789, 0.01
  %v1504 = vmul.f32 %v791, 0.01
  %v1505 = vmul.f32 %v793, 0.01
  %v1506 = vmul.f32 %v795, 0.01
  %v1507 = vmul.f32 %v799, 0.01
  %v1508 = vmul.f32 %v801, 0.01
  %v1509 = vmul.f32 %v803, 0.01
  %v1510 = vmul.f32 %v805, 0.01
  %v1511 = vmul.f32 %v809, 0.01
  %v1512 = vmul.f32 %v811, 0.01
  %v1513 = vmul.f32 %v813, 0.01
  %v1514 = vmul.f32 %v815, 0.01
  %v1515 = vmul.f32 %v819, 0.01
  %v1516 = vmul.f32 %v821, 0.01
  %v1517 = vmul.f32 %v823, 0.01
  %v1518 = vmul.f32 %v825, 0.01
  %v1519 = vmul.f32 %v829, 0.01
  %v1520 = vmul.f32 %v831, 0.01
  %v1521 = vmul.f32 %v833, 0.01
  %v1522 = vmul.f32 %v835, 0.01
  %v1523 = vmul.f32 %v839, 0.01
  %v1524 = vmul.f32 %v841, 0.01
  %v1525 = vmul.f32 %v843, 0.01
  %v1526 = vmul.f32 %v845, 0.01
  %v1527 = vmul.f32 %v849, 0.01
  %v1528 = vmul.f32 %v851, 0.01
  %v1529 = vmul.f32 %v853, 0.01
  %v1530 = vmul.f32 %v855, 0.01
  %v1531 = vmul.f32 %v859, 0.01
  %v1532 = vmul.f32 %v861, 0.01
  %v1533 = vmul.f32 %v863, 0.01
  %v1534 = vmul.f32 %v865, 0.01
  %v1535 = vmul.f32 %v869, 0.01
  %v1536 = vmul.f32 %v871, 0.01
  %v1537 = vmul.f32 %v873, 0.01
  %v1538 = vmul.f32 %v875, 0.01
  %v1539 = vmul.f32 %v879, 0.01
  %v1540 = vmul.f32 %v881, 0.01
  %v1541 = vmul.f32 %v883, 0.01
  %v1542 = vmul.f32 %v885, 0.01
  %v1543 = vmul.f32 %v889, 0.01
  %v1544 = vmul.f32 %v891, 0.01
  %v1545 = vmul.f32 %v893, 0.01
  %v1546 = vmul.f32 %v895, 0.01
  %v1547 = vmul.f32 %v899, 0.01
  %v1548 = vmul.f32 %v901, 0.01
  %v1549 = vmul.f32 %v903, 0.01
  %v1550 = vmul.f32 %v905, 0.01
  %v1551 = vmul.f32 %v909, 0.01
  %v1552 = vmul.f32 %v911, 0.01
  %v1553 = vmul.f32 %v913, 0.01
  %v1554 = vmul.f32 %v915, 0.01
  %v1555 = vmul.f32 %v919, 0.01
  %v1556 = vmul.f32 %v921, 0.01
  %v1557 = vmul.f32 %v923, 0.01
  %v1558 = vmul.f32 %v925, 0.01
  %v1559 = vmul.f32 %v929, 0.01
  %v1560 = vmul.f32 %v931, 0.01
  %v1561 = vmul.f32 %v933, 0.01
  %v1562 = vmul.f32 %v935, 0.01
  %v1563 = vmul.f32 %v939, 0.01
  %v1564 = vmul.f32 %v941, 0.01
  %v1565 = vmul.f32 %v943, 0.01
  %v1566 = vmul.f32 %v945, 0.01
  %v1567 = vmul.f32 %v949, 0.01
  %v1568 = vmul.f32 %v951, 0.01
  %v1569 = vmul.f32 %v953, 0.01
  %v1570 = vmul.f32 %v955, 0.01
  %v1571 = vmul.f32 %v959, 0.01
  %v1572 = vmul.f32 %v961, 0.01
  %v1573 = vmul.f32 %v963, 0.01
  %v1574 = vmul.f32 %v965, 0.01
  %v1575 = vmul.f32 %v969, 0.01
  %v1576 = vmul.f32 %v971, 0.01
  %v1577 = vmul.f32 %v973, 0.01
  %v1578 = vmul.f32 %v975, 0.01
  %v1579 = vmul.f32 %v979, 0.01
  %v1580 = vmul.f32 %v981, 0.01
  %v1581 = vmul.f32 %v983, 0.01
  %v1582 = vmul.f32 %v985, 0.01
  %v1583 = vmul.f32 %v989, 0.01
  %v1584 = vmul.f32 %v991, 0.01
  %v1585 = vmul.f32 %v993, 0.01
  %v1586 = vmul.f32 %v995, 0.01
  %v1587 = vmul.f32 %v999, 0.01
  %v1588 = vmul.f32 %v1001, 0.01
  %v1589 = vmul.f32 %v1003, 0.01
  %v1590 = vmul.f32 %v1005, 0.01
  %v1591 = vmul.f32 %v1009, 0.01
  %v1592 = vmul.f32 %v1011, 0.01
  %v1593 = vmul.f32 %v1013, 0.01
  %v1594 = vmul.f32 %v1015, 0.01
  %v1595 = vmul.f32 %v1019, 0.01
  %v1596 = vmul.f32 %v1021, 0.01
  %v1597 = vmul.f32 %v1023, 0.01
  %v1598 = vmul.f32 %v1025, 0.01
  %v1599 = vmul.f32 %v1029, 0.01
  %v1600 = vmul.f32 %v1031, 0.01
  %v1601 = vmul.f32 %v1033, 0.01
  %v1602 = vmul.f32 %v1035, 0.01
  %v1603 = vmul.f32 %v1039, 0.01
  %v1604 = vmul.f32 %v1041, 0.01
  %v1605 = vmul.f32 %v1043, 0.01
  %v1606 = vmul.f32 %v1045, 0.01
  %v1607 = vmul.f32 %v1049, 0.01
  %v1608 = vmul.f32 %v1051, 0.01
  %v1609 = vmul.f32 %v1053, 0.01
  %v1610 = vmul.f32 %v1055, 0.01
  %v1611 = vmul.f32 %v1059, 0.01
  %v1612 = vmul.f32 %v1061, 0.01
  %v1613 = vmul.f32 %v1063, 0.01
  %v1614 = vmul.f32 %v1065, 0.01
  %v1615 = vmul.f32 %v1069, 0.01
  %v1616 = vmul.f32 %v1071, 0.01
  %v1617 = vmul.f32 %v1073, 0.01
  %v1618 = vmul.f32 %v1075, 0.01
  %v1619 = vmul.f32 %v1079, 0.01
  %v1620 = vmul.f32 %v1081, 0.01
  %v1621 = vmul.f32 %v1083, 0.01
  %v1622 = vmul.f32 %v1085, 0.01
  %v1623 = vmul.f32 %v1089, 0.01
  %v1624 = vmul.f32 %v1091, 0.01
  %v1625 = vmul.f32 %v1093, 0.01
  %v1626 = vmul.f32 %v1095, 0.01
  %v1627 = vmul.f32 %v1099, 0.01
  %v1628 = vmul.f32 %v1101, 0.01
  %v1629 = vmul.f32 %v1103, 0.01
  %v1630 = vmul.f32 %v1105, 0.01
  %v1631 = vmul.f32 %v1109, 0.01
  %v1632 = vmul.f32 %v1111, 0.01
  %v1633 = vmul.f32 %v1113, 0.01
  %v1634 = vmul.f32 %v1115, 0.01
  %v1635 = vmul.f32 %v1119, 0.01
  %v1636 = vmul.f32 %v1121, 0.01
  %v1637 = vmul.f32 %v1123, 0.01
  %v1638 = vmul.f32 %v1125, 0.01
  %v1639 = vsel %vm1127, %v489, %v1383
  %v1640 = vsel %vm1128, %v491, %v1384
  %v1641 = vsel %vm1129, %v493, %v1385
  %v1642 = vsel %vm1130, %v495, %v1386
  %v1643 = vsel %vm1131, %v499, %v1387
  %v1644 = vsel %vm1132, %v501, %v1388
  %v1645 = vsel %vm1133, %v503, %v1389
  %v1646 = vsel %vm1134, %v505, %v1390
  %v1647 = vsel %vm1135, %v509, %v1391
  %v1648 = vsel %vm1136, %v511, %v1392
  %v1649 = vsel %vm1137, %v513, %v1393
  %v1650 = vsel %vm1138, %v515, %v1394
  %v1651 = vsel %vm1139, %v519, %v1395
  %v1652 = vsel %vm1140, %v521, %v1396
  %v1653 = vsel %vm1141, %v523, %v1397
  %v1654 = vsel %vm1142, %v525, %v1398
  %v1655 = vsel %vm1143, %v529, %v1399
  %v1656 = vsel %vm1144, %v531, %v1400
  %v1657 = vsel %vm1145, %v533, %v1401
  %v1658 = vsel %vm1146, %v535, %v1402
  %v1659 = vsel %vm1147, %v539, %v1403
  %v1660 = vsel %vm1148, %v541, %v1404
  %v1661 = vsel %vm1149, %v543, %v1405
  %v1662 = vsel %vm1150, %v545, %v1406
  %v1663 = vsel %vm1151, %v549, %v1407
  %v1664 = vsel %vm1152, %v551, %v1408
  %v1665 = vsel %vm1153, %v553, %v1409
  %v1666 = vsel %vm1154, %v555, %v1410
  %v1667 = vsel %vm1155, %v559, %v1411
  %v1668 = vsel %vm1156, %v561, %v1412
  %v1669 = vsel %vm1157, %v563, %v1413
  %v1670 = vsel %vm1158, %v565, %v1414
  %v1671 = vsel %vm1159, %v569, %v1415
  %v1672 = vsel %vm1160, %v571, %v1416
  %v1673 = vsel %vm1161, %v573, %v1417
  %v1674 = vsel %vm1162, %v575, %v1418
  %v1675 = vsel %vm1163, %v579, %v1419
  %v1676 = vsel %vm1164, %v581, %v1420
  %v1677 = vsel %vm1165, %v583, %v1421
  %v1678 = vsel %vm1166, %v585, %v1422
  %v1679 = vsel %vm1167, %v589, %v1423
  %v1680 = vsel %vm1168, %v591, %v1424
  %v1681 = vsel %vm1169, %v593, %v1425
  %v1682 = vsel %vm1170, %v595, %v1426
  %v1683 = vsel %vm1171, %v599, %v1427
  %v1684 = vsel %vm1172, %v601, %v1428
  %v1685 = vsel %vm1173, %v603, %v1429
  %v1686 = vsel %vm1174, %v605, %v1430
  %v1687 = vsel %vm1175, %v609, %v1431
  %v1688 = vsel %vm1176, %v611, %v1432
  %v1689 = vsel %vm1177, %v613, %v1433
  %v1690 = vsel %vm1178, %v615, %v1434
  %v1691 = vsel %vm1179, %v619, %v1435
  %v1692 = vsel %vm1180, %v621, %v1436
  %v1693 = vsel %vm1181, %v623, %v1437
  %v1694 = vsel %vm1182, %v625, %v1438
  %v1695 = vsel %vm1183, %v629, %v1439
  %v1696 = vsel %vm1184, %v631, %v1440
  %v1697 = vsel %vm1185, %v633, %v1441
  %v1698 = vsel %vm1186, %v635, %v1442
  %v1699 = vsel %vm1187, %v639, %v1443
  %v1700 = vsel %vm1188, %v641, %v1444
  %v1701 = vsel %vm1189, %v643, %v1445
  %v1702 = vsel %vm1190, %v645, %v1446
  %v1703 = vsel %vm1191, %v649, %v1447
  %v1704 = vsel %vm1192, %v651, %v1448
  %v1705 = vsel %vm1193, %v653, %v1449
  %v1706 = vsel %vm1194, %v655, %v1450
  %v1707 = vsel %vm1195, %v659, %v1451
  %v1708 = vsel %vm1196, %v661, %v1452
  %v1709 = vsel %vm1197, %v663, %v1453
  %v1710 = vsel %vm1198, %v665, %v1454
  %v1711 = vsel %vm1199, %v669, %v1455
  %v1712 = vsel %vm1200, %v671, %v1456
  %v1713 = vsel %vm1201, %v673, %v1457
  %v1714 = vsel %vm1202, %v675, %v1458
  %v1715 = vsel %vm1203, %v679, %v1459
  %v1716 = vsel %vm1204, %v681, %v1460
  %v1717 = vsel %vm1205, %v683, %v1461
  %v1718 = vsel %vm1206, %v685, %v1462
  %v1719 = vsel %vm1207, %v689, %v1463
  %v1720 = vsel %vm1208, %v691, %v1464
  %v1721 = vsel %vm1209, %v693, %v1465
  %v1722 = vsel %vm1210, %v695, %v1466
  %v1723 = vsel %vm1211, %v699, %v1467
  %v1724 = vsel %vm1212, %v701, %v1468
  %v1725 = vsel %vm1213, %v703, %v1469
  %v1726 = vsel %vm1214, %v705, %v1470
  %v1727 = vsel %vm1215, %v709, %v1471
  %v1728 = vsel %vm1216, %v711, %v1472
  %v1729 = vsel %vm1217, %v713, %v1473
  %v1730 = vsel %vm1218, %v715, %v1474
  %v1731 = vsel %vm1219, %v719, %v1475
  %v1732 = vsel %vm1220, %v721, %v1476
  %v1733 = vsel %vm1221, %v723, %v1477
  %v1734 = vsel %vm1222, %v725, %v1478
  %v1735 = vsel %vm1223, %v729, %v1479
  %v1736 = vsel %vm1224, %v731, %v1480
  %v1737 = vsel %vm1225, %v733, %v1481
  %v1738 = vsel %vm1226, %v735, %v1482
  %v1739 = vsel %vm1227, %v739, %v1483
  %v1740 = vsel %vm1228, %v741, %v1484
  %v1741 = vsel %vm1229, %v743, %v1485
  %v1742 = vsel %vm1230, %v745, %v1486
  %v1743 = vsel %vm1231, %v749, %v1487
  %v1744 = vsel %vm1232, %v751, %v1488
  %v1745 = vsel %vm1233, %v753, %v1489
  %v1746 = vsel %vm1234, %v755, %v1490
  %v1747 = vsel %vm1235, %v759, %v1491
  %v1748 = vsel %vm1236, %v761, %v1492
  %v1749 = vsel %vm1237, %v763, %v1493
  %v1750 = vsel %vm1238, %v765, %v1494
  %v1751 = vsel %vm1239, %v769, %v1495
  %v1752 = vsel %vm1240, %v771, %v1496
  %v1753 = vsel %vm1241, %v773, %v1497
  %v1754 = vsel %vm1242, %v775, %v1498
  %v1755 = vsel %vm1243, %v779, %v1499
  %v1756 = vsel %vm1244, %v781, %v1500
  %v1757 = vsel %vm1245, %v783, %v1501
  %v1758 = vsel %vm1246, %v785, %v1502
  %v1759 = vsel %vm1247, %v789, %v1503
  %v1760 = vsel %vm1248, %v791, %v1504
  %v1761 = vsel %vm1249, %v793, %v1505
  %v1762 = vsel %vm1250, %v795, %v1506
  %v1763 = vsel %vm1251, %v799, %v1507
  %v1764 = vsel %vm1252, %v801, %v1508
  %v1765 = vsel %vm1253, %v803, %v1509
  %v1766 = vsel %vm1254, %v805, %v1510
  %v1767 = vsel %vm1255, %v809, %v1511
  %v1768 = vsel %vm1256, %v811, %v1512
  %v1769 = vsel %vm1257, %v813, %v1513
  %v1770 = vsel %vm1258, %v815, %v1514
  %v1771 = vsel %vm1259, %v819, %v1515
  %v1772 = vsel %vm1260, %v821, %v1516
  %v1773 = vsel %vm1261, %v823, %v1517
  %v1774 = vsel %vm1262, %v825, %v1518
  %v1775 = vsel %vm1263, %v829, %v1519
  %v1776 = vsel %vm1264, %v831, %v1520
  %v1777 = vsel %vm1265, %v833, %v1521
  %v1778 = vsel %vm1266, %v835, %v1522
  %v1779 = vsel %vm1267, %v839, %v1523
  %v1780 = vsel %vm1268, %v841, %v1524
  %v1781 = vsel %vm1269, %v843, %v1525
  %v1782 = vsel %vm1270, %v845, %v1526
  %v1783 = vsel %vm1271, %v849, %v1527
  %v1784 = vsel %vm1272, %v851, %v1528
  %v1785 = vsel %vm1273, %v853, %v1529
  %v1786 = vsel %vm1274, %v855, %v1530
  %v1787 = vsel %vm1275, %v859, %v1531
  %v1788 = vsel %vm1276, %v861, %v1532
  %v1789 = vsel %vm1277, %v863, %v1533
  %v1790 = vsel %vm1278, %v865, %v1534
  %v1791 = vsel %vm1279, %v869, %v1535
  %v1792 = vsel %vm1280, %v871, %v1536
  %v1793 = vsel %vm1281, %v873, %v1537
  %v1794 = vsel %vm1282, %v875, %v1538
  %v1795 = vsel %vm1283, %v879, %v1539
  %v1796 = vsel %vm1284, %v881, %v1540
  %v1797 = vsel %vm1285, %v883, %v1541
  %v1798 = vsel %vm1286, %v885, %v1542
  %v1799 = vsel %vm1287, %v889, %v1543
  %v1800 = vsel %vm1288, %v891, %v1544
  %v1801 = vsel %vm1289, %v893, %v1545
  %v1802 = vsel %vm1290, %v895, %v1546
  %v1803 = vsel %vm1291, %v899, %v1547
  %v1804 = vsel %vm1292, %v901, %v1548
  %v1805 = vsel %vm1293, %v903, %v1549
  %v1806 = vsel %vm1294, %v905, %v1550
  %v1807 = vsel %vm1295, %v909, %v1551
  %v1808 = vsel %vm1296, %v911, %v1552
  %v1809 = vsel %vm1297, %v913, %v1553
  %v1810 = vsel %vm1298, %v915, %v1554
  %v1811 = vsel %vm1299, %v919, %v1555
  %v1812 = vsel %vm1300, %v921, %v1556
  %v1813 = vsel %vm1301, %v923, %v1557
  %v1814 = vsel %vm1302, %v925, %v1558
  %v1815 = vsel %vm1303, %v929, %v1559
  %v1816 = vsel %vm1304, %v931, %v1560
  %v1817 = vsel %vm1305, %v933, %v1561
  %v1818 = vsel %vm1306, %v935, %v1562
  %v1819 = vsel %vm1307, %v939, %v1563
  %v1820 = vsel %vm1308, %v941, %v1564
  %v1821 = vsel %vm1309, %v943, %v1565
  %v1822 = vsel %vm1310, %v945, %v1566
  %v1823 = vsel %vm1311, %v949, %v1567
  %v1824 = vsel %vm1312, %v951, %v1568
  %v1825 = vsel %vm1313, %v953, %v1569
  %v1826 = vsel %vm1314, %v955, %v1570
  %v1827 = vsel %vm1315, %v959, %v1571
  %v1828 = vsel %vm1316, %v961, %v1572
  %v1829 = vsel %vm1317, %v963, %v1573
  %v1830 = vsel %vm1318, %v965, %v1574
  %v1831 = vsel %vm1319, %v969, %v1575
  %v1832 = vsel %vm1320, %v971, %v1576
  %v1833 = vsel %vm1321, %v973, %v1577
  %v1834 = vsel %vm1322, %v975, %v1578
  %v1835 = vsel %vm1323, %v979, %v1579
  %v1836 = vsel %vm1324, %v981, %v1580
  %v1837 = vsel %vm1325, %v983, %v1581
  %v1838 = vsel %vm1326, %v985, %v1582
  %v1839 = vsel %vm1327, %v989, %v1583
  %v1840 = vsel %vm1328, %v991, %v1584
  %v1841 = vsel %vm1329, %v993, %v1585
  %v1842 = vsel %vm1330, %v995, %v1586
  %v1843 = vsel %vm1331, %v999, %v1587
  %v1844 = vsel %vm1332, %v1001, %v1588
  %v1845 = vsel %vm1333, %v1003, %v1589
  %v1846 = vsel %vm1334, %v1005, %v1590
  %v1847 = vsel %vm1335, %v1009, %v1591
  %v1848 = vsel %vm1336, %v1011, %v1592
  %v1849 = vsel %vm1337, %v1013, %v1593
  %v1850 = vsel %vm1338, %v1015, %v1594
  %v1851 = vsel %vm1339, %v1019, %v1595
  %v1852 = vsel %vm1340, %v1021, %v1596
  %v1853 = vsel %vm1341, %v1023, %v1597
  %v1854 = vsel %vm1342, %v1025, %v1598
  %v1855 = vsel %vm1343, %v1029, %v1599
  %v1856 = vsel %vm1344, %v1031, %v1600
  %v1857 = vsel %vm1345, %v1033, %v1601
  %v1858 = vsel %vm1346, %v1035, %v1602
  %v1859 = vsel %vm1347, %v1039, %v1603
  %v1860 = vsel %vm1348, %v1041, %v1604
  %v1861 = vsel %vm1349, %v1043, %v1605
  %v1862 = vsel %vm1350, %v1045, %v1606
  %v1863 = vsel %vm1351, %v1049, %v1607
  %v1864 = vsel %vm1352, %v1051, %v1608
  %v1865 = vsel %vm1353, %v1053, %v1609
  %v1866 = vsel %vm1354, %v1055, %v1610
  %v1867 = vsel %vm1355, %v1059, %v1611
  %v1868 = vsel %vm1356, %v1061, %v1612
  %v1869 = vsel %vm1357, %v1063, %v1613
  %v1870 = vsel %vm1358, %v1065, %v1614
  %v1871 = vsel %vm1359, %v1069, %v1615
  %v1872 = vsel %vm1360, %v1071, %v1616
  %v1873 = vsel %vm1361, %v1073, %v1617
  %v1874 = vsel %vm1362, %v1075, %v1618
  %v1875 = vsel %vm1363, %v1079, %v1619
  %v1876 = vsel %vm1364, %v1081, %v1620
  %v1877 = vsel %vm1365, %v1083, %v1621
  %v1878 = vsel %vm1366, %v1085, %v1622
  %v1879 = vsel %vm1367, %v1089, %v1623
  %v1880 = vsel %vm1368, %v1091, %v1624
  %v1881 = vsel %vm1369, %v1093, %v1625
  %v1882 = vsel %vm1370, %v1095, %v1626
  %v1883 = vsel %vm1371, %v1099, %v1627
  %v1884 = vsel %vm1372, %v1101, %v1628
  %v1885 = vsel %vm1373, %v1103, %v1629
  %v1886 = vsel %vm1374, %v1105, %v1630
  %v1887 = vsel %vm1375, %v1109, %v1631
  %v1888 = vsel %vm1376, %v1111, %v1632
  %v1889 = vsel %vm1377, %v1113, %v1633
  %v1890 = vsel %vm1378, %v1115, %v1634
  %v1891 = vsel %vm1379, %v1119, %v1635
  %v1892 = vsel %vm1380, %v1121, %v1636
  %v1893 = vsel %vm1381, %v1123, %v1637
  %v1894 = vsel %vm1382, %v1125, %v1638
  %v1895 = vpack.c.bf16 %v1641, %v1639
  %v1896 = vpack.c.bf16 %v1642, %v1640
  %v1897 = vpack.c.bf16 %v1645, %v1643
  %v1898 = vpack.c.bf16 %v1646, %v1644
  %v1899 = vpack.c.bf16 %v1649, %v1647
  %v1900 = vpack.c.bf16 %v1650, %v1648
  %v1901 = vpack.c.bf16 %v1653, %v1651
  %v1902 = vpack.c.bf16 %v1654, %v1652
  %v1903 = vpack.c.bf16 %v1657, %v1655
  %v1904 = vpack.c.bf16 %v1658, %v1656
  %v1905 = vpack.c.bf16 %v1661, %v1659
  %v1906 = vpack.c.bf16 %v1662, %v1660
  %v1907 = vpack.c.bf16 %v1665, %v1663
  %v1908 = vpack.c.bf16 %v1666, %v1664
  %v1909 = vpack.c.bf16 %v1669, %v1667
  %v1910 = vpack.c.bf16 %v1670, %v1668
  %v1911 = vpack.c.bf16 %v1673, %v1671
  %v1912 = vpack.c.bf16 %v1674, %v1672
  %v1913 = vpack.c.bf16 %v1677, %v1675
  %v1914 = vpack.c.bf16 %v1678, %v1676
  %v1915 = vpack.c.bf16 %v1681, %v1679
  %v1916 = vpack.c.bf16 %v1682, %v1680
  %v1917 = vpack.c.bf16 %v1685, %v1683
  %v1918 = vpack.c.bf16 %v1686, %v1684
  %v1919 = vpack.c.bf16 %v1689, %v1687
  %v1920 = vpack.c.bf16 %v1690, %v1688
  %v1921 = vpack.c.bf16 %v1693, %v1691
  %v1922 = vpack.c.bf16 %v1694, %v1692
  %v1923 = vpack.c.bf16 %v1697, %v1695
  %v1924 = vpack.c.bf16 %v1698, %v1696
  %v1925 = vpack.c.bf16 %v1701, %v1699
  %v1926 = vpack.c.bf16 %v1702, %v1700
  %v1927 = vpack.c.bf16 %v1705, %v1703
  %v1928 = vpack.c.bf16 %v1706, %v1704
  %v1929 = vpack.c.bf16 %v1709, %v1707
  %v1930 = vpack.c.bf16 %v1710, %v1708
  %v1931 = vpack.c.bf16 %v1713, %v1711
  %v1932 = vpack.c.bf16 %v1714, %v1712
  %v1933 = vpack.c.bf16 %v1717, %v1715
  %v1934 = vpack.c.bf16 %v1718, %v1716
  %v1935 = vpack.c.bf16 %v1721, %v1719
  %v1936 = vpack.c.bf16 %v1722, %v1720
  %v1937 = vpack.c.bf16 %v1725, %v1723
  %v1938 = vpack.c.bf16 %v1726, %v1724
  %v1939 = vpack.c.bf16 %v1729, %v1727
  %v1940 = vpack.c.bf16 %v1730, %v1728
  %v1941 = vpack.c.bf16 %v1733, %v1731
  %v1942 = vpack.c.bf16 %v1734, %v1732
  %v1943 = vpack.c.bf16 %v1737, %v1735
  %v1944 = vpack.c.bf16 %v1738, %v1736
  %v1945 = vpack.c.bf16 %v1741, %v1739
  %v1946 = vpack.c.bf16 %v1742, %v1740
  %v1947 = vpack.c.bf16 %v1745, %v1743
  %v1948 = vpack.c.bf16 %v1746, %v1744
  %v1949 = vpack.c.bf16 %v1749, %v1747
  %v1950 = vpack.c.bf16 %v1750, %v1748
  %v1951 = vpack.c.bf16 %v1753, %v1751
  %v1952 = vpack.c.bf16 %v1754, %v1752
  %v1953 = vpack.c.bf16 %v1757, %v1755
  %v1954 = vpack.c.bf16 %v1758, %v1756
  %v1955 = vpack.c.bf16 %v1761, %v1759
  %v1956 = vpack.c.bf16 %v1762, %v1760
  %v1957 = vpack.c.bf16 %v1765, %v1763
  %v1958 = vpack.c.bf16 %v1766, %v1764
  %v1959 = vpack.c.bf16 %v1769, %v1767
  %v1960 = vpack.c.bf16 %v1770, %v1768
  %v1961 = vpack.c.bf16 %v1773, %v1771
  %v1962 = vpack.c.bf16 %v1774, %v1772
  %v1963 = vpack.c.bf16 %v1777, %v1775
  %v1964 = vpack.c.bf16 %v1778, %v1776
  %v1965 = vpack.c.bf16 %v1781, %v1779
  %v1966 = vpack.c.bf16 %v1782, %v1780
  %v1967 = vpack.c.bf16 %v1785, %v1783
  %v1968 = vpack.c.bf16 %v1786, %v1784
  %v1969 = vpack.c.bf16 %v1789, %v1787
  %v1970 = vpack.c.bf16 %v1790, %v1788
  %v1971 = vpack.c.bf16 %v1793, %v1791
  %v1972 = vpack.c.bf16 %v1794, %v1792
  %v1973 = vpack.c.bf16 %v1797, %v1795
  %v1974 = vpack.c.bf16 %v1798, %v1796
  %v1975 = vpack.c.bf16 %v1801, %v1799
  %v1976 = vpack.c.bf16 %v1802, %v1800
  %v1977 = vpack.c.bf16 %v1805, %v1803
  %v1978 = vpack.c.bf16 %v1806, %v1804
  %v1979 = vpack.c.bf16 %v1809, %v1807
  %v1980 = vpack.c.bf16 %v1810, %v1808
  %v1981 = vpack.c.bf16 %v1813, %v1811
  %v1982 = vpack.c.bf16 %v1814, %v1812
  %v1983 = vpack.c.bf16 %v1817, %v1815
  %v1984 = vpack.c.bf16 %v1818, %v1816
  %v1985 = vpack.c.bf16 %v1821, %v1819
  %v1986 = vpack.c.bf16 %v1822, %v1820
  %v1987 = vpack.c.bf16 %v1825, %v1823
  %v1988 = vpack.c.bf16 %v1826, %v1824
  %v1989 = vpack.c.bf16 %v1829, %v1827
  %v1990 = vpack.c.bf16 %v1830, %v1828
  %v1991 = vpack.c.bf16 %v1833, %v1831
  %v1992 = vpack.c.bf16 %v1834, %v1832
  %v1993 = vpack.c.bf16 %v1837, %v1835
  %v1994 = vpack.c.bf16 %v1838, %v1836
  %v1995 = vpack.c.bf16 %v1841, %v1839
  %v1996 = vpack.c.bf16 %v1842, %v1840
  %v1997 = vpack.c.bf16 %v1845, %v1843
  %v1998 = vpack.c.bf16 %v1846, %v1844
  %v1999 = vpack.c.bf16 %v1849, %v1847
  %v2000 = vpack.c.bf16 %v1850, %v1848
  %v2001 = vpack.c.bf16 %v1853, %v1851
  %v2002 = vpack.c.bf16 %v1854, %v1852
  %v2003 = vpack.c.bf16 %v1857, %v1855
  %v2004 = vpack.c.bf16 %v1858, %v1856
  %v2005 = vpack.c.bf16 %v1861, %v1859
  %v2006 = vpack.c.bf16 %v1862, %v1860
  %v2007 = vpack.c.bf16 %v1865, %v1863
  %v2008 = vpack.c.bf16 %v1866, %v1864
  %v2009 = vpack.c.bf16 %v1869, %v1867
  %v2010 = vpack.c.bf16 %v1870, %v1868
  %v2011 = vpack.c.bf16 %v1873, %v1871
  %v2012 = vpack.c.bf16 %v1874, %v1872
  %v2013 = vpack.c.bf16 %v1877, %v1875
  %v2014 = vpack.c.bf16 %v1878, %v1876
  %v2015 = vpack.c.bf16 %v1881, %v1879
  %v2016 = vpack.c.bf16 %v1882, %v1880
  %v2017 = vpack.c.bf16 %v1885, %v1883
  %v2018 = vpack.c.bf16 %v1886, %v1884
  %v2019 = vpack.c.bf16 %v1889, %v1887
  %v2020 = vpack.c.bf16 %v1890, %v1888
  %v2021 = vpack.c.bf16 %v1893, %v1891
  %v2022 = vpack.c.bf16 %v1894, %v1892
  %v2023 = vld [vmem:[%s5] sm:$0xf]
  %v2024 = vld [vmem:[%s5 + $0x4] sm:$0xf]
  %v2025 = vld [vmem:[%s5 + $0x8] sm:$0xf]
  %v2026 = vld [vmem:[%s5 + $0xc] sm:$0xf]
  %v2027 = vld [vmem:[%s5 + $0x10] sm:$0xf]
  %v2028 = vld [vmem:[%s5 + $0x14] sm:$0xf]
  %v2029 = vld [vmem:[%s5 + $0x18] sm:$0xf]
  %v2030 = vld [vmem:[%s5 + $0x1c] sm:$0xf]
  %v2031 = vld [vmem:[%s5 + $0x20] sm:$0xf]
  %v2032 = vld [vmem:[%s5 + $0x24] sm:$0xf]
  %v2033 = vld [vmem:[%s5 + $0x28] sm:$0xf]
  %v2034 = vld [vmem:[%s5 + $0x2c] sm:$0xf]
  %v2035 = vld [vmem:[%s5 + $0x30] sm:$0xf]
  %v2036 = vld [vmem:[%s5 + $0x34] sm:$0xf]
  %v2037 = vld [vmem:[%s5 + $0x38] sm:$0xf]
  %v2038 = vld [vmem:[%s5 + $0x3c] sm:$0xf]
  %v2039 = vld [vmem:[%s5 + $0x40] sm:$0xf]
  %v2040 = vld [vmem:[%s5 + $0x44] sm:$0xf]
  %v2041 = vld [vmem:[%s5 + $0x48] sm:$0xf]
  %v2042 = vld [vmem:[%s5 + $0x4c] sm:$0xf]
  %v2043 = vld [vmem:[%s5 + $0x50] sm:$0xf]
  %v2044 = vld [vmem:[%s5 + $0x54] sm:$0xf]
  %v2045 = vld [vmem:[%s5 + $0x58] sm:$0xf]
  %v2046 = vld [vmem:[%s5 + $0x5c] sm:$0xf]
  %v2047 = vld [vmem:[%s5 + $0x60] sm:$0xf]
  %v2048 = vld [vmem:[%s5 + $0x64] sm:$0xf]
  %v2049 = vld [vmem:[%s5 + $0x68] sm:$0xf]
  %v2050 = vld [vmem:[%s5 + $0x6c] sm:$0xf]
  %v2051 = vld [vmem:[%s5 + $0x70] sm:$0xf]
  %v2052 = vld [vmem:[%s5 + $0x74] sm:$0xf]
  %v2053 = vld [vmem:[%s5 + $0x78] sm:$0xf]
  %v2054 = vld [vmem:[%s5 + $0x7c] sm:$0xf]
  %v2055 = vld [vmem:[%s6] sm:$0x1]
  %v2057 = vlaneseq
  %v2058 = vshrl.u32 %v2057, 7
  %v2059 = vsub.s32 0, %v2058
  %v2060 = vrot.slane %v2055, %v2059
  %v2094 = vunpack.c.l.b16 %v2023
  %v2095 = vunpack.c.l.b16 %v2024
  %v2096 = vunpack.c.l.b16 %v2025
  %v2097 = vunpack.c.l.b16 %v2026
  %v2098 = vunpack.c.l.b16 %v2027
  %v2099 = vunpack.c.l.b16 %v2028
  %v2100 = vunpack.c.l.b16 %v2029
  %v2101 = vunpack.c.l.b16 %v2030
  %v2102 = vunpack.c.l.b16 %v2031
  %v2103 = vunpack.c.l.b16 %v2032
  %v2104 = vunpack.c.l.b16 %v2033
  %v2105 = vunpack.c.l.b16 %v2034
  %v2106 = vunpack.c.l.b16 %v2035
  %v2107 = vunpack.c.l.b16 %v2036
  %v2108 = vunpack.c.l.b16 %v2037
  %v2109 = vunpack.c.l.b16 %v2038
  %v2110 = vunpack.c.l.b16 %v2039
  %v2111 = vunpack.c.l.b16 %v2040
  %v2112 = vunpack.c.l.b16 %v2041
  %v2113 = vunpack.c.l.b16 %v2042
  %v2114 = vunpack.c.l.b16 %v2043
  %v2115 = vunpack.c.l.b16 %v2044
  %v2116 = vunpack.c.l.b16 %v2045
  %v2117 = vunpack.c.l.b16 %v2046
  %v2118 = vunpack.c.l.b16 %v2047
  %v2119 = vunpack.c.l.b16 %v2048
  %v2120 = vunpack.c.l.b16 %v2049
  %v2121 = vunpack.c.l.b16 %v2050
  %v2122 = vunpack.c.l.b16 %v2051
  %v2123 = vunpack.c.l.b16 %v2052
  %v2124 = vunpack.c.l.b16 %v2053
  %v2125 = vunpack.c.l.b16 %v2054
  %v2126 = vpack.c.b16 %v2095, %v2094
  %v2127 = vpack.c.b16 %v2097, %v2096
  %v2128 = vpack.c.b16 %v2099, %v2098
  %v2129 = vpack.c.b16 %v2101, %v2100
  %v2130 = vpack.c.b16 %v2103, %v2102
  %v2131 = vpack.c.b16 %v2105, %v2104
  %v2132 = vpack.c.b16 %v2107, %v2106
  %v2133 = vpack.c.b16 %v2109, %v2108
  %v2134 = vpack.c.b16 %v2111, %v2110
  %v2135 = vpack.c.b16 %v2113, %v2112
  %v2136 = vpack.c.b16 %v2115, %v2114
  %v2137 = vpack.c.b16 %v2117, %v2116
  %v2138 = vpack.c.b16 %v2119, %v2118
  %v2139 = vpack.c.b16 %v2121, %v2120
  %v2140 = vpack.c.b16 %v2123, %v2122
  %v2141 = vpack.c.b16 %v2125, %v2124
  %2158 = vmatprep.subr.bf16.mxu0 0
  %2159 = vmatpush1.bf16.msra.mxu0 %v2126
  %2160 = vmatprep.subr.bf16.mxu0 0
  %2161 = vmatpush1.bf16.msra.mxu0 %v2127
  %2162 = vmatprep.subr.bf16.mxu0 0
  %2163 = vmatpush1.bf16.msra.mxu0 %v2128
  %2164 = vmatprep.subr.bf16.mxu0 0
  %2165 = vmatpush1.bf16.msra.mxu0 %v2129
  %2166 = vmatprep.subr.bf16.mxu0 0
  %2167 = vmatpush1.bf16.msra.mxu0 %v2130
  %2168 = vmatprep.subr.bf16.mxu0 0
  %2169 = vmatpush1.bf16.msra.mxu0 %v2131
  %2170 = vmatprep.subr.bf16.mxu0 0
  %2171 = vmatpush1.bf16.msra.mxu0 %v2132
  %2172 = vmatprep.subr.bf16.mxu0 0
  %2173 = vmatpush1.bf16.msra.mxu0 %v2133
  %2174 = vmatprep.subr.bf16.mxu0 0
  %2175 = vmatpush1.bf16.msra.mxu0 %v2134
  %2176 = vmatprep.subr.bf16.mxu0 0
  %2177 = vmatpush1.bf16.msra.mxu0 %v2135
  %2178 = vmatprep.subr.bf16.mxu0 0
  %2179 = vmatpush1.bf16.msra.mxu0 %v2136
  %2180 = vmatprep.subr.bf16.mxu0 0
  %2181 = vmatpush1.bf16.msra.mxu0 %v2137
  %2182 = vmatprep.subr.bf16.mxu0 0
  %2183 = vmatpush1.bf16.msra.mxu0 %v2138
  %2184 = vmatprep.subr.bf16.mxu0 0
  %2185 = vmatpush1.bf16.msra.mxu0 %v2139
  %2186 = vmatprep.subr.bf16.mxu0 0
  %2187 = vmatpush1.bf16.msra.mxu0 %v2140
  %2188 = vmatprep.subr.bf16.mxu0 0
  %2189 = vmatpush1.bf16.msra.mxu0 %v2141
  %2190 = vmatprep.mubr.bf16.mxu0 %v1896
  %2191 = vmatmul.mubr.bf16.gmra.mrb[0].mxu0 %v1895
  %v2192 = vpop.f32.mrb[0].mxu0
  %v2193 = vadd.f32 %v2060, %v2192
  %v2194 = vpop.f32.mrb[0].mxu0
  %v2195 = vpop.f32.mrb[0].mxu0
  %v2196 = vadd.f32 %v2060, %v2195
  %v2197 = vpop.f32.mrb[0].mxu0
  %2198 = vmatprep.mubr.bf16.mxu0 %v1898
  %2199 = vmatmul.mubr.bf16.gmra.mrb[0].mxu0 %v1897
  %v2200 = vpop.f32.mrb[0].mxu0
  %v2201 = vadd.f32 %v2060, %v2200
  %v2202 = vpop.f32.mrb[0].mxu0
  %v2203 = vpop.f32.mrb[0].mxu0
  %v2204 = vadd.f32 %v2060, %v2203
  %v2205 = vpop.f32.mrb[0].mxu0
  %2206 = vmatprep.mubr.bf16.mxu0 %v1900
  %2207 = vmatmul.mubr.bf16.gmra.mrb[0].mxu0 %v1899
  %v2208 = vpop.f32.mrb[0].mxu0
  %v2209 = vadd.f32 %v2060, %v2208
  %v2210 = vpop.f32.mrb[0].mxu0
  %v2211 = vpop.f32.mrb[0].mxu0
  %v2212 = vadd.f32 %v2060, %v2211
  %v2213 = vpop.f32.mrb[0].mxu0
  %2214 = vmatprep.mubr.bf16.mxu0 %v1902
  %2215 = vmatmul.mubr.bf16.gmra.mrb[0].mxu0 %v1901
  %v2216 = vpop.f32.mrb[0].mxu0
  %v2217 = vadd.f32 %v2060, %v2216
  %v2218 = vpop.f32.mrb[0].mxu0
  %v2219 = vpop.f32.mrb[0].mxu0
  %v2220 = vadd.f32 %v2060, %v2219
  %v2221 = vpop.f32.mrb[0].mxu0
  %2222 = vmatprep.mubr.bf16.mxu0 %v1904
  %2223 = vmatmul.mubr.bf16.gmra.mrb[0].mxu0 %v1903
  %v2224 = vpop.f32.mrb[0].mxu0
  %v2225 = vadd.f32 %v2060, %v2224
  %v2226 = vpop.f32.mrb[0].mxu0
  %v2227 = vpop.f32.mrb[0].mxu0
  %v2228 = vadd.f32 %v2060, %v2227
  %v2229 = vpop.f32.mrb[0].mxu0
  %2230 = vmatprep.mubr.bf16.mxu0 %v1906
  %2231 = vmatmul.mubr.bf16.gmra.mrb[0].mxu0 %v1905
  %v2232 = vpop.f32.mrb[0].mxu0
  %v2233 = vadd.f32 %v2060, %v2232
  %v2234 = vpop.f32.mrb[0].mxu0
  %v2235 = vpop.f32.mrb[0].mxu0
  %v2236 = vadd.f32 %v2060, %v2235
  %v2237 = vpop.f32.mrb[0].mxu0
  %2238 = vmatprep.mubr.bf16.mxu0 %v1908
  %2239 = vmatmul.mubr.bf16.gmra.mrb[0].mxu0 %v1907
  %v2240 = vpop.f32.mrb[0].mxu0
  %v2241 = vadd.f32 %v2060, %v2240
  %v2242 = vpop.f32.mrb[0].mxu0
  %v2243 = vpop.f32.mrb[0].mxu0
  %v2244 = vadd.f32 %v2060, %v2243
  %v2245 = vpop.f32.mrb[0].mxu0
  %2246 = vmatprep.mubr.bf16.mxu0 %v1910
  %2247 = vmatmul.mubr.bf16.gmra.mrb[0].mxu0 %v1909
  %v2248 = vpop.f32.mrb[0].mxu0
  %v2249 = vadd.f32 %v2060, %v2248
  %v2250 = vpop.f32.mrb[0].mxu0
  %v2251 = vpop.f32.mrb[0].mxu0
  %v2252 = vadd.f32 %v2060, %v2251
  %v2253 = vpop.f32.mrb[0].mxu0
  %2254 = vmatprep.mubr.bf16.mxu0 %v1912
  %2255 = vmatmul.mubr.bf16.gmra.mrb[0].mxu0 %v1911
  %v2256 = vpop.f32.mrb[0].mxu0
  %v2257 = vadd.f32 %v2060, %v2256
  %v2258 = vpop.f32.mrb[0].mxu0
  %v2259 = vpop.f32.mrb[0].mxu0
  %v2260 = vadd.f32 %v2060, %v2259
  %v2261 = vpop.f32.mrb[0].mxu0
  %2262 = vmatprep.mubr.bf16.mxu0 %v1914
  %2263 = vmatmul.mubr.bf16.gmra.mrb[0].mxu0 %v1913
  %v2264 = vpop.f32.mrb[0].mxu0
  %v2265 = vadd.f32 %v2060, %v2264
  %v2266 = vpop.f32.mrb[0].mxu0
  %v2267 = vpop.f32.mrb[0].mxu0
  %v2268 = vadd.f32 %v2060, %v2267
  %v2269 = vpop.f32.mrb[0].mxu0
  %2270 = vmatprep.mubr.bf16.mxu0 %v1916
  %2271 = vmatmul.mubr.bf16.gmra.mrb[0].mxu0 %v1915
  %v2272 = vpop.f32.mrb[0].mxu0
  %v2273 = vadd.f32 %v2060, %v2272
  %v2274 = vpop.f32.mrb[0].mxu0
  %v2275 = vpop.f32.mrb[0].mxu0
  %v2276 = vadd.f32 %v2060, %v2275
  %v2277 = vpop.f32.mrb[0].mxu0
  %2278 = vmatprep.mubr.bf16.mxu0 %v1918
  %2279 = vmatmul.mubr.bf16.gmra.mrb[0].mxu0 %v1917
  %v2280 = vpop.f32.mrb[0].mxu0
  %v2281 = vadd.f32 %v2060, %v2280
  %v2282 = vpop.f32.mrb[0].mxu0
  %v2283 = vpop.f32.mrb[0].mxu0
  %v2284 = vadd.f32 %v2060, %v2283
  %v2285 = vpop.f32.mrb[0].mxu0
  %2286 = vmatprep.mubr.bf16.mxu0 %v1920
  %2287 = vmatmul.mubr.bf16.gmra.mrb[0].mxu0 %v1919
  %v2288 = vpop.f32.mrb[0].mxu0
  %v2289 = vadd.f32 %v2060, %v2288
  %v2290 = vpop.f32.mrb[0].mxu0
  %v2291 = vpop.f32.mrb[0].mxu0
  %v2292 = vadd.f32 %v2060, %v2291
  %v2293 = vpop.f32.mrb[0].mxu0
  %2294 = vmatprep.mubr.bf16.mxu0 %v1922
  %2295 = vmatmul.mubr.bf16.gmra.mrb[0].mxu0 %v1921
  %v2296 = vpop.f32.mrb[0].mxu0
  %v2297 = vadd.f32 %v2060, %v2296
  %v2298 = vpop.f32.mrb[0].mxu0
  %v2299 = vpop.f32.mrb[0].mxu0
  %v2300 = vadd.f32 %v2060, %v2299
  %v2301 = vpop.f32.mrb[0].mxu0
  %2302 = vmatprep.mubr.bf16.mxu0 %v1924
  %2303 = vmatmul.mubr.bf16.gmra.mrb[0].mxu0 %v1923
  %v2304 = vpop.f32.mrb[0].mxu0
  %v2305 = vadd.f32 %v2060, %v2304
  %v2306 = vpop.f32.mrb[0].mxu0
  %v2307 = vpop.f32.mrb[0].mxu0
  %v2308 = vadd.f32 %v2060, %v2307
  %v2309 = vpop.f32.mrb[0].mxu0
  %2310 = vmatprep.mubr.bf16.mxu0 %v1926
  %2311 = vmatmul.mubr.bf16.gmra.mrb[0].mxu0 %v1925
  %v2312 = vpop.f32.mrb[0].mxu0
  %v2313 = vadd.f32 %v2060, %v2312
  %v2314 = vpop.f32.mrb[0].mxu0
  %v2315 = vpop.f32.mrb[0].mxu0
  %v2316 = vadd.f32 %v2060, %v2315
  %v2317 = vpop.f32.mrb[0].mxu0
  %2318 = vmatprep.mubr.bf16.mxu0 %v1928
  %2319 = vmatmul.mubr.bf16.gmra.mrb[0].mxu0 %v1927
  %v2320 = vpop.f32.mrb[0].mxu0
  %v2321 = vadd.f32 %v2060, %v2320
  %v2322 = vpop.f32.mrb[0].mxu0
  %v2323 = vpop.f32.mrb[0].mxu0
  %v2324 = vadd.f32 %v2060, %v2323
  %v2325 = vpop.f32.mrb[0].mxu0
  %2326 = vmatprep.mubr.bf16.mxu0 %v1930
  %2327 = vmatmul.mubr.bf16.gmra.mrb[0].mxu0 %v1929
  %v2328 = vpop.f32.mrb[0].mxu0
  %v2329 = vadd.f32 %v2060, %v2328
  %v2330 = vpop.f32.mrb[0].mxu0
  %v2331 = vpop.f32.mrb[0].mxu0
  %v2332 = vadd.f32 %v2060, %v2331
  %v2333 = vpop.f32.mrb[0].mxu0
  %2334 = vmatprep.mubr.bf16.mxu0 %v1932
  %2335 = vmatmul.mubr.bf16.gmra.mrb[0].mxu0 %v1931
  %v2336 = vpop.f32.mrb[0].mxu0
  %v2337 = vadd.f32 %v2060, %v2336
  %v2338 = vpop.f32.mrb[0].mxu0
  %v2339 = vpop.f32.mrb[0].mxu0
  %v2340 = vadd.f32 %v2060, %v2339
  %v2341 = vpop.f32.mrb[0].mxu0
  %2342 = vmatprep.mubr.bf16.mxu0 %v1934
  %2343 = vmatmul.mubr.bf16.gmra.mrb[0].mxu0 %v1933
  %v2344 = vpop.f32.mrb[0].mxu0
  %v2345 = vadd.f32 %v2060, %v2344
  %v2346 = vpop.f32.mrb[0].mxu0
  %v2347 = vpop.f32.mrb[0].mxu0
  %v2348 = vadd.f32 %v2060, %v2347
  %v2349 = vpop.f32.mrb[0].mxu0
  %2350 = vmatprep.mubr.bf16.mxu0 %v1936
  %2351 = vmatmul.mubr.bf16.gmra.mrb[0].mxu0 %v1935
  %v2352 = vpop.f32.mrb[0].mxu0
  %v2353 = vadd.f32 %v2060, %v2352
  %v2354 = vpop.f32.mrb[0].mxu0
  %v2355 = vpop.f32.mrb[0].mxu0
  %v2356 = vadd.f32 %v2060, %v2355
  %v2357 = vpop.f32.mrb[0].mxu0
  %2358 = vmatprep.mubr.bf16.mxu0 %v1938
  %2359 = vmatmul.mubr.bf16.gmra.mrb[0].mxu0 %v1937
  %v2360 = vpop.f32.mrb[0].mxu0
  %v2361 = vadd.f32 %v2060, %v2360
  %v2362 = vpop.f32.mrb[0].mxu0
  %v2363 = vpop.f32.mrb[0].mxu0
  %v2364 = vadd.f32 %v2060, %v2363
  %v2365 = vpop.f32.mrb[0].mxu0
  %2366 = vmatprep.mubr.bf16.mxu0 %v1940
  %2367 = vmatmul.mubr.bf16.gmra.mrb[0].mxu0 %v1939
  %v2368 = vpop.f32.mrb[0].mxu0
  %v2369 = vadd.f32 %v2060, %v2368
  %v2370 = vpop.f32.mrb[0].mxu0
  %v2371 = vpop.f32.mrb[0].mxu0
  %v2372 = vadd.f32 %v2060, %v2371
  %v2373 = vpop.f32.mrb[0].mxu0
  %2374 = vmatprep.mubr.bf16.mxu0 %v1942
  %2375 = vmatmul.mubr.bf16.gmra.mrb[0].mxu0 %v1941
  %v2376 = vpop.f32.mrb[0].mxu0
  %v2377 = vadd.f32 %v2060, %v2376
  %v2378 = vpop.f32.mrb[0].mxu0
  %v2379 = vpop.f32.mrb[0].mxu0
  %v2380 = vadd.f32 %v2060, %v2379
  %v2381 = vpop.f32.mrb[0].mxu0
  %2382 = vmatprep.mubr.bf16.mxu0 %v1944
  %2383 = vmatmul.mubr.bf16.gmra.mrb[0].mxu0 %v1943
  %v2384 = vpop.f32.mrb[0].mxu0
  %v2385 = vadd.f32 %v2060, %v2384
  %v2386 = vpop.f32.mrb[0].mxu0
  %v2387 = vpop.f32.mrb[0].mxu0
  %v2388 = vadd.f32 %v2060, %v2387
  %v2389 = vpop.f32.mrb[0].mxu0
  %2390 = vmatprep.mubr.bf16.mxu0 %v1946
  %2391 = vmatmul.mubr.bf16.gmra.mrb[0].mxu0 %v1945
  %v2392 = vpop.f32.mrb[0].mxu0
  %v2393 = vadd.f32 %v2060, %v2392
  %v2394 = vpop.f32.mrb[0].mxu0
  %v2395 = vpop.f32.mrb[0].mxu0
  %v2396 = vadd.f32 %v2060, %v2395
  %v2397 = vpop.f32.mrb[0].mxu0
  %2398 = vmatprep.mubr.bf16.mxu0 %v1948
  %2399 = vmatmul.mubr.bf16.gmra.mrb[0].mxu0 %v1947
  %v2400 = vpop.f32.mrb[0].mxu0
  %v2401 = vadd.f32 %v2060, %v2400
  %v2402 = vpop.f32.mrb[0].mxu0
  %v2403 = vpop.f32.mrb[0].mxu0
  %v2404 = vadd.f32 %v2060, %v2403
  %v2405 = vpop.f32.mrb[0].mxu0
  %2406 = vmatprep.mubr.bf16.mxu0 %v1950
  %2407 = vmatmul.mubr.bf16.gmra.mrb[0].mxu0 %v1949
  %v2408 = vpop.f32.mrb[0].mxu0
  %v2409 = vadd.f32 %v2060, %v2408
  %v2410 = vpop.f32.mrb[0].mxu0
  %v2411 = vpop.f32.mrb[0].mxu0
  %v2412 = vadd.f32 %v2060, %v2411
  %v2413 = vpop.f32.mrb[0].mxu0
  %2414 = vmatprep.mubr.bf16.mxu0 %v1952
  %2415 = vmatmul.mubr.bf16.gmra.mrb[0].mxu0 %v1951
  %v2416 = vpop.f32.mrb[0].mxu0
  %v2417 = vadd.f32 %v2060, %v2416
  %v2418 = vpop.f32.mrb[0].mxu0
  %v2419 = vpop.f32.mrb[0].mxu0
  %v2420 = vadd.f32 %v2060, %v2419
  %v2421 = vpop.f32.mrb[0].mxu0
  %2422 = vmatprep.mubr.bf16.mxu0 %v1954
  %2423 = vmatmul.mubr.bf16.gmra.mrb[0].mxu0 %v1953
  %v2424 = vpop.f32.mrb[0].mxu0
  %v2425 = vadd.f32 %v2060, %v2424
  %v2426 = vpop.f32.mrb[0].mxu0
  %v2427 = vpop.f32.mrb[0].mxu0
  %v2428 = vadd.f32 %v2060, %v2427
  %v2429 = vpop.f32.mrb[0].mxu0
  %2430 = vmatprep.mubr.bf16.mxu0 %v1956
  %2431 = vmatmul.mubr.bf16.gmra.mrb[0].mxu0 %v1955
  %v2432 = vpop.f32.mrb[0].mxu0
  %v2433 = vadd.f32 %v2060, %v2432
  %v2434 = vpop.f32.mrb[0].mxu0
  %v2435 = vpop.f32.mrb[0].mxu0
  %v2436 = vadd.f32 %v2060, %v2435
  %v2437 = vpop.f32.mrb[0].mxu0
  %2438 = vmatprep.mubr.bf16.mxu0 %v1958
  %2439 = vmatmul.mubr.bf16.gmra.mrb[0].mxu0 %v1957
  %v2440 = vpop.f32.mrb[0].mxu0
  %v2441 = vadd.f32 %v2060, %v2440
  %v2442 = vpop.f32.mrb[0].mxu0
  %v2443 = vpop.f32.mrb[0].mxu0
  %v2444 = vadd.f32 %v2060, %v2443
  %v2445 = vpop.f32.mrb[0].mxu0
  %2446 = vmatprep.mubr.bf16.mxu0 %v1960
  %2447 = vmatmul.mubr.bf16.gmra.mrb[0].mxu0 %v1959
  %v2448 = vpop.f32.mrb[0].mxu0
  %v2449 = vadd.f32 %v2060, %v2448
  %v2450 = vpop.f32.mrb[0].mxu0
  %v2451 = vpop.f32.mrb[0].mxu0
  %v2452 = vadd.f32 %v2060, %v2451
  %v2453 = vpop.f32.mrb[0].mxu0
  %2454 = vmatprep.mubr.bf16.mxu0 %v1962
  %2455 = vmatmul.mubr.bf16.gmra.mrb[0].mxu0 %v1961
  %v2456 = vpop.f32.mrb[0].mxu0
  %v2457 = vadd.f32 %v2060, %v2456
  %v2458 = vpop.f32.mrb[0].mxu0
  %v2459 = vpop.f32.mrb[0].mxu0
  %v2460 = vadd.f32 %v2060, %v2459
  %v2461 = vpop.f32.mrb[0].mxu0
  %2462 = vmatprep.mubr.bf16.mxu0 %v1964
  %2463 = vmatmul.mubr.bf16.gmra.mrb[0].mxu0 %v1963
  %v2464 = vpop.f32.mrb[0].mxu0
  %v2465 = vadd.f32 %v2060, %v2464
  %v2466 = vpop.f32.mrb[0].mxu0
  %v2467 = vpop.f32.mrb[0].mxu0
  %v2468 = vadd.f32 %v2060, %v2467
  %v2469 = vpop.f32.mrb[0].mxu0
  %2470 = vmatprep.mubr.bf16.mxu0 %v1966
  %2471 = vmatmul.mubr.bf16.gmra.mrb[0].mxu0 %v1965
  %v2472 = vpop.f32.mrb[0].mxu0
  %v2473 = vadd.f32 %v2060, %v2472
  %v2474 = vpop.f32.mrb[0].mxu0
  %v2475 = vpop.f32.mrb[0].mxu0
  %v2476 = vadd.f32 %v2060, %v2475
  %v2477 = vpop.f32.mrb[0].mxu0
  %2478 = vmatprep.mubr.bf16.mxu0 %v1968
  %2479 = vmatmul.mubr.bf16.gmra.mrb[0].mxu0 %v1967
  %v2480 = vpop.f32.mrb[0].mxu0
  %v2481 = vadd.f32 %v2060, %v2480
  %v2482 = vpop.f32.mrb[0].mxu0
  %v2483 = vpop.f32.mrb[0].mxu0
  %v2484 = vadd.f32 %v2060, %v2483
  %v2485 = vpop.f32.mrb[0].mxu0
  %2486 = vmatprep.mubr.bf16.mxu0 %v1970
  %2487 = vmatmul.mubr.bf16.gmra.mrb[0].mxu0 %v1969
  %v2488 = vpop.f32.mrb[0].mxu0
  %v2489 = vadd.f32 %v2060, %v2488
  %v2490 = vpop.f32.mrb[0].mxu0
  %v2491 = vpop.f32.mrb[0].mxu0
  %v2492 = vadd.f32 %v2060, %v2491
  %v2493 = vpop.f32.mrb[0].mxu0
  %2494 = vmatprep.mubr.bf16.mxu0 %v1972
  %2495 = vmatmul.mubr.bf16.gmra.mrb[0].mxu0 %v1971
  %v2496 = vpop.f32.mrb[0].mxu0
  %v2497 = vadd.f32 %v2060, %v2496
  %v2498 = vpop.f32.mrb[0].mxu0
  %v2499 = vpop.f32.mrb[0].mxu0
  %v2500 = vadd.f32 %v2060, %v2499
  %v2501 = vpop.f32.mrb[0].mxu0
  %2502 = vmatprep.mubr.bf16.mxu0 %v1974
  %2503 = vmatmul.mubr.bf16.gmra.mrb[0].mxu0 %v1973
  %v2504 = vpop.f32.mrb[0].mxu0
  %v2505 = vadd.f32 %v2060, %v2504
  %v2506 = vpop.f32.mrb[0].mxu0
  %v2507 = vpop.f32.mrb[0].mxu0
  %v2508 = vadd.f32 %v2060, %v2507
  %v2509 = vpop.f32.mrb[0].mxu0
  %2510 = vmatprep.mubr.bf16.mxu0 %v1976
  %2511 = vmatmul.mubr.bf16.gmra.mrb[0].mxu0 %v1975
  %v2512 = vpop.f32.mrb[0].mxu0
  %v2513 = vadd.f32 %v2060, %v2512
  %v2514 = vpop.f32.mrb[0].mxu0
  %v2515 = vpop.f32.mrb[0].mxu0
  %v2516 = vadd.f32 %v2060, %v2515
  %v2517 = vpop.f32.mrb[0].mxu0
  %2518 = vmatprep.mubr.bf16.mxu0 %v1978
  %2519 = vmatmul.mubr.bf16.gmra.mrb[0].mxu0 %v1977
  %v2520 = vpop.f32.mrb[0].mxu0
  %v2521 = vadd.f32 %v2060, %v2520
  %v2522 = vpop.f32.mrb[0].mxu0
  %v2523 = vpop.f32.mrb[0].mxu0
  %v2524 = vadd.f32 %v2060, %v2523
  %v2525 = vpop.f32.mrb[0].mxu0
  %2526 = vmatprep.mubr.bf16.mxu0 %v1980
  %2527 = vmatmul.mubr.bf16.gmra.mrb[0].mxu0 %v1979
  %v2528 = vpop.f32.mrb[0].mxu0
  %v2529 = vadd.f32 %v2060, %v2528
  %v2530 = vpop.f32.mrb[0].mxu0
  %v2531 = vpop.f32.mrb[0].mxu0
  %v2532 = vadd.f32 %v2060, %v2531
  %v2533 = vpop.f32.mrb[0].mxu0
  %2534 = vmatprep.mubr.bf16.mxu0 %v1982
  %2535 = vmatmul.mubr.bf16.gmra.mrb[0].mxu0 %v1981
  %v2536 = vpop.f32.mrb[0].mxu0
  %v2537 = vadd.f32 %v2060, %v2536
  %v2538 = vpop.f32.mrb[0].mxu0
  %v2539 = vpop.f32.mrb[0].mxu0
  %v2540 = vadd.f32 %v2060, %v2539
  %v2541 = vpop.f32.mrb[0].mxu0
  %2542 = vmatprep.mubr.bf16.mxu0 %v1984
  %2543 = vmatmul.mubr.bf16.gmra.mrb[0].mxu0 %v1983
  %v2544 = vpop.f32.mrb[0].mxu0
  %v2545 = vadd.f32 %v2060, %v2544
  %v2546 = vpop.f32.mrb[0].mxu0
  %v2547 = vpop.f32.mrb[0].mxu0
  %v2548 = vadd.f32 %v2060, %v2547
  %v2549 = vpop.f32.mrb[0].mxu0
  %2550 = vmatprep.mubr.bf16.mxu0 %v1986
  %2551 = vmatmul.mubr.bf16.gmra.mrb[0].mxu0 %v1985
  %v2552 = vpop.f32.mrb[0].mxu0
  %v2553 = vadd.f32 %v2060, %v2552
  %v2554 = vpop.f32.mrb[0].mxu0
  %v2555 = vpop.f32.mrb[0].mxu0
  %v2556 = vadd.f32 %v2060, %v2555
  %v2557 = vpop.f32.mrb[0].mxu0
  %2558 = vmatprep.mubr.bf16.mxu0 %v1988
  %2559 = vmatmul.mubr.bf16.gmra.mrb[0].mxu0 %v1987
  %v2560 = vpop.f32.mrb[0].mxu0
  %v2561 = vadd.f32 %v2060, %v2560
  %v2562 = vpop.f32.mrb[0].mxu0
  %v2563 = vpop.f32.mrb[0].mxu0
  %v2564 = vadd.f32 %v2060, %v2563
  %v2565 = vpop.f32.mrb[0].mxu0
  %2566 = vmatprep.mubr.bf16.mxu0 %v1990
  %2567 = vmatmul.mubr.bf16.gmra.mrb[0].mxu0 %v1989
  %v2568 = vpop.f32.mrb[0].mxu0
  %v2569 = vadd.f32 %v2060, %v2568
  %v2570 = vpop.f32.mrb[0].mxu0
  %v2571 = vpop.f32.mrb[0].mxu0
  %v2572 = vadd.f32 %v2060, %v2571
  %v2573 = vpop.f32.mrb[0].mxu0
  %2574 = vmatprep.mubr.bf16.mxu0 %v1992
  %2575 = vmatmul.mubr.bf16.gmra.mrb[0].mxu0 %v1991
  %v2576 = vpop.f32.mrb[0].mxu0
  %v2577 = vadd.f32 %v2060, %v2576
  %v2578 = vpop.f32.mrb[0].mxu0
  %v2579 = vpop.f32.mrb[0].mxu0
  %v2580 = vadd.f32 %v2060, %v2579
  %v2581 = vpop.f32.mrb[0].mxu0
  %2582 = vmatprep.mubr.bf16.mxu0 %v1994
  %2583 = vmatmul.mubr.bf16.gmra.mrb[0].mxu0 %v1993
  %v2584 = vpop.f32.mrb[0].mxu0
  %v2585 = vadd.f32 %v2060, %v2584
  %v2586 = vpop.f32.mrb[0].mxu0
  %v2587 = vpop.f32.mrb[0].mxu0
  %v2588 = vadd.f32 %v2060, %v2587
  %v2589 = vpop.f32.mrb[0].mxu0
  %2590 = vmatprep.mubr.bf16.mxu0 %v1996
  %2591 = vmatmul.mubr.bf16.gmra.mrb[0].mxu0 %v1995
  %v2592 = vpop.f32.mrb[0].mxu0
  %v2593 = vadd.f32 %v2060, %v2592
  %v2594 = vpop.f32.mrb[0].mxu0
  %v2595 = vpop.f32.mrb[0].mxu0
  %v2596 = vadd.f32 %v2060, %v2595
  %v2597 = vpop.f32.mrb[0].mxu0
  %2598 = vmatprep.mubr.bf16.mxu0 %v1998
  %2599 = vmatmul.mubr.bf16.gmra.mrb[0].mxu0 %v1997
  %v2600 = vpop.f32.mrb[0].mxu0
  %v2601 = vadd.f32 %v2060, %v2600
  %v2602 = vpop.f32.mrb[0].mxu0
  %v2603 = vpop.f32.mrb[0].mxu0
  %v2604 = vadd.f32 %v2060, %v2603
  %v2605 = vpop.f32.mrb[0].mxu0
  %2606 = vmatprep.mubr.bf16.mxu0 %v2000
  %2607 = vmatmul.mubr.bf16.gmra.mrb[0].mxu0 %v1999
  %v2608 = vpop.f32.mrb[0].mxu0
  %v2609 = vadd.f32 %v2060, %v2608
  %v2610 = vpop.f32.mrb[0].mxu0
  %v2611 = vpop.f32.mrb[0].mxu0
  %v2612 = vadd.f32 %v2060, %v2611
  %v2613 = vpop.f32.mrb[0].mxu0
  %2614 = vmatprep.mubr.bf16.mxu0 %v2002
  %2615 = vmatmul.mubr.bf16.gmra.mrb[0].mxu0 %v2001
  %v2616 = vpop.f32.mrb[0].mxu0
  %v2617 = vadd.f32 %v2060, %v2616
  %v2618 = vpop.f32.mrb[0].mxu0
  %v2619 = vpop.f32.mrb[0].mxu0
  %v2620 = vadd.f32 %v2060, %v2619
  %v2621 = vpop.f32.mrb[0].mxu0
  %2622 = vmatprep.mubr.bf16.mxu0 %v2004
  %2623 = vmatmul.mubr.bf16.gmra.mrb[0].mxu0 %v2003
  %v2624 = vpop.f32.mrb[0].mxu0
  %v2625 = vadd.f32 %v2060, %v2624
  %v2626 = vpop.f32.mrb[0].mxu0
  %v2627 = vpop.f32.mrb[0].mxu0
  %v2628 = vadd.f32 %v2060, %v2627
  %v2629 = vpop.f32.mrb[0].mxu0
  %2630 = vmatprep.mubr.bf16.mxu0 %v2006
  %2631 = vmatmul.mubr.bf16.gmra.mrb[0].mxu0 %v2005
  %v2632 = vpop.f32.mrb[0].mxu0
  %v2633 = vadd.f32 %v2060, %v2632
  %v2634 = vpop.f32.mrb[0].mxu0
  %v2635 = vpop.f32.mrb[0].mxu0
  %v2636 = vadd.f32 %v2060, %v2635
  %v2637 = vpop.f32.mrb[0].mxu0
  %2638 = vmatprep.mubr.bf16.mxu0 %v2008
  %2639 = vmatmul.mubr.bf16.gmra.mrb[0].mxu0 %v2007
  %v2640 = vpop.f32.mrb[0].mxu0
  %v2641 = vadd.f32 %v2060, %v2640
  %v2642 = vpop.f32.mrb[0].mxu0
  %v2643 = vpop.f32.mrb[0].mxu0
  %v2644 = vadd.f32 %v2060, %v2643
  %v2645 = vpop.f32.mrb[0].mxu0
  %2646 = vmatprep.mubr.bf16.mxu0 %v2010
  %2647 = vmatmul.mubr.bf16.gmra.mrb[0].mxu0 %v2009
  %v2648 = vpop.f32.mrb[0].mxu0
  %v2649 = vadd.f32 %v2060, %v2648
  %v2650 = vpop.f32.mrb[0].mxu0
  %v2651 = vpop.f32.mrb[0].mxu0
  %v2652 = vadd.f32 %v2060, %v2651
  %v2653 = vpop.f32.mrb[0].mxu0
  %2654 = vmatprep.mubr.bf16.mxu0 %v2012
  %2655 = vmatmul.mubr.bf16.gmra.mrb[0].mxu0 %v2011
  %v2656 = vpop.f32.mrb[0].mxu0
  %v2657 = vadd.f32 %v2060, %v2656
  %v2658 = vpop.f32.mrb[0].mxu0
  %v2659 = vpop.f32.mrb[0].mxu0
  %v2660 = vadd.f32 %v2060, %v2659
  %v2661 = vpop.f32.mrb[0].mxu0
  %2662 = vmatprep.mubr.bf16.mxu0 %v2014
  %2663 = vmatmul.mubr.bf16.gmra.mrb[0].mxu0 %v2013
  %v2664 = vpop.f32.mrb[0].mxu0
  %v2665 = vadd.f32 %v2060, %v2664
  %v2666 = vpop.f32.mrb[0].mxu0
  %v2667 = vpop.f32.mrb[0].mxu0
  %v2668 = vadd.f32 %v2060, %v2667
  %v2669 = vpop.f32.mrb[0].mxu0
  %2670 = vmatprep.mubr.bf16.mxu0 %v2016
  %2671 = vmatmul.mubr.bf16.gmra.mrb[0].mxu0 %v2015
  %v2672 = vpop.f32.mrb[0].mxu0
  %v2673 = vadd.f32 %v2060, %v2672
  %v2674 = vpop.f32.mrb[0].mxu0
  %v2675 = vpop.f32.mrb[0].mxu0
  %v2676 = vadd.f32 %v2060, %v2675
  %v2677 = vpop.f32.mrb[0].mxu0
  %2678 = vmatprep.mubr.bf16.mxu0 %v2018
  %2679 = vmatmul.mubr.bf16.gmra.mrb[0].mxu0 %v2017
  %v2680 = vpop.f32.mrb[0].mxu0
  %v2681 = vadd.f32 %v2060, %v2680
  %v2682 = vpop.f32.mrb[0].mxu0
  %v2683 = vpop.f32.mrb[0].mxu0
  %v2684 = vadd.f32 %v2060, %v2683
  %v2685 = vpop.f32.mrb[0].mxu0
  %2686 = vmatprep.mubr.bf16.mxu0 %v2020
  %2687 = vmatmul.mubr.bf16.gmra.mrb[0].mxu0 %v2019
  %v2688 = vpop.f32.mrb[0].mxu0
  %v2689 = vadd.f32 %v2060, %v2688
  %v2690 = vpop.f32.mrb[0].mxu0
  %v2691 = vpop.f32.mrb[0].mxu0
  %v2692 = vadd.f32 %v2060, %v2691
  %v2693 = vpop.f32.mrb[0].mxu0
  %2694 = vmatprep.mubr.bf16.mxu0 %v2022
  %2695 = vmatmul.mubr.bf16.gmra.mrb[0].mxu0 %v2021
  %v2696 = vpop.f32.mrb[0].mxu0
  %v2697 = vadd.f32 %v2060, %v2696
  %v2698 = vpop.f32.mrb[0].mxu0
  %v2699 = vpop.f32.mrb[0].mxu0
  %v2700 = vadd.f32 %v2060, %v2699
  %v2701 = vpop.f32.mrb[0].mxu0
  %2702 = vdwg.mxu0
  %vm2703 = vcmp.gt.f32.partialorder %v2193, 0.0
  %vm2704 = vcmp.gt.f32.partialorder %v2196, 0.0
  %vm2705 = vcmp.gt.f32.partialorder %v2201, 0.0
  %vm2706 = vcmp.gt.f32.partialorder %v2204, 0.0
  %vm2707 = vcmp.gt.f32.partialorder %v2209, 0.0
  %vm2708 = vcmp.gt.f32.partialorder %v2212, 0.0
  %vm2709 = vcmp.gt.f32.partialorder %v2217, 0.0
  %vm2710 = vcmp.gt.f32.partialorder %v2220, 0.0
  %vm2711 = vcmp.gt.f32.partialorder %v2225, 0.0
  %vm2712 = vcmp.gt.f32.partialorder %v2228, 0.0
  %vm2713 = vcmp.gt.f32.partialorder %v2233, 0.0
  %vm2714 = vcmp.gt.f32.partialorder %v2236, 0.0
  %vm2715 = vcmp.gt.f32.partialorder %v2241, 0.0
  %vm2716 = vcmp.gt.f32.partialorder %v2244, 0.0
  %vm2717 = vcmp.gt.f32.partialorder %v2249, 0.0
  %vm2718 = vcmp.gt.f32.partialorder %v2252, 0.0
  %vm2719 = vcmp.gt.f32.partialorder %v2257, 0.0
  %vm2720 = vcmp.gt.f32.partialorder %v2260, 0.0
  %vm2721 = vcmp.gt.f32.partialorder %v2265, 0.0
  %vm2722 = vcmp.gt.f32.partialorder %v2268, 0.0
  %vm2723 = vcmp.gt.f32.partialorder %v2273, 0.0
  %vm2724 = vcmp.gt.f32.partialorder %v2276, 0.0
  %vm2725 = vcmp.gt.f32.partialorder %v2281, 0.0
  %vm2726 = vcmp.gt.f32.partialorder %v2284, 0.0
  %vm2727 = vcmp.gt.f32.partialorder %v2289, 0.0
  %vm2728 = vcmp.gt.f32.partialorder %v2292, 0.0
  %vm2729 = vcmp.gt.f32.partialorder %v2297, 0.0
  %vm2730 = vcmp.gt.f32.partialorder %v2300, 0.0
  %vm2731 = vcmp.gt.f32.partialorder %v2305, 0.0
  %vm2732 = vcmp.gt.f32.partialorder %v2308, 0.0
  %vm2733 = vcmp.gt.f32.partialorder %v2313, 0.0
  %vm2734 = vcmp.gt.f32.partialorder %v2316, 0.0
  %vm2735 = vcmp.gt.f32.partialorder %v2321, 0.0
  %vm2736 = vcmp.gt.f32.partialorder %v2324, 0.0
  %vm2737 = vcmp.gt.f32.partialorder %v2329, 0.0
  %vm2738 = vcmp.gt.f32.partialorder %v2332, 0.0
  %vm2739 = vcmp.gt.f32.partialorder %v2337, 0.0
  %vm2740 = vcmp.gt.f32.partialorder %v2340, 0.0
  %vm2741 = vcmp.gt.f32.partialorder %v2345, 0.0
  %vm2742 = vcmp.gt.f32.partialorder %v2348, 0.0
  %vm2743 = vcmp.gt.f32.partialorder %v2353, 0.0
  %vm2744 = vcmp.gt.f32.partialorder %v2356, 0.0
  %vm2745 = vcmp.gt.f32.partialorder %v2361, 0.0
  %vm2746 = vcmp.gt.f32.partialorder %v2364, 0.0
  %vm2747 = vcmp.gt.f32.partialorder %v2369, 0.0
  %vm2748 = vcmp.gt.f32.partialorder %v2372, 0.0
  %vm2749 = vcmp.gt.f32.partialorder %v2377, 0.0
  %vm2750 = vcmp.gt.f32.partialorder %v2380, 0.0
  %vm2751 = vcmp.gt.f32.partialorder %v2385, 0.0
  %vm2752 = vcmp.gt.f32.partialorder %v2388, 0.0
  %vm2753 = vcmp.gt.f32.partialorder %v2393, 0.0
  %vm2754 = vcmp.gt.f32.partialorder %v2396, 0.0
  %vm2755 = vcmp.gt.f32.partialorder %v2401, 0.0
  %vm2756 = vcmp.gt.f32.partialorder %v2404, 0.0
  %vm2757 = vcmp.gt.f32.partialorder %v2409, 0.0
  %vm2758 = vcmp.gt.f32.partialorder %v2412, 0.0
  %vm2759 = vcmp.gt.f32.partialorder %v2417, 0.0
  %vm2760 = vcmp.gt.f32.partialorder %v2420, 0.0
  %vm2761 = vcmp.gt.f32.partialorder %v2425, 0.0
  %vm2762 = vcmp.gt.f32.partialorder %v2428, 0.0
  %vm2763 = vcmp.gt.f32.partialorder %v2433, 0.0
  %vm2764 = vcmp.gt.f32.partialorder %v2436, 0.0
  %vm2765 = vcmp.gt.f32.partialorder %v2441, 0.0
  %vm2766 = vcmp.gt.f32.partialorder %v2444, 0.0
  %vm2767 = vcmp.gt.f32.partialorder %v2449, 0.0
  %vm2768 = vcmp.gt.f32.partialorder %v2452, 0.0
  %vm2769 = vcmp.gt.f32.partialorder %v2457, 0.0
  %vm2770 = vcmp.gt.f32.partialorder %v2460, 0.0
  %vm2771 = vcmp.gt.f32.partialorder %v2465, 0.0
  %vm2772 = vcmp.gt.f32.partialorder %v2468, 0.0
  %vm2773 = vcmp.gt.f32.partialorder %v2473, 0.0
  %vm2774 = vcmp.gt.f32.partialorder %v2476, 0.0
  %vm2775 = vcmp.gt.f32.partialorder %v2481, 0.0
  %vm2776 = vcmp.gt.f32.partialorder %v2484, 0.0
  %vm2777 = vcmp.gt.f32.partialorder %v2489, 0.0
  %vm2778 = vcmp.gt.f32.partialorder %v2492, 0.0
  %vm2779 = vcmp.gt.f32.partialorder %v2497, 0.0
  %vm2780 = vcmp.gt.f32.partialorder %v2500, 0.0
  %vm2781 = vcmp.gt.f32.partialorder %v2505, 0.0
  %vm2782 = vcmp.gt.f32.partialorder %v2508, 0.0
  %vm2783 = vcmp.gt.f32.partialorder %v2513, 0.0
  %vm2784 = vcmp.gt.f32.partialorder %v2516, 0.0
  %vm2785 = vcmp.gt.f32.partialorder %v2521, 0.0
  %vm2786 = vcmp.gt.f32.partialorder %v2524, 0.0
  %vm2787 = vcmp.gt.f32.partialorder %v2529, 0.0
  %vm2788 = vcmp.gt.f32.partialorder %v2532, 0.0
  %vm2789 = vcmp.gt.f32.partialorder %v2537, 0.0
  %vm2790 = vcmp.gt.f32.partialorder %v2540, 0.0
  %vm2791 = vcmp.gt.f32.partialorder %v2545, 0.0
  %vm2792 = vcmp.gt.f32.partialorder %v2548, 0.0
  %vm2793 = vcmp.gt.f32.partialorder %v2553, 0.0
  %vm2794 = vcmp.gt.f32.partialorder %v2556, 0.0
  %vm2795 = vcmp.gt.f32.partialorder %v2561, 0.0
  %vm2796 = vcmp.gt.f32.partialorder %v2564, 0.0
  %vm2797 = vcmp.gt.f32.partialorder %v2569, 0.0
  %vm2798 = vcmp.gt.f32.partialorder %v2572, 0.0
  %vm2799 = vcmp.gt.f32.partialorder %v2577, 0.0
  %vm2800 = vcmp.gt.f32.partialorder %v2580, 0.0
  %vm2801 = vcmp.gt.f32.partialorder %v2585, 0.0
  %vm2802 = vcmp.gt.f32.partialorder %v2588, 0.0
  %vm2803 = vcmp.gt.f32.partialorder %v2593, 0.0
  %vm2804 = vcmp.gt.f32.partialorder %v2596, 0.0
  %vm2805 = vcmp.gt.f32.partialorder %v2601, 0.0
  %vm2806 = vcmp.gt.f32.partialorder %v2604, 0.0
  %vm2807 = vcmp.gt.f32.partialorder %v2609, 0.0
  %vm2808 = vcmp.gt.f32.partialorder %v2612, 0.0
  %vm2809 = vcmp.gt.f32.partialorder %v2617, 0.0
  %vm2810 = vcmp.gt.f32.partialorder %v2620, 0.0
  %vm2811 = vcmp.gt.f32.partialorder %v2625, 0.0
  %vm2812 = vcmp.gt.f32.partialorder %v2628, 0.0
  %vm2813 = vcmp.gt.f32.partialorder %v2633, 0.0
  %vm2814 = vcmp.gt.f32.partialorder %v2636, 0.0
  %vm2815 = vcmp.gt.f32.partialorder %v2641, 0.0
  %vm2816 = vcmp.gt.f32.partialorder %v2644, 0.0
  %vm2817 = vcmp.gt.f32.partialorder %v2649, 0.0
  %vm2818 = vcmp.gt.f32.partialorder %v2652, 0.0
  %vm2819 = vcmp.gt.f32.partialorder %v2657, 0.0
  %vm2820 = vcmp.gt.f32.partialorder %v2660, 0.0
  %vm2821 = vcmp.gt.f32.partialorder %v2665, 0.0
  %vm2822 = vcmp.gt.f32.partialorder %v2668, 0.0
  %vm2823 = vcmp.gt.f32.partialorder %v2673, 0.0
  %vm2824 = vcmp.gt.f32.partialorder %v2676, 0.0
  %vm2825 = vcmp.gt.f32.partialorder %v2681, 0.0
  %vm2826 = vcmp.gt.f32.partialorder %v2684, 0.0
  %vm2827 = vcmp.gt.f32.partialorder %v2689, 0.0
  %vm2828 = vcmp.gt.f32.partialorder %v2692, 0.0
  %vm2829 = vcmp.gt.f32.partialorder %v2697, 0.0
  %vm2830 = vcmp.gt.f32.partialorder %v2700, 0.0
  %v2831 = vmul.f32 %v2193, 0.01
  %v2832 = vmul.f32 %v2196, 0.01
  %v2833 = vmul.f32 %v2201, 0.01
  %v2834 = vmul.f32 %v2204, 0.01
  %v2835 = vmul.f32 %v2209, 0.01
  %v2836 = vmul.f32 %v2212, 0.01
  %v2837 = vmul.f32 %v2217, 0.01
  %v2838 = vmul.f32 %v2220, 0.01
  %v2839 = vmul.f32 %v2225, 0.01
  %v2840 = vmul.f32 %v2228, 0.01
  %v2841 = vmul.f32 %v2233, 0.01
  %v2842 = vmul.f32 %v2236, 0.01
  %v2843 = vmul.f32 %v2241, 0.01
  %v2844 = vmul.f32 %v2244, 0.01
  %v2845 = vmul.f32 %v2249, 0.01
  %v2846 = vmul.f32 %v2252, 0.01
  %v2847 = vmul.f32 %v2257, 0.01
  %v2848 = vmul.f32 %v2260, 0.01
  %v2849 = vmul.f32 %v2265, 0.01
  %v2850 = vmul.f32 %v2268, 0.01
  %v2851 = vmul.f32 %v2273, 0.01
  %v2852 = vmul.f32 %v2276, 0.01
  %v2853 = vmul.f32 %v2281, 0.01
  %v2854 = vmul.f32 %v2284, 0.01
  %v2855 = vmul.f32 %v2289, 0.01
  %v2856 = vmul.f32 %v2292, 0.01
  %v2857 = vmul.f32 %v2297, 0.01
  %v2858 = vmul.f32 %v2300, 0.01
  %v2859 = vmul.f32 %v2305, 0.01
  %v2860 = vmul.f32 %v2308, 0.01
  %v2861 = vmul.f32 %v2313, 0.01
  %v2862 = vmul.f32 %v2316, 0.01
  %v2863 = vmul.f32 %v2321, 0.01
  %v2864 = vmul.f32 %v2324, 0.01
  %v2865 = vmul.f32 %v2329, 0.01
  %v2866 = vmul.f32 %v2332, 0.01
  %v2867 = vmul.f32 %v2337, 0.01
  %v2868 = vmul.f32 %v2340, 0.01
  %v2869 = vmul.f32 %v2345, 0.01
  %v2870 = vmul.f32 %v2348, 0.01
  %v2871 = vmul.f32 %v2353, 0.01
  %v2872 = vmul.f32 %v2356, 0.01
  %v2873 = vmul.f32 %v2361, 0.01
  %v2874 = vmul.f32 %v2364, 0.01
  %v2875 = vmul.f32 %v2369, 0.01
  %v2876 = vmul.f32 %v2372, 0.01
  %v2877 = vmul.f32 %v2377, 0.01
  %v2878 = vmul.f32 %v2380, 0.01
  %v2879 = vmul.f32 %v2385, 0.01
  %v2880 = vmul.f32 %v2388, 0.01
  %v2881 = vmul.f32 %v2393, 0.01
  %v2882 = vmul.f32 %v2396, 0.01
  %v2883 = vmul.f32 %v2401, 0.01
  %v2884 = vmul.f32 %v2404, 0.01
  %v2885 = vmul.f32 %v2409, 0.01
  %v2886 = vmul.f32 %v2412, 0.01
  %v2887 = vmul.f32 %v2417, 0.01
  %v2888 = vmul.f32 %v2420, 0.01
  %v2889 = vmul.f32 %v2425, 0.01
  %v2890 = vmul.f32 %v2428, 0.01
  %v2891 = vmul.f32 %v2433, 0.01
  %v2892 = vmul.f32 %v2436, 0.01
  %v2893 = vmul.f32 %v2441, 0.01
  %v2894 = vmul.f32 %v2444, 0.01
  %v2895 = vmul.f32 %v2449, 0.01
  %v2896 = vmul.f32 %v2452, 0.01
  %v2897 = vmul.f32 %v2457, 0.01
  %v2898 = vmul.f32 %v2460, 0.01
  %v2899 = vmul.f32 %v2465, 0.01
  %v2900 = vmul.f32 %v2468, 0.01
  %v2901 = vmul.f32 %v2473, 0.01
  %v2902 = vmul.f32 %v2476, 0.01
  %v2903 = vmul.f32 %v2481, 0.01
  %v2904 = vmul.f32 %v2484, 0.01
  %v2905 = vmul.f32 %v2489, 0.01
  %v2906 = vmul.f32 %v2492, 0.01
  %v2907 = vmul.f32 %v2497, 0.01
  %v2908 = vmul.f32 %v2500, 0.01
  %v2909 = vmul.f32 %v2505, 0.01
  %v2910 = vmul.f32 %v2508, 0.01
  %v2911 = vmul.f32 %v2513, 0.01
  %v2912 = vmul.f32 %v2516, 0.01
  %v2913 = vmul.f32 %v2521, 0.01
  %v2914 = vmul.f32 %v2524, 0.01
  %v2915 = vmul.f32 %v2529, 0.01
  %v2916 = vmul.f32 %v2532, 0.01
  %v2917 = vmul.f32 %v2537, 0.01
  %v2918 = vmul.f32 %v2540, 0.01
  %v2919 = vmul.f32 %v2545, 0.01
  %v2920 = vmul.f32 %v2548, 0.01
  %v2921 = vmul.f32 %v2553, 0.01
  %v2922 = vmul.f32 %v2556, 0.01
  %v2923 = vmul.f32 %v2561, 0.01
  %v2924 = vmul.f32 %v2564, 0.01
  %v2925 = vmul.f32 %v2569, 0.01
  %v2926 = vmul.f32 %v2572, 0.01
  %v2927 = vmul.f32 %v2577, 0.01
  %v2928 = vmul.f32 %v2580, 0.01
  %v2929 = vmul.f32 %v2585, 0.01
  %v2930 = vmul.f32 %v2588, 0.01
  %v2931 = vmul.f32 %v2593, 0.01
  %v2932 = vmul.f32 %v2596, 0.01
  %v2933 = vmul.f32 %v2601, 0.01
  %v2934 = vmul.f32 %v2604, 0.01
  %v2935 = vmul.f32 %v2609, 0.01
  %v2936 = vmul.f32 %v2612, 0.01
  %v2937 = vmul.f32 %v2617, 0.01
  %v2938 = vmul.f32 %v2620, 0.01
  %v2939 = vmul.f32 %v2625, 0.01
  %v2940 = vmul.f32 %v2628, 0.01
  %v2941 = vmul.f32 %v2633, 0.01
  %v2942 = vmul.f32 %v2636, 0.01
  %v2943 = vmul.f32 %v2641, 0.01
  %v2944 = vmul.f32 %v2644, 0.01
  %v2945 = vmul.f32 %v2649, 0.01
  %v2946 = vmul.f32 %v2652, 0.01
  %v2947 = vmul.f32 %v2657, 0.01
  %v2948 = vmul.f32 %v2660, 0.01
  %v2949 = vmul.f32 %v2665, 0.01
  %v2950 = vmul.f32 %v2668, 0.01
  %v2951 = vmul.f32 %v2673, 0.01
  %v2952 = vmul.f32 %v2676, 0.01
  %v2953 = vmul.f32 %v2681, 0.01
  %v2954 = vmul.f32 %v2684, 0.01
  %v2955 = vmul.f32 %v2689, 0.01
  %v2956 = vmul.f32 %v2692, 0.01
  %v2957 = vmul.f32 %v2697, 0.01
  %v2958 = vmul.f32 %v2700, 0.01
  %v2959 = vsel %vm2703, %v2193, %v2831
  %v2960 = vsel %vm2704, %v2196, %v2832
  %v2961 = vsel %vm2705, %v2201, %v2833
  %v2962 = vsel %vm2706, %v2204, %v2834
  %v2963 = vsel %vm2707, %v2209, %v2835
  %v2964 = vsel %vm2708, %v2212, %v2836
  %v2965 = vsel %vm2709, %v2217, %v2837
  %v2966 = vsel %vm2710, %v2220, %v2838
  %v2967 = vsel %vm2711, %v2225, %v2839
  %v2968 = vsel %vm2712, %v2228, %v2840
  %v2969 = vsel %vm2713, %v2233, %v2841
  %v2970 = vsel %vm2714, %v2236, %v2842
  %v2971 = vsel %vm2715, %v2241, %v2843
  %v2972 = vsel %vm2716, %v2244, %v2844
  %v2973 = vsel %vm2717, %v2249, %v2845
  %v2974 = vsel %vm2718, %v2252, %v2846
  %v2975 = vsel %vm2719, %v2257, %v2847
  %v2976 = vsel %vm2720, %v2260, %v2848
  %v2977 = vsel %vm2721, %v2265, %v2849
  %v2978 = vsel %vm2722, %v2268, %v2850
  %v2979 = vsel %vm2723, %v2273, %v2851
  %v2980 = vsel %vm2724, %v2276, %v2852
  %v2981 = vsel %vm2725, %v2281, %v2853
  %v2982 = vsel %vm2726, %v2284, %v2854
  %v2983 = vsel %vm2727, %v2289, %v2855
  %v2984 = vsel %vm2728, %v2292, %v2856
  %v2985 = vsel %vm2729, %v2297, %v2857
  %v2986 = vsel %vm2730, %v2300, %v2858
  %v2987 = vsel %vm2731, %v2305, %v2859
  %v2988 = vsel %vm2732, %v2308, %v2860
  %v2989 = vsel %vm2733, %v2313, %v2861
  %v2990 = vsel %vm2734, %v2316, %v2862
  %v2991 = vsel %vm2735, %v2321, %v2863
  %v2992 = vsel %vm2736, %v2324, %v2864
  %v2993 = vsel %vm2737, %v2329, %v2865
  %v2994 = vsel %vm2738, %v2332, %v2866
  %v2995 = vsel %vm2739, %v2337, %v2867
  %v2996 = vsel %vm2740, %v2340, %v2868
  %v2997 = vsel %vm2741, %v2345, %v2869
  %v2998 = vsel %vm2742, %v2348, %v2870
  %v2999 = vsel %vm2743, %v2353, %v2871
  %v3000 = vsel %vm2744, %v2356, %v2872
  %v3001 = vsel %vm2745, %v2361, %v2873
  %v3002 = vsel %vm2746, %v2364, %v2874
  %v3003 = vsel %vm2747, %v2369, %v2875
  %v3004 = vsel %vm2748, %v2372, %v2876
  %v3005 = vsel %vm2749, %v2377, %v2877
  %v3006 = vsel %vm2750, %v2380, %v2878
  %v3007 = vsel %vm2751, %v2385, %v2879
  %v3008 = vsel %vm2752, %v2388, %v2880
  %v3009 = vsel %vm2753, %v2393, %v2881
  %v3010 = vsel %vm2754, %v2396, %v2882
  %v3011 = vsel %vm2755, %v2401, %v2883
  %v3012 = vsel %vm2756, %v2404, %v2884
  %v3013 = vsel %vm2757, %v2409, %v2885
  %v3014 = vsel %vm2758, %v2412, %v2886
  %v3015 = vsel %vm2759, %v2417, %v2887
  %v3016 = vsel %vm2760, %v2420, %v2888
  %v3017 = vsel %vm2761, %v2425, %v2889
  %v3018 = vsel %vm2762, %v2428, %v2890
  %v3019 = vsel %vm2763, %v2433, %v2891
  %v3020 = vsel %vm2764, %v2436, %v2892
  %v3021 = vsel %vm2765, %v2441, %v2893
  %v3022 = vsel %vm2766, %v2444, %v2894
  %v3023 = vsel %vm2767, %v2449, %v2895
  %v3024 = vsel %vm2768, %v2452, %v2896
  %v3025 = vsel %vm2769, %v2457, %v2897
  %v3026 = vsel %vm2770, %v2460, %v2898
  %v3027 = vsel %vm2771, %v2465, %v2899
  %v3028 = vsel %vm2772, %v2468, %v2900
  %v3029 = vsel %vm2773, %v2473, %v2901
  %v3030 = vsel %vm2774, %v2476, %v2902
  %v3031 = vsel %vm2775, %v2481, %v2903
  %v3032 = vsel %vm2776, %v2484, %v2904
  %v3033 = vsel %vm2777, %v2489, %v2905
  %v3034 = vsel %vm2778, %v2492, %v2906
  %v3035 = vsel %vm2779, %v2497, %v2907
  %v3036 = vsel %vm2780, %v2500, %v2908
  %v3037 = vsel %vm2781, %v2505, %v2909
  %v3038 = vsel %vm2782, %v2508, %v2910
  %v3039 = vsel %vm2783, %v2513, %v2911
  %v3040 = vsel %vm2784, %v2516, %v2912
  %v3041 = vsel %vm2785, %v2521, %v2913
  %v3042 = vsel %vm2786, %v2524, %v2914
  %v3043 = vsel %vm2787, %v2529, %v2915
  %v3044 = vsel %vm2788, %v2532, %v2916
  %v3045 = vsel %vm2789, %v2537, %v2917
  %v3046 = vsel %vm2790, %v2540, %v2918
  %v3047 = vsel %vm2791, %v2545, %v2919
  %v3048 = vsel %vm2792, %v2548, %v2920
  %v3049 = vsel %vm2793, %v2553, %v2921
  %v3050 = vsel %vm2794, %v2556, %v2922
  %v3051 = vsel %vm2795, %v2561, %v2923
  %v3052 = vsel %vm2796, %v2564, %v2924
  %v3053 = vsel %vm2797, %v2569, %v2925
  %v3054 = vsel %vm2798, %v2572, %v2926
  %v3055 = vsel %vm2799, %v2577, %v2927
  %v3056 = vsel %vm2800, %v2580, %v2928
  %v3057 = vsel %vm2801, %v2585, %v2929
  %v3058 = vsel %vm2802, %v2588, %v2930
  %v3059 = vsel %vm2803, %v2593, %v2931
  %v3060 = vsel %vm2804, %v2596, %v2932
  %v3061 = vsel %vm2805, %v2601, %v2933
  %v3062 = vsel %vm2806, %v2604, %v2934
  %v3063 = vsel %vm2807, %v2609, %v2935
  %v3064 = vsel %vm2808, %v2612, %v2936
  %v3065 = vsel %vm2809, %v2617, %v2937
  %v3066 = vsel %vm2810, %v2620, %v2938
  %v3067 = vsel %vm2811, %v2625, %v2939
  %v3068 = vsel %vm2812, %v2628, %v2940
  %v3069 = vsel %vm2813, %v2633, %v2941
  %v3070 = vsel %vm2814, %v2636, %v2942
  %v3071 = vsel %vm2815, %v2641, %v2943
  %v3072 = vsel %vm2816, %v2644, %v2944
  %v3073 = vsel %vm2817, %v2649, %v2945
  %v3074 = vsel %vm2818, %v2652, %v2946
  %v3075 = vsel %vm2819, %v2657, %v2947
  %v3076 = vsel %vm2820, %v2660, %v2948
  %v3077 = vsel %vm2821, %v2665, %v2949
  %v3078 = vsel %vm2822, %v2668, %v2950
  %v3079 = vsel %vm2823, %v2673, %v2951
  %v3080 = vsel %vm2824, %v2676, %v2952
  %v3081 = vsel %vm2825, %v2681, %v2953
  %v3082 = vsel %vm2826, %v2684, %v2954
  %v3083 = vsel %vm2827, %v2689, %v2955
  %v3084 = vsel %vm2828, %v2692, %v2956
  %v3085 = vsel %vm2829, %v2697, %v2957
  %v3086 = vsel %vm2830, %v2700, %v2958
  %v3087 = vpack.c.bf16 %v2960, %v2959
  %v3088 = vpack.c.bf16 %v2962, %v2961
  %v3089 = vpack.c.bf16 %v2964, %v2963
  %v3090 = vpack.c.bf16 %v2966, %v2965
  %v3091 = vpack.c.bf16 %v2968, %v2967
  %v3092 = vpack.c.bf16 %v2970, %v2969
  %v3093 = vpack.c.bf16 %v2972, %v2971
  %v3094 = vpack.c.bf16 %v2974, %v2973
  %v3095 = vpack.c.bf16 %v2976, %v2975
  %v3096 = vpack.c.bf16 %v2978, %v2977
  %v3097 = vpack.c.bf16 %v2980, %v2979
  %v3098 = vpack.c.bf16 %v2982, %v2981
  %v3099 = vpack.c.bf16 %v2984, %v2983
  %v3100 = vpack.c.bf16 %v2986, %v2985
  %v3101 = vpack.c.bf16 %v2988, %v2987
  %v3102 = vpack.c.bf16 %v2990, %v2989
  %v3103 = vpack.c.bf16 %v2992, %v2991
  %v3104 = vpack.c.bf16 %v2994, %v2993
  %v3105 = vpack.c.bf16 %v2996, %v2995
  %v3106 = vpack.c.bf16 %v2998, %v2997
  %v3107 = vpack.c.bf16 %v3000, %v2999
  %v3108 = vpack.c.bf16 %v3002, %v3001
  %v3109 = vpack.c.bf16 %v3004, %v3003
  %v3110 = vpack.c.bf16 %v3006, %v3005
  %v3111 = vpack.c.bf16 %v3008, %v3007
  %v3112 = vpack.c.bf16 %v3010, %v3009
  %v3113 = vpack.c.bf16 %v3012, %v3011
  %v3114 = vpack.c.bf16 %v3014, %v3013
  %v3115 = vpack.c.bf16 %v3016, %v3015
  %v3116 = vpack.c.bf16 %v3018, %v3017
  %v3117 = vpack.c.bf16 %v3020, %v3019
  %v3118 = vpack.c.bf16 %v3022, %v3021
  %v3119 = vpack.c.bf16 %v3024, %v3023
  %v3120 = vpack.c.bf16 %v3026, %v3025
  %v3121 = vpack.c.bf16 %v3028, %v3027
  %v3122 = vpack.c.bf16 %v3030, %v3029
  %v3123 = vpack.c.bf16 %v3032, %v3031
  %v3124 = vpack.c.bf16 %v3034, %v3033
  %v3125 = vpack.c.bf16 %v3036, %v3035
  %v3126 = vpack.c.bf16 %v3038, %v3037
  %v3127 = vpack.c.bf16 %v3040, %v3039
  %v3128 = vpack.c.bf16 %v3042, %v3041
  %v3129 = vpack.c.bf16 %v3044, %v3043
  %v3130 = vpack.c.bf16 %v3046, %v3045
  %v3131 = vpack.c.bf16 %v3048, %v3047
  %v3132 = vpack.c.bf16 %v3050, %v3049
  %v3133 = vpack.c.bf16 %v3052, %v3051
  %v3134 = vpack.c.bf16 %v3054, %v3053
  %v3135 = vpack.c.bf16 %v3056, %v3055
  %v3136 = vpack.c.bf16 %v3058, %v3057
  %v3137 = vpack.c.bf16 %v3060, %v3059
  %v3138 = vpack.c.bf16 %v3062, %v3061
  %v3139 = vpack.c.bf16 %v3064, %v3063
  %v3140 = vpack.c.bf16 %v3066, %v3065
  %v3141 = vpack.c.bf16 %v3068, %v3067
  %v3142 = vpack.c.bf16 %v3070, %v3069
  %v3143 = vpack.c.bf16 %v3072, %v3071
  %v3144 = vpack.c.bf16 %v3074, %v3073
  %v3145 = vpack.c.bf16 %v3076, %v3075
  %v3146 = vpack.c.bf16 %v3078, %v3077
  %v3147 = vpack.c.bf16 %v3080, %v3079
  %v3148 = vpack.c.bf16 %v3082, %v3081
  %v3149 = vpack.c.bf16 %v3084, %v3083
  %v3150 = vpack.c.bf16 %v3086, %v3085
  %v3151 = vld [vmem:[%s7] sm:$0xf]
  %v3152 = vld [vmem:[%s7 + $0x4] sm:$0xf]
  %v3153 = vld [vmem:[%s7 + $0x8] sm:$0xf]
  %v3154 = vld [vmem:[%s7 + $0xc] sm:$0xf]
  %v3155 = vld [vmem:[%s7 + $0x10] sm:$0xf]
  %v3156 = vld [vmem:[%s7 + $0x14] sm:$0xf]
  %v3157 = vld [vmem:[%s7 + $0x18] sm:$0xf]
  %v3158 = vld [vmem:[%s7 + $0x1c] sm:$0xf]
  %v3159 = vld [vmem:[%s8] sm:$0x1]
  %v3161 = vlaneseq
  %v3162 = vshrl.u32 %v3161, 7
  %v3163 = vsub.s32 0, %v3162
  %v3164 = vrot.slane %v3159, %v3163
  %v3174 = vunpack.c.l.b16 %v3151
  %v3175 = vunpack.c.l.b16 %v3152
  %v3176 = vunpack.c.l.b16 %v3153
  %v3177 = vunpack.c.l.b16 %v3154
  %v3178 = vunpack.c.l.b16 %v3155
  %v3179 = vunpack.c.l.b16 %v3156
  %v3180 = vunpack.c.l.b16 %v3157
  %v3181 = vunpack.c.l.b16 %v3158
  %v3182 = vpack.c.b16 %v3175, %v3174
  %v3183 = vpack.c.b16 %v3177, %v3176
  %v3184 = vpack.c.b16 %v3179, %v3178
  %v3185 = vpack.c.b16 %v3181, %v3180
  %vm3190 = vcmask 523264
  %v3192 = vsel %vm3190, %v3087, 0
  %v3195 = vsel %vm3190, %v3088, 0
  %v3198 = vsel %vm3190, %v3089, 0
  %v3201 = vsel %vm3190, %v3090, 0
  %v3204 = vsel %vm3190, %v3091, 0
  %v3207 = vsel %vm3190, %v3092, 0
  %v3210 = vsel %vm3190, %v3093, 0
  %v3213 = vsel %vm3190, %v3094, 0
  %v3216 = vsel %vm3190, %v3095, 0
  %v3219 = vsel %vm3190, %v3096, 0
  %v3222 = vsel %vm3190, %v3097, 0
  %v3225 = vsel %vm3190, %v3098, 0
  %v3228 = vsel %vm3190, %v3099, 0
  %v3231 = vsel %vm3190, %v3100, 0
  %v3234 = vsel %vm3190, %v3101, 0
  %v3237 = vsel %vm3190, %v3102, 0
  %v3240 = vsel %vm3190, %v3103, 0
  %v3243 = vsel %vm3190, %v3104, 0
  %v3246 = vsel %vm3190, %v3105, 0
  %v3249 = vsel %vm3190, %v3106, 0
  %v3252 = vsel %vm3190, %v3107, 0
  %v3255 = vsel %vm3190, %v3108, 0
  %v3258 = vsel %vm3190, %v3109, 0
  %v3261 = vsel %vm3190, %v3110, 0
  %v3264 = vsel %vm3190, %v3111, 0
  %v3267 = vsel %vm3190, %v3112, 0
  %v3270 = vsel %vm3190, %v3113, 0
  %v3273 = vsel %vm3190, %v3114, 0
  %v3276 = vsel %vm3190, %v3115, 0
  %v3279 = vsel %vm3190, %v3116, 0
  %v3282 = vsel %vm3190, %v3117, 0
  %v3285 = vsel %vm3190, %v3118, 0
  %v3288 = vsel %vm3190, %v3119, 0
  %v3291 = vsel %vm3190, %v3120, 0
  %v3294 = vsel %vm3190, %v3121, 0
  %v3297 = vsel %vm3190, %v3122, 0
  %v3300 = vsel %vm3190, %v3123, 0
  %v3303 = vsel %vm3190, %v3124, 0
  %v3306 = vsel %vm3190, %v3125, 0
  %v3309 = vsel %vm3190, %v3126, 0
  %v3312 = vsel %vm3190, %v3127, 0
  %v3315 = vsel %vm3190, %v3128, 0
  %v3318 = vsel %vm3190, %v3129, 0
  %v3321 = vsel %vm3190, %v3130, 0
  %v3324 = vsel %vm3190, %v3131, 0
  %v3327 = vsel %vm3190, %v3132, 0
  %v3330 = vsel %vm3190, %v3133, 0
  %v3333 = vsel %vm3190, %v3134, 0
  %v3336 = vsel %vm3190, %v3135, 0
  %v3339 = vsel %vm3190, %v3136, 0
  %v3342 = vsel %vm3190, %v3137, 0
  %v3345 = vsel %vm3190, %v3138, 0
  %v3348 = vsel %vm3190, %v3139, 0
  %v3351 = vsel %vm3190, %v3140, 0
  %v3354 = vsel %vm3190, %v3141, 0
  %v3357 = vsel %vm3190, %v3142, 0
  %v3360 = vsel %vm3190, %v3143, 0
  %v3363 = vsel %vm3190, %v3144, 0
  %v3366 = vsel %vm3190, %v3145, 0
  %v3369 = vsel %vm3190, %v3146, 0
  %v3372 = vsel %vm3190, %v3147, 0
  %v3375 = vsel %vm3190, %v3148, 0
  %v3378 = vsel %vm3190, %v3149, 0
  %v3381 = vsel %vm3190, %v3150, 0
  %3383 = vmatprep.subr.bf16.mxu0 0
  %3384 = vmatpush1.bf16.msra.mxu0 %v3182
  %3385 = vmatprep.subr.bf16.mxu0 0
  %3386 = vmatpush1.bf16.msra.mxu0 %v3183
  %3387 = vmatprep.subr.bf16.mxu0 0
  %3388 = vmatpush1.bf16.msra.mxu0 %v3184
  %3389 = vmatprep.subr.bf16.mxu0 0
  %3390 = vmatpush1.bf16.msra.mxu0 %v3185
  %3391 = vmatprep.subr.bf16.mxu0 0
  %3392 = vmatpush1.bf16.msra.mxu0 0
  %3393 = vmatprep.subr.bf16.mxu0 0
  %3394 = vmatpush1.bf16.msra.mxu0 0
  %3395 = vmatprep.subr.bf16.mxu0 0
  %3396 = vmatpush1.bf16.msra.mxu0 0
  %3397 = vmatprep.subr.bf16.mxu0 0
  %3398 = vmatpush1.bf16.msra.mxu0 0
  %3399 = vmatprep.subr.bf16.mxu0 0
  %3400 = vmatpush1.bf16.msra.mxu0 0
  %3401 = vmatprep.subr.bf16.mxu0 0
  %3402 = vmatpush1.bf16.msra.mxu0 0
  %3403 = vmatprep.subr.bf16.mxu0 0
  %3404 = vmatpush1.bf16.msra.mxu0 0
  %3405 = vmatprep.subr.bf16.mxu0 0
  %3406 = vmatpush1.bf16.msra.mxu0 0
  %3407 = vmatprep.subr.bf16.mxu0 0
  %3408 = vmatpush1.bf16.msra.mxu0 0
  %3409 = vmatprep.subr.bf16.mxu0 0
  %3410 = vmatpush1.bf16.msra.mxu0 0
  %3411 = vmatprep.subr.bf16.mxu0 0
  %3412 = vmatpush1.bf16.msra.mxu0 0
  %3413 = vmatprep.subr.bf16.mxu0 0
  %3414 = vmatpush1.bf16.msra.mxu0 0
  %3415 = vmatprep.mubr.bf16.mxu0 0
  %3416 = vmatmul.mubr.bf16.gmra.mrb[0].mxu0 %v3192
  %v3417 = vpop.f32.mrb[0].mxu0
  %v3418 = vadd.f32 %v3164, %v3417
  %v3419 = vpop.f32.mrb[0].mxu0
  %v3420 = vpop.f32.mrb[0].mxu0
  %v3421 = vadd.f32 %v3164, %v3420
  %v3422 = vpop.f32.mrb[0].mxu0
  %3423 = vmatprep.mubr.bf16.mxu0 0
  %3424 = vmatmul.mubr.bf16.gmra.mrb[0].mxu0 %v3195
  %v3425 = vpop.f32.mrb[0].mxu0
  %v3426 = vadd.f32 %v3164, %v3425
  %v3427 = vpop.f32.mrb[0].mxu0
  %v3428 = vpop.f32.mrb[0].mxu0
  %v3429 = vadd.f32 %v3164, %v3428
  %v3430 = vpop.f32.mrb[0].mxu0
  %3431 = vmatprep.mubr.bf16.mxu0 0
  %3432 = vmatmul.mubr.bf16.gmra.mrb[0].mxu0 %v3198
  %v3433 = vpop.f32.mrb[0].mxu0
  %v3434 = vadd.f32 %v3164, %v3433
  %v3435 = vpop.f32.mrb[0].mxu0
  %v3436 = vpop.f32.mrb[0].mxu0
  %v3437 = vadd.f32 %v3164, %v3436
  %v3438 = vpop.f32.mrb[0].mxu0
  %3439 = vmatprep.mubr.bf16.mxu0 0
  %3440 = vmatmul.mubr.bf16.gmra.mrb[0].mxu0 %v3201
  %v3441 = vpop.f32.mrb[0].mxu0
  %v3442 = vadd.f32 %v3164, %v3441
  %v3443 = vpop.f32.mrb[0].mxu0
  %v3444 = vpop.f32.mrb[0].mxu0
  %v3445 = vadd.f32 %v3164, %v3444
  %v3446 = vpop.f32.mrb[0].mxu0
  %3447 = vmatprep.mubr.bf16.mxu0 0
  %3448 = vmatmul.mubr.bf16.gmra.mrb[0].mxu0 %v3204
  %v3449 = vpop.f32.mrb[0].mxu0
  %v3450 = vadd.f32 %v3164, %v3449
  %v3451 = vpop.f32.mrb[0].mxu0
  %v3452 = vpop.f32.mrb[0].mxu0
  %v3453 = vadd.f32 %v3164, %v3452
  %v3454 = vpop.f32.mrb[0].mxu0
  %3455 = vmatprep.mubr.bf16.mxu0 0
  %3456 = vmatmul.mubr.bf16.gmra.mrb[0].mxu0 %v3207
  %v3457 = vpop.f32.mrb[0].mxu0
  %v3458 = vadd.f32 %v3164, %v3457
  %v3459 = vpop.f32.mrb[0].mxu0
  %v3460 = vpop.f32.mrb[0].mxu0
  %v3461 = vadd.f32 %v3164, %v3460
  %v3462 = vpop.f32.mrb[0].mxu0
  %3463 = vmatprep.mubr.bf16.mxu0 0
  %3464 = vmatmul.mubr.bf16.gmra.mrb[0].mxu0 %v3210
  %v3465 = vpop.f32.mrb[0].mxu0
  %v3466 = vadd.f32 %v3164, %v3465
  %v3467 = vpop.f32.mrb[0].mxu0
  %v3468 = vpop.f32.mrb[0].mxu0
  %v3469 = vadd.f32 %v3164, %v3468
  %v3470 = vpop.f32.mrb[0].mxu0
  %3471 = vmatprep.mubr.bf16.mxu0 0
  %3472 = vmatmul.mubr.bf16.gmra.mrb[0].mxu0 %v3213
  %v3473 = vpop.f32.mrb[0].mxu0
  %v3474 = vadd.f32 %v3164, %v3473
  %v3475 = vpop.f32.mrb[0].mxu0
  %v3476 = vpop.f32.mrb[0].mxu0
  %v3477 = vadd.f32 %v3164, %v3476
  %v3478 = vpop.f32.mrb[0].mxu0
  %3479 = vmatprep.mubr.bf16.mxu0 0
  %3480 = vmatmul.mubr.bf16.gmra.mrb[0].mxu0 %v3216
  %v3481 = vpop.f32.mrb[0].mxu0
  %v3482 = vadd.f32 %v3164, %v3481
  %v3483 = vpop.f32.mrb[0].mxu0
  %v3484 = vpop.f32.mrb[0].mxu0
  %v3485 = vadd.f32 %v3164, %v3484
  %v3486 = vpop.f32.mrb[0].mxu0
  %3487 = vmatprep.mubr.bf16.mxu0 0
  %3488 = vmatmul.mubr.bf16.gmra.mrb[0].mxu0 %v3219
  %v3489 = vpop.f32.mrb[0].mxu0
  %v3490 = vadd.f32 %v3164, %v3489
  %v3491 = vpop.f32.mrb[0].mxu0
  %v3492 = vpop.f32.mrb[0].mxu0
  %v3493 = vadd.f32 %v3164, %v3492
  %v3494 = vpop.f32.mrb[0].mxu0
  %3495 = vmatprep.mubr.bf16.mxu0 0
  %3496 = vmatmul.mubr.bf16.gmra.mrb[0].mxu0 %v3222
  %v3497 = vpop.f32.mrb[0].mxu0
  %v3498 = vadd.f32 %v3164, %v3497
  %v3499 = vpop.f32.mrb[0].mxu0
  %v3500 = vpop.f32.mrb[0].mxu0
  %v3501 = vadd.f32 %v3164, %v3500
  %v3502 = vpop.f32.mrb[0].mxu0
  %3503 = vmatprep.mubr.bf16.mxu0 0
  %3504 = vmatmul.mubr.bf16.gmra.mrb[0].mxu0 %v3225
  %v3505 = vpop.f32.mrb[0].mxu0
  %v3506 = vadd.f32 %v3164, %v3505
  %v3507 = vpop.f32.mrb[0].mxu0
  %v3508 = vpop.f32.mrb[0].mxu0
  %v3509 = vadd.f32 %v3164, %v3508
  %v3510 = vpop.f32.mrb[0].mxu0
  %3511 = vmatprep.mubr.bf16.mxu0 0
  %3512 = vmatmul.mubr.bf16.gmra.mrb[0].mxu0 %v3228
  %v3513 = vpop.f32.mrb[0].mxu0
  %v3514 = vadd.f32 %v3164, %v3513
  %v3515 = vpop.f32.mrb[0].mxu0
  %v3516 = vpop.f32.mrb[0].mxu0
  %v3517 = vadd.f32 %v3164, %v3516
  %v3518 = vpop.f32.mrb[0].mxu0
  %3519 = vmatprep.mubr.bf16.mxu0 0
  %3520 = vmatmul.mubr.bf16.gmra.mrb[0].mxu0 %v3231
  %v3521 = vpop.f32.mrb[0].mxu0
  %v3522 = vadd.f32 %v3164, %v3521
  %v3523 = vpop.f32.mrb[0].mxu0
  %v3524 = vpop.f32.mrb[0].mxu0
  %v3525 = vadd.f32 %v3164, %v3524
  %v3526 = vpop.f32.mrb[0].mxu0
  %3527 = vmatprep.mubr.bf16.mxu0 0
  %3528 = vmatmul.mubr.bf16.gmra.mrb[0].mxu0 %v3234
  %v3529 = vpop.f32.mrb[0].mxu0
  %v3530 = vadd.f32 %v3164, %v3529
  %v3531 = vpop.f32.mrb[0].mxu0
  %v3532 = vpop.f32.mrb[0].mxu0
  %v3533 = vadd.f32 %v3164, %v3532
  %v3534 = vpop.f32.mrb[0].mxu0
  %3535 = vmatprep.mubr.bf16.mxu0 0
  %3536 = vmatmul.mubr.bf16.gmra.mrb[0].mxu0 %v3237
  %v3537 = vpop.f32.mrb[0].mxu0
  %v3538 = vadd.f32 %v3164, %v3537
  %v3539 = vpop.f32.mrb[0].mxu0
  %v3540 = vpop.f32.mrb[0].mxu0
  %v3541 = vadd.f32 %v3164, %v3540
  %v3542 = vpop.f32.mrb[0].mxu0
  %3543 = vmatprep.mubr.bf16.mxu0 0
  %3544 = vmatmul.mubr.bf16.gmra.mrb[0].mxu0 %v3240
  %v3545 = vpop.f32.mrb[0].mxu0
  %v3546 = vadd.f32 %v3164, %v3545
  %v3547 = vpop.f32.mrb[0].mxu0
  %v3548 = vpop.f32.mrb[0].mxu0
  %v3549 = vadd.f32 %v3164, %v3548
  %v3550 = vpop.f32.mrb[0].mxu0
  %3551 = vmatprep.mubr.bf16.mxu0 0
  %3552 = vmatmul.mubr.bf16.gmra.mrb[0].mxu0 %v3243
  %v3553 = vpop.f32.mrb[0].mxu0
  %v3554 = vadd.f32 %v3164, %v3553
  %v3555 = vpop.f32.mrb[0].mxu0
  %v3556 = vpop.f32.mrb[0].mxu0
  %v3557 = vadd.f32 %v3164, %v3556
  %v3558 = vpop.f32.mrb[0].mxu0
  %3559 = vmatprep.mubr.bf16.mxu0 0
  %3560 = vmatmul.mubr.bf16.gmra.mrb[0].mxu0 %v3246
  %v3561 = vpop.f32.mrb[0].mxu0
  %v3562 = vadd.f32 %v3164, %v3561
  %v3563 = vpop.f32.mrb[0].mxu0
  %v3564 = vpop.f32.mrb[0].mxu0
  %v3565 = vadd.f32 %v3164, %v3564
  %v3566 = vpop.f32.mrb[0].mxu0
  %3567 = vmatprep.mubr.bf16.mxu0 0
  %3568 = vmatmul.mubr.bf16.gmra.mrb[0].mxu0 %v3249
  %v3569 = vpop.f32.mrb[0].mxu0
  %v3570 = vadd.f32 %v3164, %v3569
  %v3571 = vpop.f32.mrb[0].mxu0
  %v3572 = vpop.f32.mrb[0].mxu0
  %v3573 = vadd.f32 %v3164, %v3572
  %v3574 = vpop.f32.mrb[0].mxu0
  %3575 = vmatprep.mubr.bf16.mxu0 0
  %3576 = vmatmul.mubr.bf16.gmra.mrb[0].mxu0 %v3252
  %v3577 = vpop.f32.mrb[0].mxu0
  %v3578 = vadd.f32 %v3164, %v3577
  %v3579 = vpop.f32.mrb[0].mxu0
  %v3580 = vpop.f32.mrb[0].mxu0
  %v3581 = vadd.f32 %v3164, %v3580
  %v3582 = vpop.f32.mrb[0].mxu0
  %3583 = vmatprep.mubr.bf16.mxu0 0
  %3584 = vmatmul.mubr.bf16.gmra.mrb[0].mxu0 %v3255
  %v3585 = vpop.f32.mrb[0].mxu0
  %v3586 = vadd.f32 %v3164, %v3585
  %v3587 = vpop.f32.mrb[0].mxu0
  %v3588 = vpop.f32.mrb[0].mxu0
  %v3589 = vadd.f32 %v3164, %v3588
  %v3590 = vpop.f32.mrb[0].mxu0
  %3591 = vmatprep.mubr.bf16.mxu0 0
  %3592 = vmatmul.mubr.bf16.gmra.mrb[0].mxu0 %v3258
  %v3593 = vpop.f32.mrb[0].mxu0
  %v3594 = vadd.f32 %v3164, %v3593
  %v3595 = vpop.f32.mrb[0].mxu0
  %v3596 = vpop.f32.mrb[0].mxu0
  %v3597 = vadd.f32 %v3164, %v3596
  %v3598 = vpop.f32.mrb[0].mxu0
  %3599 = vmatprep.mubr.bf16.mxu0 0
  %3600 = vmatmul.mubr.bf16.gmra.mrb[0].mxu0 %v3261
  %v3601 = vpop.f32.mrb[0].mxu0
  %v3602 = vadd.f32 %v3164, %v3601
  %v3603 = vpop.f32.mrb[0].mxu0
  %v3604 = vpop.f32.mrb[0].mxu0
  %v3605 = vadd.f32 %v3164, %v3604
  %v3606 = vpop.f32.mrb[0].mxu0
  %3607 = vmatprep.mubr.bf16.mxu0 0
  %3608 = vmatmul.mubr.bf16.gmra.mrb[0].mxu0 %v3264
  %v3609 = vpop.f32.mrb[0].mxu0
  %v3610 = vadd.f32 %v3164, %v3609
  %v3611 = vpop.f32.mrb[0].mxu0
  %v3612 = vpop.f32.mrb[0].mxu0
  %v3613 = vadd.f32 %v3164, %v3612
  %v3614 = vpop.f32.mrb[0].mxu0
  %3615 = vmatprep.mubr.bf16.mxu0 0
  %3616 = vmatmul.mubr.bf16.gmra.mrb[0].mxu0 %v3267
  %v3617 = vpop.f32.mrb[0].mxu0
  %v3618 = vadd.f32 %v3164, %v3617
  %v3619 = vpop.f32.mrb[0].mxu0
  %v3620 = vpop.f32.mrb[0].mxu0
  %v3621 = vadd.f32 %v3164, %v3620
  %v3622 = vpop.f32.mrb[0].mxu0
  %3623 = vmatprep.mubr.bf16.mxu0 0
  %3624 = vmatmul.mubr.bf16.gmra.mrb[0].mxu0 %v3270
  %v3625 = vpop.f32.mrb[0].mxu0
  %v3626 = vadd.f32 %v3164, %v3625
  %v3627 = vpop.f32.mrb[0].mxu0
  %v3628 = vpop.f32.mrb[0].mxu0
  %v3629 = vadd.f32 %v3164, %v3628
  %v3630 = vpop.f32.mrb[0].mxu0
  %3631 = vmatprep.mubr.bf16.mxu0 0
  %3632 = vmatmul.mubr.bf16.gmra.mrb[0].mxu0 %v3273
  %v3633 = vpop.f32.mrb[0].mxu0
  %v3634 = vadd.f32 %v3164, %v3633
  %v3635 = vpop.f32.mrb[0].mxu0
  %v3636 = vpop.f32.mrb[0].mxu0
  %v3637 = vadd.f32 %v3164, %v3636
  %v3638 = vpop.f32.mrb[0].mxu0
  %3639 = vmatprep.mubr.bf16.mxu0 0
  %3640 = vmatmul.mubr.bf16.gmra.mrb[0].mxu0 %v3276
  %v3641 = vpop.f32.mrb[0].mxu0
  %v3642 = vadd.f32 %v3164, %v3641
  %v3643 = vpop.f32.mrb[0].mxu0
  %v3644 = vpop.f32.mrb[0].mxu0
  %v3645 = vadd.f32 %v3164, %v3644
  %v3646 = vpop.f32.mrb[0].mxu0
  %3647 = vmatprep.mubr.bf16.mxu0 0
  %3648 = vmatmul.mubr.bf16.gmra.mrb[0].mxu0 %v3279
  %v3649 = vpop.f32.mrb[0].mxu0
  %v3650 = vadd.f32 %v3164, %v3649
  %v3651 = vpop.f32.mrb[0].mxu0
  %v3652 = vpop.f32.mrb[0].mxu0
  %v3653 = vadd.f32 %v3164, %v3652
  %v3654 = vpop.f32.mrb[0].mxu0
  %3655 = vmatprep.mubr.bf16.mxu0 0
  %3656 = vmatmul.mubr.bf16.gmra.mrb[0].mxu0 %v3282
  %v3657 = vpop.f32.mrb[0].mxu0
  %v3658 = vadd.f32 %v3164, %v3657
  %v3659 = vpop.f32.mrb[0].mxu0
  %v3660 = vpop.f32.mrb[0].mxu0
  %v3661 = vadd.f32 %v3164, %v3660
  %v3662 = vpop.f32.mrb[0].mxu0
  %3663 = vmatprep.mubr.bf16.mxu0 0
  %3664 = vmatmul.mubr.bf16.gmra.mrb[0].mxu0 %v3285
  %v3665 = vpop.f32.mrb[0].mxu0
  %v3666 = vadd.f32 %v3164, %v3665
  %v3667 = vpop.f32.mrb[0].mxu0
  %v3668 = vpop.f32.mrb[0].mxu0
  %v3669 = vadd.f32 %v3164, %v3668
  %v3670 = vpop.f32.mrb[0].mxu0
  %3671 = vmatprep.mubr.bf16.mxu0 0
  %3672 = vmatmul.mubr.bf16.gmra.mrb[0].mxu0 %v3288
  %v3673 = vpop.f32.mrb[0].mxu0
  %v3674 = vadd.f32 %v3164, %v3673
  %v3675 = vpop.f32.mrb[0].mxu0
  %v3676 = vpop.f32.mrb[0].mxu0
  %v3677 = vadd.f32 %v3164, %v3676
  %v3678 = vpop.f32.mrb[0].mxu0
  %3679 = vmatprep.mubr.bf16.mxu0 0
  %3680 = vmatmul.mubr.bf16.gmra.mrb[0].mxu0 %v3291
  %v3681 = vpop.f32.mrb[0].mxu0
  %v3682 = vadd.f32 %v3164, %v3681
  %v3683 = vpop.f32.mrb[0].mxu0
  %v3684 = vpop.f32.mrb[0].mxu0
  %v3685 = vadd.f32 %v3164, %v3684
  %v3686 = vpop.f32.mrb[0].mxu0
  %3687 = vmatprep.mubr.bf16.mxu0 0
  %3688 = vmatmul.mubr.bf16.gmra.mrb[0].mxu0 %v3294
  %v3689 = vpop.f32.mrb[0].mxu0
  %v3690 = vadd.f32 %v3164, %v3689
  %v3691 = vpop.f32.mrb[0].mxu0
  %v3692 = vpop.f32.mrb[0].mxu0
  %v3693 = vadd.f32 %v3164, %v3692
  %v3694 = vpop.f32.mrb[0].mxu0
  %3695 = vmatprep.mubr.bf16.mxu0 0
  %3696 = vmatmul.mubr.bf16.gmra.mrb[0].mxu0 %v3297
  %v3697 = vpop.f32.mrb[0].mxu0
  %v3698 = vadd.f32 %v3164, %v3697
  %v3699 = vpop.f32.mrb[0].mxu0
  %v3700 = vpop.f32.mrb[0].mxu0
  %v3701 = vadd.f32 %v3164, %v3700
  %v3702 = vpop.f32.mrb[0].mxu0
  %3703 = vmatprep.mubr.bf16.mxu0 0
  %3704 = vmatmul.mubr.bf16.gmra.mrb[0].mxu0 %v3300
  %v3705 = vpop.f32.mrb[0].mxu0
  %v3706 = vadd.f32 %v3164, %v3705
  %v3707 = vpop.f32.mrb[0].mxu0
  %v3708 = vpop.f32.mrb[0].mxu0
  %v3709 = vadd.f32 %v3164, %v3708
  %v3710 = vpop.f32.mrb[0].mxu0
  %3711 = vmatprep.mubr.bf16.mxu0 0
  %3712 = vmatmul.mubr.bf16.gmra.mrb[0].mxu0 %v3303
  %v3713 = vpop.f32.mrb[0].mxu0
  %v3714 = vadd.f32 %v3164, %v3713
  %v3715 = vpop.f32.mrb[0].mxu0
  %v3716 = vpop.f32.mrb[0].mxu0
  %v3717 = vadd.f32 %v3164, %v3716
  %v3718 = vpop.f32.mrb[0].mxu0
  %3719 = vmatprep.mubr.bf16.mxu0 0
  %3720 = vmatmul.mubr.bf16.gmra.mrb[0].mxu0 %v3306
  %v3721 = vpop.f32.mrb[0].mxu0
  %v3722 = vadd.f32 %v3164, %v3721
  %v3723 = vpop.f32.mrb[0].mxu0
  %v3724 = vpop.f32.mrb[0].mxu0
  %v3725 = vadd.f32 %v3164, %v3724
  %v3726 = vpop.f32.mrb[0].mxu0
  %3727 = vmatprep.mubr.bf16.mxu0 0
  %3728 = vmatmul.mubr.bf16.gmra.mrb[0].mxu0 %v3309
  %v3729 = vpop.f32.mrb[0].mxu0
  %v3730 = vadd.f32 %v3164, %v3729
  %v3731 = vpop.f32.mrb[0].mxu0
  %v3732 = vpop.f32.mrb[0].mxu0
  %v3733 = vadd.f32 %v3164, %v3732
  %v3734 = vpop.f32.mrb[0].mxu0
  %3735 = vmatprep.mubr.bf16.mxu0 0
  %3736 = vmatmul.mubr.bf16.gmra.mrb[0].mxu0 %v3312
  %v3737 = vpop.f32.mrb[0].mxu0
  %v3738 = vadd.f32 %v3164, %v3737
  %v3739 = vpop.f32.mrb[0].mxu0
  %v3740 = vpop.f32.mrb[0].mxu0
  %v3741 = vadd.f32 %v3164, %v3740
  %v3742 = vpop.f32.mrb[0].mxu0
  %3743 = vmatprep.mubr.bf16.mxu0 0
  %3744 = vmatmul.mubr.bf16.gmra.mrb[0].mxu0 %v3315
  %v3745 = vpop.f32.mrb[0].mxu0
  %v3746 = vadd.f32 %v3164, %v3745
  %v3747 = vpop.f32.mrb[0].mxu0
  %v3748 = vpop.f32.mrb[0].mxu0
  %v3749 = vadd.f32 %v3164, %v3748
  %v3750 = vpop.f32.mrb[0].mxu0
  %3751 = vmatprep.mubr.bf16.mxu0 0
  %3752 = vmatmul.mubr.bf16.gmra.mrb[0].mxu0 %v3318
  %v3753 = vpop.f32.mrb[0].mxu0
  %v3754 = vadd.f32 %v3164, %v3753
  %v3755 = vpop.f32.mrb[0].mxu0
  %v3756 = vpop.f32.mrb[0].mxu0
  %v3757 = vadd.f32 %v3164, %v3756
  %v3758 = vpop.f32.mrb[0].mxu0
  %3759 = vmatprep.mubr.bf16.mxu0 0
  %3760 = vmatmul.mubr.bf16.gmra.mrb[0].mxu0 %v3321
  %v3761 = vpop.f32.mrb[0].mxu0
  %v3762 = vadd.f32 %v3164, %v3761
  %v3763 = vpop.f32.mrb[0].mxu0
  %v3764 = vpop.f32.mrb[0].mxu0
  %v3765 = vadd.f32 %v3164, %v3764
  %v3766 = vpop.f32.mrb[0].mxu0
  %3767 = vmatprep.mubr.bf16.mxu0 0
  %3768 = vmatmul.mubr.bf16.gmra.mrb[0].mxu0 %v3324
  %v3769 = vpop.f32.mrb[0].mxu0
  %v3770 = vadd.f32 %v3164, %v3769
  %v3771 = vpop.f32.mrb[0].mxu0
  %v3772 = vpop.f32.mrb[0].mxu0
  %v3773 = vadd.f32 %v3164, %v3772
  %v3774 = vpop.f32.mrb[0].mxu0
  %3775 = vmatprep.mubr.bf16.mxu0 0
  %3776 = vmatmul.mubr.bf16.gmra.mrb[0].mxu0 %v3327
  %v3777 = vpop.f32.mrb[0].mxu0
  %v3778 = vadd.f32 %v3164, %v3777
  %v3779 = vpop.f32.mrb[0].mxu0
  %v3780 = vpop.f32.mrb[0].mxu0
  %v3781 = vadd.f32 %v3164, %v3780
  %v3782 = vpop.f32.mrb[0].mxu0
  %3783 = vmatprep.mubr.bf16.mxu0 0
  %3784 = vmatmul.mubr.bf16.gmra.mrb[0].mxu0 %v3330
  %v3785 = vpop.f32.mrb[0].mxu0
  %v3786 = vadd.f32 %v3164, %v3785
  %v3787 = vpop.f32.mrb[0].mxu0
  %v3788 = vpop.f32.mrb[0].mxu0
  %v3789 = vadd.f32 %v3164, %v3788
  %v3790 = vpop.f32.mrb[0].mxu0
  %3791 = vmatprep.mubr.bf16.mxu0 0
  %3792 = vmatmul.mubr.bf16.gmra.mrb[0].mxu0 %v3333
  %v3793 = vpop.f32.mrb[0].mxu0
  %v3794 = vadd.f32 %v3164, %v3793
  %v3795 = vpop.f32.mrb[0].mxu0
  %v3796 = vpop.f32.mrb[0].mxu0
  %v3797 = vadd.f32 %v3164, %v3796
  %v3798 = vpop.f32.mrb[0].mxu0
  %3799 = vmatprep.mubr.bf16.mxu0 0
  %3800 = vmatmul.mubr.bf16.gmra.mrb[0].mxu0 %v3336
  %v3801 = vpop.f32.mrb[0].mxu0
  %v3802 = vadd.f32 %v3164, %v3801
  %v3803 = vpop.f32.mrb[0].mxu0
  %v3804 = vpop.f32.mrb[0].mxu0
  %v3805 = vadd.f32 %v3164, %v3804
  %v3806 = vpop.f32.mrb[0].mxu0
  %3807 = vmatprep.mubr.bf16.mxu0 0
  %3808 = vmatmul.mubr.bf16.gmra.mrb[0].mxu0 %v3339
  %v3809 = vpop.f32.mrb[0].mxu0
  %v3810 = vadd.f32 %v3164, %v3809
  %v3811 = vpop.f32.mrb[0].mxu0
  %v3812 = vpop.f32.mrb[0].mxu0
  %v3813 = vadd.f32 %v3164, %v3812
  %v3814 = vpop.f32.mrb[0].mxu0
  %3815 = vmatprep.mubr.bf16.mxu0 0
  %3816 = vmatmul.mubr.bf16.gmra.mrb[0].mxu0 %v3342
  %v3817 = vpop.f32.mrb[0].mxu0
  %v3818 = vadd.f32 %v3164, %v3817
  %v3819 = vpop.f32.mrb[0].mxu0
  %v3820 = vpop.f32.mrb[0].mxu0
  %v3821 = vadd.f32 %v3164, %v3820
  %v3822 = vpop.f32.mrb[0].mxu0
  %3823 = vmatprep.mubr.bf16.mxu0 0
  %3824 = vmatmul.mubr.bf16.gmra.mrb[0].mxu0 %v3345
  %v3825 = vpop.f32.mrb[0].mxu0
  %v3826 = vadd.f32 %v3164, %v3825
  %v3827 = vpop.f32.mrb[0].mxu0
  %v3828 = vpop.f32.mrb[0].mxu0
  %v3829 = vadd.f32 %v3164, %v3828
  %v3830 = vpop.f32.mrb[0].mxu0
  %3831 = vmatprep.mubr.bf16.mxu0 0
  %3832 = vmatmul.mubr.bf16.gmra.mrb[0].mxu0 %v3348
  %v3833 = vpop.f32.mrb[0].mxu0
  %v3834 = vadd.f32 %v3164, %v3833
  %v3835 = vpop.f32.mrb[0].mxu0
  %v3836 = vpop.f32.mrb[0].mxu0
  %v3837 = vadd.f32 %v3164, %v3836
  %v3838 = vpop.f32.mrb[0].mxu0
  %3839 = vmatprep.mubr.bf16.mxu0 0
  %3840 = vmatmul.mubr.bf16.gmra.mrb[0].mxu0 %v3351
  %v3841 = vpop.f32.mrb[0].mxu0
  %v3842 = vadd.f32 %v3164, %v3841
  %v3843 = vpop.f32.mrb[0].mxu0
  %v3844 = vpop.f32.mrb[0].mxu0
  %v3845 = vadd.f32 %v3164, %v3844
  %v3846 = vpop.f32.mrb[0].mxu0
  %3847 = vmatprep.mubr.bf16.mxu0 0
  %3848 = vmatmul.mubr.bf16.gmra.mrb[0].mxu0 %v3354
  %v3849 = vpop.f32.mrb[0].mxu0
  %v3850 = vadd.f32 %v3164, %v3849
  %v3851 = vpop.f32.mrb[0].mxu0
  %v3852 = vpop.f32.mrb[0].mxu0
  %v3853 = vadd.f32 %v3164, %v3852
  %v3854 = vpop.f32.mrb[0].mxu0
  %3855 = vmatprep.mubr.bf16.mxu0 0
  %3856 = vmatmul.mubr.bf16.gmra.mrb[0].mxu0 %v3357
  %v3857 = vpop.f32.mrb[0].mxu0
  %v3858 = vadd.f32 %v3164, %v3857
  %v3859 = vpop.f32.mrb[0].mxu0
  %v3860 = vpop.f32.mrb[0].mxu0
  %v3861 = vadd.f32 %v3164, %v3860
  %v3862 = vpop.f32.mrb[0].mxu0
  %3863 = vmatprep.mubr.bf16.mxu0 0
  %3864 = vmatmul.mubr.bf16.gmra.mrb[0].mxu0 %v3360
  %v3865 = vpop.f32.mrb[0].mxu0
  %v3866 = vadd.f32 %v3164, %v3865
  %v3867 = vpop.f32.mrb[0].mxu0
  %v3868 = vpop.f32.mrb[0].mxu0
  %v3869 = vadd.f32 %v3164, %v3868
  %v3870 = vpop.f32.mrb[0].mxu0
  %3871 = vmatprep.mubr.bf16.mxu0 0
  %3872 = vmatmul.mubr.bf16.gmra.mrb[0].mxu0 %v3363
  %v3873 = vpop.f32.mrb[0].mxu0
  %v3874 = vadd.f32 %v3164, %v3873
  %v3875 = vpop.f32.mrb[0].mxu0
  %v3876 = vpop.f32.mrb[0].mxu0
  %v3877 = vadd.f32 %v3164, %v3876
  %v3878 = vpop.f32.mrb[0].mxu0
  %3879 = vmatprep.mubr.bf16.mxu0 0
  %3880 = vmatmul.mubr.bf16.gmra.mrb[0].mxu0 %v3366
  %v3881 = vpop.f32.mrb[0].mxu0
  %v3882 = vadd.f32 %v3164, %v3881
  %v3883 = vpop.f32.mrb[0].mxu0
  %v3884 = vpop.f32.mrb[0].mxu0
  %v3885 = vadd.f32 %v3164, %v3884
  %v3886 = vpop.f32.mrb[0].mxu0
  %3887 = vmatprep.mubr.bf16.mxu0 0
  %3888 = vmatmul.mubr.bf16.gmra.mrb[0].mxu0 %v3369
  %v3889 = vpop.f32.mrb[0].mxu0
  %v3890 = vadd.f32 %v3164, %v3889
  %v3891 = vpop.f32.mrb[0].mxu0
  %v3892 = vpop.f32.mrb[0].mxu0
  %v3893 = vadd.f32 %v3164, %v3892
  %v3894 = vpop.f32.mrb[0].mxu0
  %3895 = vmatprep.mubr.bf16.mxu0 0
  %3896 = vmatmul.mubr.bf16.gmra.mrb[0].mxu0 %v3372
  %v3897 = vpop.f32.mrb[0].mxu0
  %v3898 = vadd.f32 %v3164, %v3897
  %v3899 = vpop.f32.mrb[0].mxu0
  %v3900 = vpop.f32.mrb[0].mxu0
  %v3901 = vadd.f32 %v3164, %v3900
  %v3902 = vpop.f32.mrb[0].mxu0
  %3903 = vmatprep.mubr.bf16.mxu0 0
  %3904 = vmatmul.mubr.bf16.gmra.mrb[0].mxu0 %v3375
  %v3905 = vpop.f32.mrb[0].mxu0
  %v3906 = vadd.f32 %v3164, %v3905
  %v3907 = vpop.f32.mrb[0].mxu0
  %v3908 = vpop.f32.mrb[0].mxu0
  %v3909 = vadd.f32 %v3164, %v3908
  %v3910 = vpop.f32.mrb[0].mxu0
  %3911 = vmatprep.mubr.bf16.mxu0 0
  %3912 = vmatmul.mubr.bf16.gmra.mrb[0].mxu0 %v3378
  %v3913 = vpop.f32.mrb[0].mxu0
  %v3914 = vadd.f32 %v3164, %v3913
  %v3915 = vpop.f32.mrb[0].mxu0
  %v3916 = vpop.f32.mrb[0].mxu0
  %v3917 = vadd.f32 %v3164, %v3916
  %v3918 = vpop.f32.mrb[0].mxu0
  %3919 = vmatprep.mubr.bf16.mxu0 0
  %3920 = vmatmul.mubr.bf16.gmra.mrb[0].mxu0 %v3381
  %v3921 = vpop.f32.mrb[0].mxu0
  %v3922 = vadd.f32 %v3164, %v3921
  %v3923 = vpop.f32.mrb[0].mxu0
  %v3924 = vpop.f32.mrb[0].mxu0
  %v3925 = vadd.f32 %v3164, %v3924
  %v3926 = vpop.f32.mrb[0].mxu0
  %3927 = vdwg.mxu0
  %vm3928 = vcmp.gt.f32.partialorder %v3418, 0.0
  %vm3929 = vcmp.gt.f32.partialorder %v3421, 0.0
  %vm3930 = vcmp.gt.f32.partialorder %v3426, 0.0
  %vm3931 = vcmp.gt.f32.partialorder %v3429, 0.0
  %vm3932 = vcmp.gt.f32.partialorder %v3434, 0.0
  %vm3933 = vcmp.gt.f32.partialorder %v3437, 0.0
  %vm3934 = vcmp.gt.f32.partialorder %v3442, 0.0
  %vm3935 = vcmp.gt.f32.partialorder %v3445, 0.0
  %vm3936 = vcmp.gt.f32.partialorder %v3450, 0.0
  %vm3937 = vcmp.gt.f32.partialorder %v3453, 0.0
  %vm3938 = vcmp.gt.f32.partialorder %v3458, 0.0
  %vm3939 = vcmp.gt.f32.partialorder %v3461, 0.0
  %vm3940 = vcmp.gt.f32.partialorder %v3466, 0.0
  %vm3941 = vcmp.gt.f32.partialorder %v3469, 0.0
  %vm3942 = vcmp.gt.f32.partialorder %v3474, 0.0
  %vm3943 = vcmp.gt.f32.partialorder %v3477, 0.0
  %vm3944 = vcmp.gt.f32.partialorder %v3482, 0.0
  %vm3945 = vcmp.gt.f32.partialorder %v3485, 0.0
  %vm3946 = vcmp.gt.f32.partialorder %v3490, 0.0
  %vm3947 = vcmp.gt.f32.partialorder %v3493, 0.0
  %vm3948 = vcmp.gt.f32.partialorder %v3498, 0.0
  %vm3949 = vcmp.gt.f32.partialorder %v3501, 0.0
  %vm3950 = vcmp.gt.f32.partialorder %v3506, 0.0
  %vm3951 = vcmp.gt.f32.partialorder %v3509, 0.0
  %vm3952 = vcmp.gt.f32.partialorder %v3514, 0.0
  %vm3953 = vcmp.gt.f32.partialorder %v3517, 0.0
  %vm3954 = vcmp.gt.f32.partialorder %v3522, 0.0
  %vm3955 = vcmp.gt.f32.partialorder %v3525, 0.0
  %vm3956 = vcmp.gt.f32.partialorder %v3530, 0.0
  %vm3957 = vcmp.gt.f32.partialorder %v3533, 0.0
  %vm3958 = vcmp.gt.f32.partialorder %v3538, 0.0
  %vm3959 = vcmp.gt.f32.partialorder %v3541, 0.0
  %vm3960 = vcmp.gt.f32.partialorder %v3546, 0.0
  %vm3961 = vcmp.gt.f32.partialorder %v3549, 0.0
  %vm3962 = vcmp.gt.f32.partialorder %v3554, 0.0
  %vm3963 = vcmp.gt.f32.partialorder %v3557, 0.0
  %vm3964 = vcmp.gt.f32.partialorder %v3562, 0.0
  %vm3965 = vcmp.gt.f32.partialorder %v3565, 0.0
  %vm3966 = vcmp.gt.f32.partialorder %v3570, 0.0
  %vm3967 = vcmp.gt.f32.partialorder %v3573, 0.0
  %vm3968 = vcmp.gt.f32.partialorder %v3578, 0.0
  %vm3969 = vcmp.gt.f32.partialorder %v3581, 0.0
  %vm3970 = vcmp.gt.f32.partialorder %v3586, 0.0
  %vm3971 = vcmp.gt.f32.partialorder %v3589, 0.0
  %vm3972 = vcmp.gt.f32.partialorder %v3594, 0.0
  %vm3973 = vcmp.gt.f32.partialorder %v3597, 0.0
  %vm3974 = vcmp.gt.f32.partialorder %v3602, 0.0
  %vm3975 = vcmp.gt.f32.partialorder %v3605, 0.0
  %vm3976 = vcmp.gt.f32.partialorder %v3610, 0.0
  %vm3977 = vcmp.gt.f32.partialorder %v3613, 0.0
  %vm3978 = vcmp.gt.f32.partialorder %v3618, 0.0
  %vm3979 = vcmp.gt.f32.partialorder %v3621, 0.0
  %vm3980 = vcmp.gt.f32.partialorder %v3626, 0.0
  %vm3981 = vcmp.gt.f32.partialorder %v3629, 0.0
  %vm3982 = vcmp.gt.f32.partialorder %v3634, 0.0
  %vm3983 = vcmp.gt.f32.partialorder %v3637, 0.0
  %vm3984 = vcmp.gt.f32.partialorder %v3642, 0.0
  %vm3985 = vcmp.gt.f32.partialorder %v3645, 0.0
  %vm3986 = vcmp.gt.f32.partialorder %v3650, 0.0
  %vm3987 = vcmp.gt.f32.partialorder %v3653, 0.0
  %vm3988 = vcmp.gt.f32.partialorder %v3658, 0.0
  %vm3989 = vcmp.gt.f32.partialorder %v3661, 0.0
  %vm3990 = vcmp.gt.f32.partialorder %v3666, 0.0
  %vm3991 = vcmp.gt.f32.partialorder %v3669, 0.0
  %vm3992 = vcmp.gt.f32.partialorder %v3674, 0.0
  %vm3993 = vcmp.gt.f32.partialorder %v3677, 0.0
  %vm3994 = vcmp.gt.f32.partialorder %v3682, 0.0
  %vm3995 = vcmp.gt.f32.partialorder %v3685, 0.0
  %vm3996 = vcmp.gt.f32.partialorder %v3690, 0.0
  %vm3997 = vcmp.gt.f32.partialorder %v3693, 0.0
  %vm3998 = vcmp.gt.f32.partialorder %v3698, 0.0
  %vm3999 = vcmp.gt.f32.partialorder %v3701, 0.0
  %vm4000 = vcmp.gt.f32.partialorder %v3706, 0.0
  %vm4001 = vcmp.gt.f32.partialorder %v3709, 0.0
  %vm4002 = vcmp.gt.f32.partialorder %v3714, 0.0
  %vm4003 = vcmp.gt.f32.partialorder %v3717, 0.0
  %vm4004 = vcmp.gt.f32.partialorder %v3722, 0.0
  %vm4005 = vcmp.gt.f32.partialorder %v3725, 0.0
  %vm4006 = vcmp.gt.f32.partialorder %v3730, 0.0
  %vm4007 = vcmp.gt.f32.partialorder %v3733, 0.0
  %vm4008 = vcmp.gt.f32.partialorder %v3738, 0.0
  %vm4009 = vcmp.gt.f32.partialorder %v3741, 0.0
  %vm4010 = vcmp.gt.f32.partialorder %v3746, 0.0
  %vm4011 = vcmp.gt.f32.partialorder %v3749, 0.0
  %vm4012 = vcmp.gt.f32.partialorder %v3754, 0.0
  %vm4013 = vcmp.gt.f32.partialorder %v3757, 0.0
  %vm4014 = vcmp.gt.f32.partialorder %v3762, 0.0
  %vm4015 = vcmp.gt.f32.partialorder %v3765, 0.0
  %vm4016 = vcmp.gt.f32.partialorder %v3770, 0.0
  %vm4017 = vcmp.gt.f32.partialorder %v3773, 0.0
  %vm4018 = vcmp.gt.f32.partialorder %v3778, 0.0
  %vm4019 = vcmp.gt.f32.partialorder %v3781, 0.0
  %vm4020 = vcmp.gt.f32.partialorder %v3786, 0.0
  %vm4021 = vcmp.gt.f32.partialorder %v3789, 0.0
  %vm4022 = vcmp.gt.f32.partialorder %v3794, 0.0
  %vm4023 = vcmp.gt.f32.partialorder %v3797, 0.0
  %vm4024 = vcmp.gt.f32.partialorder %v3802, 0.0
  %vm4025 = vcmp.gt.f32.partialorder %v3805, 0.0
  %vm4026 = vcmp.gt.f32.partialorder %v3810, 0.0
  %vm4027 = vcmp.gt.f32.partialorder %v3813, 0.0
  %vm4028 = vcmp.gt.f32.partialorder %v3818, 0.0
  %vm4029 = vcmp.gt.f32.partialorder %v3821, 0.0
  %vm4030 = vcmp.gt.f32.partialorder %v3826, 0.0
  %vm4031 = vcmp.gt.f32.partialorder %v3829, 0.0
  %vm4032 = vcmp.gt.f32.partialorder %v3834, 0.0
  %vm4033 = vcmp.gt.f32.partialorder %v3837, 0.0
  %vm4034 = vcmp.gt.f32.partialorder %v3842, 0.0
  %vm4035 = vcmp.gt.f32.partialorder %v3845, 0.0
  %vm4036 = vcmp.gt.f32.partialorder %v3850, 0.0
  %vm4037 = vcmp.gt.f32.partialorder %v3853, 0.0
  %vm4038 = vcmp.gt.f32.partialorder %v3858, 0.0
  %vm4039 = vcmp.gt.f32.partialorder %v3861, 0.0
  %vm4040 = vcmp.gt.f32.partialorder %v3866, 0.0
  %vm4041 = vcmp.gt.f32.partialorder %v3869, 0.0
  %vm4042 = vcmp.gt.f32.partialorder %v3874, 0.0
  %vm4043 = vcmp.gt.f32.partialorder %v3877, 0.0
  %vm4044 = vcmp.gt.f32.partialorder %v3882, 0.0
  %vm4045 = vcmp.gt.f32.partialorder %v3885, 0.0
  %vm4046 = vcmp.gt.f32.partialorder %v3890, 0.0
  %vm4047 = vcmp.gt.f32.partialorder %v3893, 0.0
  %vm4048 = vcmp.gt.f32.partialorder %v3898, 0.0
  %vm4049 = vcmp.gt.f32.partialorder %v3901, 0.0
  %vm4050 = vcmp.gt.f32.partialorder %v3906, 0.0
  %vm4051 = vcmp.gt.f32.partialorder %v3909, 0.0
  %vm4052 = vcmp.gt.f32.partialorder %v3914, 0.0
  %vm4053 = vcmp.gt.f32.partialorder %v3917, 0.0
  %vm4054 = vcmp.gt.f32.partialorder %v3922, 0.0
  %vm4055 = vcmp.gt.f32.partialorder %v3925, 0.0
  %v4056 = vmul.f32 %v3418, 0.01
  %v4057 = vmul.f32 %v3421, 0.01
  %v4058 = vmul.f32 %v3426, 0.01
  %v4059 = vmul.f32 %v3429, 0.01
  %v4060 = vmul.f32 %v3434, 0.01
  %v4061 = vmul.f32 %v3437, 0.01
  %v4062 = vmul.f32 %v3442, 0.01
  %v4063 = vmul.f32 %v3445, 0.01
  %v4064 = vmul.f32 %v3450, 0.01
  %v4065 = vmul.f32 %v3453, 0.01
  %v4066 = vmul.f32 %v3458, 0.01
  %v4067 = vmul.f32 %v3461, 0.01
  %v4068 = vmul.f32 %v3466, 0.01
  %v4069 = vmul.f32 %v3469, 0.01
  %v4070 = vmul.f32 %v3474, 0.01
  %v4071 = vmul.f32 %v3477, 0.01
  %v4072 = vmul.f32 %v3482, 0.01
  %v4073 = vmul.f32 %v3485, 0.01
  %v4074 = vmul.f32 %v3490, 0.01
  %v4075 = vmul.f32 %v3493, 0.01
  %v4076 = vmul.f32 %v3498, 0.01
  %v4077 = vmul.f32 %v3501, 0.01
  %v4078 = vmul.f32 %v3506, 0.01
  %v4079 = vmul.f32 %v3509, 0.01
  %v4080 = vmul.f32 %v3514, 0.01
  %v4081 = vmul.f32 %v3517, 0.01
  %v4082 = vmul.f32 %v3522, 0.01
  %v4083 = vmul.f32 %v3525, 0.01
  %v4084 = vmul.f32 %v3530, 0.01
  %v4085 = vmul.f32 %v3533, 0.01
  %v4086 = vmul.f32 %v3538, 0.01
  %v4087 = vmul.f32 %v3541, 0.01
  %v4088 = vmul.f32 %v3546, 0.01
  %v4089 = vmul.f32 %v3549, 0.01
  %v4090 = vmul.f32 %v3554, 0.01
  %v4091 = vmul.f32 %v3557, 0.01
  %v4092 = vmul.f32 %v3562, 0.01
  %v4093 = vmul.f32 %v3565, 0.01
  %v4094 = vmul.f32 %v3570, 0.01
  %v4095 = vmul.f32 %v3573, 0.01
  %v4096 = vmul.f32 %v3578, 0.01
  %v4097 = vmul.f32 %v3581, 0.01
  %v4098 = vmul.f32 %v3586, 0.01
  %v4099 = vmul.f32 %v3589, 0.01
  %v4100 = vmul.f32 %v3594, 0.01
  %v4101 = vmul.f32 %v3597, 0.01
  %v4102 = vmul.f32 %v3602, 0.01
  %v4103 = vmul.f32 %v3605, 0.01
  %v4104 = vmul.f32 %v3610, 0.01
  %v4105 = vmul.f32 %v3613, 0.01
  %v4106 = vmul.f32 %v3618, 0.01
  %v4107 = vmul.f32 %v3621, 0.01
  %v4108 = vmul.f32 %v3626, 0.01
  %v4109 = vmul.f32 %v3629, 0.01
  %v4110 = vmul.f32 %v3634, 0.01
  %v4111 = vmul.f32 %v3637, 0.01
  %v4112 = vmul.f32 %v3642, 0.01
  %v4113 = vmul.f32 %v3645, 0.01
  %v4114 = vmul.f32 %v3650, 0.01
  %v4115 = vmul.f32 %v3653, 0.01
  %v4116 = vmul.f32 %v3658, 0.01
  %v4117 = vmul.f32 %v3661, 0.01
  %v4118 = vmul.f32 %v3666, 0.01
  %v4119 = vmul.f32 %v3669, 0.01
  %v4120 = vmul.f32 %v3674, 0.01
  %v4121 = vmul.f32 %v3677, 0.01
  %v4122 = vmul.f32 %v3682, 0.01
  %v4123 = vmul.f32 %v3685, 0.01
  %v4124 = vmul.f32 %v3690, 0.01
  %v4125 = vmul.f32 %v3693, 0.01
  %v4126 = vmul.f32 %v3698, 0.01
  %v4127 = vmul.f32 %v3701, 0.01
  %v4128 = vmul.f32 %v3706, 0.01
  %v4129 = vmul.f32 %v3709, 0.01
  %v4130 = vmul.f32 %v3714, 0.01
  %v4131 = vmul.f32 %v3717, 0.01
  %v4132 = vmul.f32 %v3722, 0.01
  %v4133 = vmul.f32 %v3725, 0.01
  %v4134 = vmul.f32 %v3730, 0.01
  %v4135 = vmul.f32 %v3733, 0.01
  %v4136 = vmul.f32 %v3738, 0.01
  %v4137 = vmul.f32 %v3741, 0.01
  %v4138 = vmul.f32 %v3746, 0.01
  %v4139 = vmul.f32 %v3749, 0.01
  %v4140 = vmul.f32 %v3754, 0.01
  %v4141 = vmul.f32 %v3757, 0.01
  %v4142 = vmul.f32 %v3762, 0.01
  %v4143 = vmul.f32 %v3765, 0.01
  %v4144 = vmul.f32 %v3770, 0.01
  %v4145 = vmul.f32 %v3773, 0.01
  %v4146 = vmul.f32 %v3778, 0.01
  %v4147 = vmul.f32 %v3781, 0.01
  %v4148 = vmul.f32 %v3786, 0.01
  %v4149 = vmul.f32 %v3789, 0.01
  %v4150 = vmul.f32 %v3794, 0.01
  %v4151 = vmul.f32 %v3797, 0.01
  %v4152 = vmul.f32 %v3802, 0.01
  %v4153 = vmul.f32 %v3805, 0.01
  %v4154 = vmul.f32 %v3810, 0.01
  %v4155 = vmul.f32 %v3813, 0.01
  %v4156 = vmul.f32 %v3818, 0.01
  %v4157 = vmul.f32 %v3821, 0.01
  %v4158 = vmul.f32 %v3826, 0.01
  %v4159 = vmul.f32 %v3829, 0.01
  %v4160 = vmul.f32 %v3834, 0.01
  %v4161 = vmul.f32 %v3837, 0.01
  %v4162 = vmul.f32 %v3842, 0.01
  %v4163 = vmul.f32 %v3845, 0.01
  %v4164 = vmul.f32 %v3850, 0.01
  %v4165 = vmul.f32 %v3853, 0.01
  %v4166 = vmul.f32 %v3858, 0.01
  %v4167 = vmul.f32 %v3861, 0.01
  %v4168 = vmul.f32 %v3866, 0.01
  %v4169 = vmul.f32 %v3869, 0.01
  %v4170 = vmul.f32 %v3874, 0.01
  %v4171 = vmul.f32 %v3877, 0.01
  %v4172 = vmul.f32 %v3882, 0.01
  %v4173 = vmul.f32 %v3885, 0.01
  %v4174 = vmul.f32 %v3890, 0.01
  %v4175 = vmul.f32 %v3893, 0.01
  %v4176 = vmul.f32 %v3898, 0.01
  %v4177 = vmul.f32 %v3901, 0.01
  %v4178 = vmul.f32 %v3906, 0.01
  %v4179 = vmul.f32 %v3909, 0.01
  %v4180 = vmul.f32 %v3914, 0.01
  %v4181 = vmul.f32 %v3917, 0.01
  %v4182 = vmul.f32 %v3922, 0.01
  %v4183 = vmul.f32 %v3925, 0.01
  %v4184 = vsel %vm3928, %v3418, %v4056
  %v4185 = vsel %vm3929, %v3421, %v4057
  %v4186 = vsel %vm3930, %v3426, %v4058
  %v4187 = vsel %vm3931, %v3429, %v4059
  %v4188 = vsel %vm3932, %v3434, %v4060
  %v4189 = vsel %vm3933, %v3437, %v4061
  %v4190 = vsel %vm3934, %v3442, %v4062
  %v4191 = vsel %vm3935, %v3445, %v4063
  %v4192 = vsel %vm3936, %v3450, %v4064
  %v4193 = vsel %vm3937, %v3453, %v4065
  %v4194 = vsel %vm3938, %v3458, %v4066
  %v4195 = vsel %vm3939, %v3461, %v4067
  %v4196 = vsel %vm3940, %v3466, %v4068
  %v4197 = vsel %vm3941, %v3469, %v4069
  %v4198 = vsel %vm3942, %v3474, %v4070
  %v4199 = vsel %vm3943, %v3477, %v4071
  %v4200 = vsel %vm3944, %v3482, %v4072
  %v4201 = vsel %vm3945, %v3485, %v4073
  %v4202 = vsel %vm3946, %v3490, %v4074
  %v4203 = vsel %vm3947, %v3493, %v4075
  %v4204 = vsel %vm3948, %v3498, %v4076
  %v4205 = vsel %vm3949, %v3501, %v4077
  %v4206 = vsel %vm3950, %v3506, %v4078
  %v4207 = vsel %vm3951, %v3509, %v4079
  %v4208 = vsel %vm3952, %v3514, %v4080
  %v4209 = vsel %vm3953, %v3517, %v4081
  %v4210 = vsel %vm3954, %v3522, %v4082
  %v4211 = vsel %vm3955, %v3525, %v4083
  %v4212 = vsel %vm3956, %v3530, %v4084
  %v4213 = vsel %vm3957, %v3533, %v4085
  %v4214 = vsel %vm3958, %v3538, %v4086
  %v4215 = vsel %vm3959, %v3541, %v4087
  %v4216 = vsel %vm3960, %v3546, %v4088
  %v4217 = vsel %vm3961, %v3549, %v4089
  %v4218 = vsel %vm3962, %v3554, %v4090
  %v4219 = vsel %vm3963, %v3557, %v4091
  %v4220 = vsel %vm3964, %v3562, %v4092
  %v4221 = vsel %vm3965, %v3565, %v4093
  %v4222 = vsel %vm3966, %v3570, %v4094
  %v4223 = vsel %vm3967, %v3573, %v4095
  %v4224 = vsel %vm3968, %v3578, %v4096
  %v4225 = vsel %vm3969, %v3581, %v4097
  %v4226 = vsel %vm3970, %v3586, %v4098
  %v4227 = vsel %vm3971, %v3589, %v4099
  %v4228 = vsel %vm3972, %v3594, %v4100
  %v4229 = vsel %vm3973, %v3597, %v4101
  %v4230 = vsel %vm3974, %v3602, %v4102
  %v4231 = vsel %vm3975, %v3605, %v4103
  %v4232 = vsel %vm3976, %v3610, %v4104
  %v4233 = vsel %vm3977, %v3613, %v4105
  %v4234 = vsel %vm3978, %v3618, %v4106
  %v4235 = vsel %vm3979, %v3621, %v4107
  %v4236 = vsel %vm3980, %v3626, %v4108
  %v4237 = vsel %vm3981, %v3629, %v4109
  %v4238 = vsel %vm3982, %v3634, %v4110
  %v4239 = vsel %vm3983, %v3637, %v4111
  %v4240 = vsel %vm3984, %v3642, %v4112
  %v4241 = vsel %vm3985, %v3645, %v4113
  %v4242 = vsel %vm3986, %v3650, %v4114
  %v4243 = vsel %vm3987, %v3653, %v4115
  %v4244 = vsel %vm3988, %v3658, %v4116
  %v4245 = vsel %vm3989, %v3661, %v4117
  %v4246 = vsel %vm3990, %v3666, %v4118
  %v4247 = vsel %vm3991, %v3669, %v4119
  %v4248 = vsel %vm3992, %v3674, %v4120
  %v4249 = vsel %vm3993, %v3677, %v4121
  %v4250 = vsel %vm3994, %v3682, %v4122
  %v4251 = vsel %vm3995, %v3685, %v4123
  %v4252 = vsel %vm3996, %v3690, %v4124
  %v4253 = vsel %vm3997, %v3693, %v4125
  %v4254 = vsel %vm3998, %v3698, %v4126
  %v4255 = vsel %vm3999, %v3701, %v4127
  %v4256 = vsel %vm4000, %v3706, %v4128
  %v4257 = vsel %vm4001, %v3709, %v4129
  %v4258 = vsel %vm4002, %v3714, %v4130
  %v4259 = vsel %vm4003, %v3717, %v4131
  %v4260 = vsel %vm4004, %v3722, %v4132
  %v4261 = vsel %vm4005, %v3725, %v4133
  %v4262 = vsel %vm4006, %v3730, %v4134
  %v4263 = vsel %vm4007, %v3733, %v4135
  %v4264 = vsel %vm4008, %v3738, %v4136
  %v4265 = vsel %vm4009, %v3741, %v4137
  %v4266 = vsel %vm4010, %v3746, %v4138
  %v4267 = vsel %vm4011, %v3749, %v4139
  %v4268 = vsel %vm4012, %v3754, %v4140
  %v4269 = vsel %vm4013, %v3757, %v4141
  %v4270 = vsel %vm4014, %v3762, %v4142
  %v4271 = vsel %vm4015, %v3765, %v4143
  %v4272 = vsel %vm4016, %v3770, %v4144
  %v4273 = vsel %vm4017, %v3773, %v4145
  %v4274 = vsel %vm4018, %v3778, %v4146
  %v4275 = vsel %vm4019, %v3781, %v4147
  %v4276 = vsel %vm4020, %v3786, %v4148
  %v4277 = vsel %vm4021, %v3789, %v4149
  %v4278 = vsel %vm4022, %v3794, %v4150
  %v4279 = vsel %vm4023, %v3797, %v4151
  %v4280 = vsel %vm4024, %v3802, %v4152
  %v4281 = vsel %vm4025, %v3805, %v4153
  %v4282 = vsel %vm4026, %v3810, %v4154
  %v4283 = vsel %vm4027, %v3813, %v4155
  %v4284 = vsel %vm4028, %v3818, %v4156
  %v4285 = vsel %vm4029, %v3821, %v4157
  %v4286 = vsel %vm4030, %v3826, %v4158
  %v4287 = vsel %vm4031, %v3829, %v4159
  %v4288 = vsel %vm4032, %v3834, %v4160
  %v4289 = vsel %vm4033, %v3837, %v4161
  %v4290 = vsel %vm4034, %v3842, %v4162
  %v4291 = vsel %vm4035, %v3845, %v4163
  %v4292 = vsel %vm4036, %v3850, %v4164
  %v4293 = vsel %vm4037, %v3853, %v4165
  %v4294 = vsel %vm4038, %v3858, %v4166
  %v4295 = vsel %vm4039, %v3861, %v4167
  %v4296 = vsel %vm4040, %v3866, %v4168
  %v4297 = vsel %vm4041, %v3869, %v4169
  %v4298 = vsel %vm4042, %v3874, %v4170
  %v4299 = vsel %vm4043, %v3877, %v4171
  %v4300 = vsel %vm4044, %v3882, %v4172
  %v4301 = vsel %vm4045, %v3885, %v4173
  %v4302 = vsel %vm4046, %v3890, %v4174
  %v4303 = vsel %vm4047, %v3893, %v4175
  %v4304 = vsel %vm4048, %v3898, %v4176
  %v4305 = vsel %vm4049, %v3901, %v4177
  %v4306 = vsel %vm4050, %v3906, %v4178
  %v4307 = vsel %vm4051, %v3909, %v4179
  %v4308 = vsel %vm4052, %v3914, %v4180
  %v4309 = vsel %vm4053, %v3917, %v4181
  %v4310 = vsel %vm4054, %v3922, %v4182
  %v4311 = vsel %vm4055, %v3925, %v4183
  %v4312 = vld [vmem:[%s1] sm:$0xff]
  %v4313 = vld [vmem:[%s1 + $0x8] sm:$0xff]
  %v4314 = vld [vmem:[%s1 + $0x10] sm:$0xff]
  %v4315 = vld [vmem:[%s1 + $0x18] sm:$0xff]
  %v4316 = vld [vmem:[%s1 + $0x20] sm:$0xff]
  %v4317 = vld [vmem:[%s1 + $0x28] sm:$0xff]
  %v4318 = vld [vmem:[%s1 + $0x30] sm:$0xff]
  %v4319 = vld [vmem:[%s1 + $0x38] sm:$0xff]
  %v4320 = vld [vmem:[%s1 + $0x40] sm:$0xff]
  %v4321 = vld [vmem:[%s1 + $0x48] sm:$0xff]
  %v4322 = vld [vmem:[%s1 + $0x50] sm:$0xff]
  %v4323 = vld [vmem:[%s1 + $0x58] sm:$0xff]
  %v4324 = vld [vmem:[%s1 + $0x60] sm:$0xff]
  %v4325 = vld [vmem:[%s1 + $0x68] sm:$0xff]
  %v4326 = vld [vmem:[%s1 + $0x70] sm:$0xff]
  %v4327 = vld [vmem:[%s1 + $0x78] sm:$0xff]
  %v4328 = vld [vmem:[%s1 + $0x80] sm:$0xff]
  %v4329 = vld [vmem:[%s1 + $0x88] sm:$0xff]
  %v4330 = vld [vmem:[%s1 + $0x90] sm:$0xff]
  %v4331 = vld [vmem:[%s1 + $0x98] sm:$0xff]
  %v4332 = vld [vmem:[%s1 + $0xa0] sm:$0xff]
  %v4333 = vld [vmem:[%s1 + $0xa8] sm:$0xff]
  %v4334 = vld [vmem:[%s1 + $0xb0] sm:$0xff]
  %v4335 = vld [vmem:[%s1 + $0xb8] sm:$0xff]
  %v4336 = vld [vmem:[%s1 + $0xc0] sm:$0xff]
  %v4337 = vld [vmem:[%s1 + $0xc8] sm:$0xff]
  %v4338 = vld [vmem:[%s1 + $0xd0] sm:$0xff]
  %v4339 = vld [vmem:[%s1 + $0xd8] sm:$0xff]
  %v4340 = vld [vmem:[%s1 + $0xe0] sm:$0xff]
  %v4341 = vld [vmem:[%s1 + $0xe8] sm:$0xff]
  %v4342 = vld [vmem:[%s1 + $0xf0] sm:$0xff]
  %v4343 = vld [vmem:[%s1 + $0xf8] sm:$0xff]
  %v4344 = vld [vmem:[%s1 + $0x100] sm:$0xff]
  %v4345 = vld [vmem:[%s1 + $0x108] sm:$0xff]
  %v4346 = vld [vmem:[%s1 + $0x110] sm:$0xff]
  %v4347 = vld [vmem:[%s1 + $0x118] sm:$0xff]
  %v4348 = vld [vmem:[%s1 + $0x120] sm:$0xff]
  %v4349 = vld [vmem:[%s1 + $0x128] sm:$0xff]
  %v4350 = vld [vmem:[%s1 + $0x130] sm:$0xff]
  %v4351 = vld [vmem:[%s1 + $0x138] sm:$0xff]
  %v4352 = vld [vmem:[%s1 + $0x140] sm:$0xff]
  %v4353 = vld [vmem:[%s1 + $0x148] sm:$0xff]
  %v4354 = vld [vmem:[%s1 + $0x150] sm:$0xff]
  %v4355 = vld [vmem:[%s1 + $0x158] sm:$0xff]
  %v4356 = vld [vmem:[%s1 + $0x160] sm:$0xff]
  %v4357 = vld [vmem:[%s1 + $0x168] sm:$0xff]
  %v4358 = vld [vmem:[%s1 + $0x170] sm:$0xff]
  %v4359 = vld [vmem:[%s1 + $0x178] sm:$0xff]
  %v4360 = vld [vmem:[%s1 + $0x180] sm:$0xff]
  %v4361 = vld [vmem:[%s1 + $0x188] sm:$0xff]
  %v4362 = vld [vmem:[%s1 + $0x190] sm:$0xff]
  %v4363 = vld [vmem:[%s1 + $0x198] sm:$0xff]
  %v4364 = vld [vmem:[%s1 + $0x1a0] sm:$0xff]
  %v4365 = vld [vmem:[%s1 + $0x1a8] sm:$0xff]
  %v4366 = vld [vmem:[%s1 + $0x1b0] sm:$0xff]
  %v4367 = vld [vmem:[%s1 + $0x1b8] sm:$0xff]
  %v4368 = vld [vmem:[%s1 + $0x1c0] sm:$0xff]
  %v4369 = vld [vmem:[%s1 + $0x1c8] sm:$0xff]
  %v4370 = vld [vmem:[%s1 + $0x1d0] sm:$0xff]
  %v4371 = vld [vmem:[%s1 + $0x1d8] sm:$0xff]
  %v4372 = vld [vmem:[%s1 + $0x1e0] sm:$0xff]
  %v4373 = vld [vmem:[%s1 + $0x1e8] sm:$0xff]
  %v4374 = vld [vmem:[%s1 + $0x1f0] sm:$0xff]
  %v4375 = vld [vmem:[%s1 + $0x1f8] sm:$0xff]
  %v4376 = vld [vmem:[%s1 + $0x200] sm:$0xff]
  %v4377 = vld [vmem:[%s1 + $0x208] sm:$0xff]
  %v4378 = vld [vmem:[%s1 + $0x210] sm:$0xff]
  %v4379 = vld [vmem:[%s1 + $0x218] sm:$0xff]
  %v4380 = vld [vmem:[%s1 + $0x220] sm:$0xff]
  %v4381 = vld [vmem:[%s1 + $0x228] sm:$0xff]
  %v4382 = vld [vmem:[%s1 + $0x230] sm:$0xff]
  %v4383 = vld [vmem:[%s1 + $0x238] sm:$0xff]
  %v4384 = vld [vmem:[%s1 + $0x240] sm:$0xff]
  %v4385 = vld [vmem:[%s1 + $0x248] sm:$0xff]
  %v4386 = vld [vmem:[%s1 + $0x250] sm:$0xff]
  %v4387 = vld [vmem:[%s1 + $0x258] sm:$0xff]
  %v4388 = vld [vmem:[%s1 + $0x260] sm:$0xff]
  %v4389 = vld [vmem:[%s1 + $0x268] sm:$0xff]
  %v4390 = vld [vmem:[%s1 + $0x270] sm:$0xff]
  %v4391 = vld [vmem:[%s1 + $0x278] sm:$0xff]
  %v4392 = vld [vmem:[%s1 + $0x280] sm:$0xff]
  %v4393 = vld [vmem:[%s1 + $0x288] sm:$0xff]
  %v4394 = vld [vmem:[%s1 + $0x290] sm:$0xff]
  %v4395 = vld [vmem:[%s1 + $0x298] sm:$0xff]
  %v4396 = vld [vmem:[%s1 + $0x2a0] sm:$0xff]
  %v4397 = vld [vmem:[%s1 + $0x2a8] sm:$0xff]
  %v4398 = vld [vmem:[%s1 + $0x2b0] sm:$0xff]
  %v4399 = vld [vmem:[%s1 + $0x2b8] sm:$0xff]
  %v4400 = vld [vmem:[%s1 + $0x2c0] sm:$0xff]
  %v4401 = vld [vmem:[%s1 + $0x2c8] sm:$0xff]
  %v4402 = vld [vmem:[%s1 + $0x2d0] sm:$0xff]
  %v4403 = vld [vmem:[%s1 + $0x2d8] sm:$0xff]
  %v4404 = vld [vmem:[%s1 + $0x2e0] sm:$0xff]
  %v4405 = vld [vmem:[%s1 + $0x2e8] sm:$0xff]
  %v4406 = vld [vmem:[%s1 + $0x2f0] sm:$0xff]
  %v4407 = vld [vmem:[%s1 + $0x2f8] sm:$0xff]
  %v4408 = vld [vmem:[%s1 + $0x300] sm:$0xff]
  %v4409 = vld [vmem:[%s1 + $0x308] sm:$0xff]
  %v4410 = vld [vmem:[%s1 + $0x310] sm:$0xff]
  %v4411 = vld [vmem:[%s1 + $0x318] sm:$0xff]
  %v4412 = vld [vmem:[%s1 + $0x320] sm:$0xff]
  %v4413 = vld [vmem:[%s1 + $0x328] sm:$0xff]
  %v4414 = vld [vmem:[%s1 + $0x330] sm:$0xff]
  %v4415 = vld [vmem:[%s1 + $0x338] sm:$0xff]
  %v4416 = vld [vmem:[%s1 + $0x340] sm:$0xff]
  %v4417 = vld [vmem:[%s1 + $0x348] sm:$0xff]
  %v4418 = vld [vmem:[%s1 + $0x350] sm:$0xff]
  %v4419 = vld [vmem:[%s1 + $0x358] sm:$0xff]
  %v4420 = vld [vmem:[%s1 + $0x360] sm:$0xff]
  %v4421 = vld [vmem:[%s1 + $0x368] sm:$0xff]
  %v4422 = vld [vmem:[%s1 + $0x370] sm:$0xff]
  %v4423 = vld [vmem:[%s1 + $0x378] sm:$0xff]
  %v4424 = vld [vmem:[%s1 + $0x380] sm:$0xff]
  %v4425 = vld [vmem:[%s1 + $0x388] sm:$0xff]
  %v4426 = vld [vmem:[%s1 + $0x390] sm:$0xff]
  %v4427 = vld [vmem:[%s1 + $0x398] sm:$0xff]
  %v4428 = vld [vmem:[%s1 + $0x3a0] sm:$0xff]
  %v4429 = vld [vmem:[%s1 + $0x3a8] sm:$0xff]
  %v4430 = vld [vmem:[%s1 + $0x3b0] sm:$0xff]
  %v4431 = vld [vmem:[%s1 + $0x3b8] sm:$0xff]
  %v4432 = vld [vmem:[%s1 + $0x3c0] sm:$0xff]
  %v4433 = vld [vmem:[%s1 + $0x3c8] sm:$0xff]
  %v4434 = vld [vmem:[%s1 + $0x3d0] sm:$0xff]
  %v4435 = vld [vmem:[%s1 + $0x3d8] sm:$0xff]
  %v4436 = vld [vmem:[%s1 + $0x3e0] sm:$0xff]
  %v4437 = vld [vmem:[%s1 + $0x3e8] sm:$0xff]
  %v4438 = vld [vmem:[%s1 + $0x3f0] sm:$0xff]
  %v4439 = vld [vmem:[%s1 + $0x3f8] sm:$0xff]
  %v4440 = vsub.f32 %v4312, %v4184
  %v4441 = vsub.f32 %v4313, %v4185
  %v4442 = vsub.f32 %v4314, %v4186
  %v4443 = vsub.f32 %v4315, %v4187
  %v4444 = vsub.f32 %v4316, %v4188
  %v4445 = vsub.f32 %v4317, %v4189
  %v4446 = vsub.f32 %v4318, %v4190
  %v4447 = vsub.f32 %v4319, %v4191
  %v4448 = vsub.f32 %v4320, %v4192
  %v4449 = vsub.f32 %v4321, %v4193
  %v4450 = vsub.f32 %v4322, %v4194
  %v4451 = vsub.f32 %v4323, %v4195
  %v4452 = vsub.f32 %v4324, %v4196
  %v4453 = vsub.f32 %v4325, %v4197
  %v4454 = vsub.f32 %v4326, %v4198
  %v4455 = vsub.f32 %v4327, %v4199
  %v4456 = vsub.f32 %v4328, %v4200
  %v4457 = vsub.f32 %v4329, %v4201
  %v4458 = vsub.f32 %v4330, %v4202
  %v4459 = vsub.f32 %v4331, %v4203
  %v4460 = vsub.f32 %v4332, %v4204
  %v4461 = vsub.f32 %v4333, %v4205
  %v4462 = vsub.f32 %v4334, %v4206
  %v4463 = vsub.f32 %v4335, %v4207
  %v4464 = vsub.f32 %v4336, %v4208
  %v4465 = vsub.f32 %v4337, %v4209
  %v4466 = vsub.f32 %v4338, %v4210
  %v4467 = vsub.f32 %v4339, %v4211
  %v4468 = vsub.f32 %v4340, %v4212
  %v4469 = vsub.f32 %v4341, %v4213
  %v4470 = vsub.f32 %v4342, %v4214
  %v4471 = vsub.f32 %v4343, %v4215
  %v4472 = vsub.f32 %v4344, %v4216
  %v4473 = vsub.f32 %v4345, %v4217
  %v4474 = vsub.f32 %v4346, %v4218
  %v4475 = vsub.f32 %v4347, %v4219
  %v4476 = vsub.f32 %v4348, %v4220
  %v4477 = vsub.f32 %v4349, %v4221
  %v4478 = vsub.f32 %v4350, %v4222
  %v4479 = vsub.f32 %v4351, %v4223
  %v4480 = vsub.f32 %v4352, %v4224
  %v4481 = vsub.f32 %v4353, %v4225
  %v4482 = vsub.f32 %v4354, %v4226
  %v4483 = vsub.f32 %v4355, %v4227
  %v4484 = vsub.f32 %v4356, %v4228
  %v4485 = vsub.f32 %v4357, %v4229
  %v4486 = vsub.f32 %v4358, %v4230
  %v4487 = vsub.f32 %v4359, %v4231
  %v4488 = vsub.f32 %v4360, %v4232
  %v4489 = vsub.f32 %v4361, %v4233
  %v4490 = vsub.f32 %v4362, %v4234
  %v4491 = vsub.f32 %v4363, %v4235
  %v4492 = vsub.f32 %v4364, %v4236
  %v4493 = vsub.f32 %v4365, %v4237
  %v4494 = vsub.f32 %v4366, %v4238
  %v4495 = vsub.f32 %v4367, %v4239
  %v4496 = vsub.f32 %v4368, %v4240
  %v4497 = vsub.f32 %v4369, %v4241
  %v4498 = vsub.f32 %v4370, %v4242
  %v4499 = vsub.f32 %v4371, %v4243
  %v4500 = vsub.f32 %v4372, %v4244
  %v4501 = vsub.f32 %v4373, %v4245
  %v4502 = vsub.f32 %v4374, %v4246
  %v4503 = vsub.f32 %v4375, %v4247
  %v4504 = vsub.f32 %v4376, %v4248
  %v4505 = vsub.f32 %v4377, %v4249
  %v4506 = vsub.f32 %v4378, %v4250
  %v4507 = vsub.f32 %v4379, %v4251
  %v4508 = vsub.f32 %v4380, %v4252
  %v4509 = vsub.f32 %v4381, %v4253
  %v4510 = vsub.f32 %v4382, %v4254
  %v4511 = vsub.f32 %v4383, %v4255
  %v4512 = vsub.f32 %v4384, %v4256
  %v4513 = vsub.f32 %v4385, %v4257
  %v4514 = vsub.f32 %v4386, %v4258
  %v4515 = vsub.f32 %v4387, %v4259
  %v4516 = vsub.f32 %v4388, %v4260
  %v4517 = vsub.f32 %v4389, %v4261
  %v4518 = vsub.f32 %v4390, %v4262
  %v4519 = vsub.f32 %v4391, %v4263
  %v4520 = vsub.f32 %v4392, %v4264
  %v4521 = vsub.f32 %v4393, %v4265
  %v4522 = vsub.f32 %v4394, %v4266
  %v4523 = vsub.f32 %v4395, %v4267
  %v4524 = vsub.f32 %v4396, %v4268
  %v4525 = vsub.f32 %v4397, %v4269
  %v4526 = vsub.f32 %v4398, %v4270
  %v4527 = vsub.f32 %v4399, %v4271
  %v4528 = vsub.f32 %v4400, %v4272
  %v4529 = vsub.f32 %v4401, %v4273
  %v4530 = vsub.f32 %v4402, %v4274
  %v4531 = vsub.f32 %v4403, %v4275
  %v4532 = vsub.f32 %v4404, %v4276
  %v4533 = vsub.f32 %v4405, %v4277
  %v4534 = vsub.f32 %v4406, %v4278
  %v4535 = vsub.f32 %v4407, %v4279
  %v4536 = vsub.f32 %v4408, %v4280
  %v4537 = vsub.f32 %v4409, %v4281
  %v4538 = vsub.f32 %v4410, %v4282
  %v4539 = vsub.f32 %v4411, %v4283
  %v4540 = vsub.f32 %v4412, %v4284
  %v4541 = vsub.f32 %v4413, %v4285
  %v4542 = vsub.f32 %v4414, %v4286
  %v4543 = vsub.f32 %v4415, %v4287
  %v4544 = vsub.f32 %v4416, %v4288
  %v4545 = vsub.f32 %v4417, %v4289
  %v4546 = vsub.f32 %v4418, %v4290
  %v4547 = vsub.f32 %v4419, %v4291
  %v4548 = vsub.f32 %v4420, %v4292
  %v4549 = vsub.f32 %v4421, %v4293
  %v4550 = vsub.f32 %v4422, %v4294
  %v4551 = vsub.f32 %v4423, %v4295
  %v4552 = vsub.f32 %v4424, %v4296
  %v4553 = vsub.f32 %v4425, %v4297
  %v4554 = vsub.f32 %v4426, %v4298
  %v4555 = vsub.f32 %v4427, %v4299
  %v4556 = vsub.f32 %v4428, %v4300
  %v4557 = vsub.f32 %v4429, %v4301
  %v4558 = vsub.f32 %v4430, %v4302
  %v4559 = vsub.f32 %v4431, %v4303
  %v4560 = vsub.f32 %v4432, %v4304
  %v4561 = vsub.f32 %v4433, %v4305
  %v4562 = vsub.f32 %v4434, %v4306
  %v4563 = vsub.f32 %v4435, %v4307
  %v4564 = vsub.f32 %v4436, %v4308
  %v4565 = vsub.f32 %v4437, %v4309
  %v4566 = vsub.f32 %v4438, %v4310
  %v4567 = vsub.f32 %v4439, %v4311
  %v4568 = vmul.f32 %v4440, %v4440
  %v4569 = vmul.f32 %v4441, %v4441
  %v4570 = vmul.f32 %v4442, %v4442
  %v4571 = vmul.f32 %v4443, %v4443
  %v4572 = vmul.f32 %v4444, %v4444
  %v4573 = vmul.f32 %v4445, %v4445
  %v4574 = vmul.f32 %v4446, %v4446
  %v4575 = vmul.f32 %v4447, %v4447
  %v4576 = vmul.f32 %v4448, %v4448
  %v4577 = vmul.f32 %v4449, %v4449
  %v4578 = vmul.f32 %v4450, %v4450
  %v4579 = vmul.f32 %v4451, %v4451
  %v4580 = vmul.f32 %v4452, %v4452
  %v4581 = vmul.f32 %v4453, %v4453
  %v4582 = vmul.f32 %v4454, %v4454
  %v4583 = vmul.f32 %v4455, %v4455
  %v4584 = vmul.f32 %v4456, %v4456
  %v4585 = vmul.f32 %v4457, %v4457
  %v4586 = vmul.f32 %v4458, %v4458
  %v4587 = vmul.f32 %v4459, %v4459
  %v4588 = vmul.f32 %v4460, %v4460
  %v4589 = vmul.f32 %v4461, %v4461
  %v4590 = vmul.f32 %v4462, %v4462
  %v4591 = vmul.f32 %v4463, %v4463
  %v4592 = vmul.f32 %v4464, %v4464
  %v4593 = vmul.f32 %v4465, %v4465
  %v4594 = vmul.f32 %v4466, %v4466
  %v4595 = vmul.f32 %v4467, %v4467
  %v4596 = vmul.f32 %v4468, %v4468
  %v4597 = vmul.f32 %v4469, %v4469
  %v4598 = vmul.f32 %v4470, %v4470
  %v4599 = vmul.f32 %v4471, %v4471
  %v4600 = vmul.f32 %v4472, %v4472
  %v4601 = vmul.f32 %v4473, %v4473
  %v4602 = vmul.f32 %v4474, %v4474
  %v4603 = vmul.f32 %v4475, %v4475
  %v4604 = vmul.f32 %v4476, %v4476
  %v4605 = vmul.f32 %v4477, %v4477
  %v4606 = vmul.f32 %v4478, %v4478
  %v4607 = vmul.f32 %v4479, %v4479
  %v4608 = vmul.f32 %v4480, %v4480
  %v4609 = vmul.f32 %v4481, %v4481
  %v4610 = vmul.f32 %v4482, %v4482
  %v4611 = vmul.f32 %v4483, %v4483
  %v4612 = vmul.f32 %v4484, %v4484
  %v4613 = vmul.f32 %v4485, %v4485
  %v4614 = vmul.f32 %v4486, %v4486
  %v4615 = vmul.f32 %v4487, %v4487
  %v4616 = vmul.f32 %v4488, %v4488
  %v4617 = vmul.f32 %v4489, %v4489
  %v4618 = vmul.f32 %v4490, %v4490
  %v4619 = vmul.f32 %v4491, %v4491
  %v4620 = vmul.f32 %v4492, %v4492
  %v4621 = vmul.f32 %v4493, %v4493
  %v4622 = vmul.f32 %v4494, %v4494
  %v4623 = vmul.f32 %v4495, %v4495
  %v4624 = vmul.f32 %v4496, %v4496
  %v4625 = vmul.f32 %v4497, %v4497
  %v4626 = vmul.f32 %v4498, %v4498
  %v4627 = vmul.f32 %v4499, %v4499
  %v4628 = vmul.f32 %v4500, %v4500
  %v4629 = vmul.f32 %v4501, %v4501
  %v4630 = vmul.f32 %v4502, %v4502
  %v4631 = vmul.f32 %v4503, %v4503
  %v4632 = vmul.f32 %v4504, %v4504
  %v4633 = vmul.f32 %v4505, %v4505
  %v4634 = vmul.f32 %v4506, %v4506
  %v4635 = vmul.f32 %v4507, %v4507
  %v4636 = vmul.f32 %v4508, %v4508
  %v4637 = vmul.f32 %v4509, %v4509
  %v4638 = vmul.f32 %v4510, %v4510
  %v4639 = vmul.f32 %v4511, %v4511
  %v4640 = vmul.f32 %v4512, %v4512
  %v4641 = vmul.f32 %v4513, %v4513
  %v4642 = vmul.f32 %v4514, %v4514
  %v4643 = vmul.f32 %v4515, %v4515
  %v4644 = vmul.f32 %v4516, %v4516
  %v4645 = vmul.f32 %v4517, %v4517
  %v4646 = vmul.f32 %v4518, %v4518
  %v4647 = vmul.f32 %v4519, %v4519
  %v4648 = vmul.f32 %v4520, %v4520
  %v4649 = vmul.f32 %v4521, %v4521
  %v4650 = vmul.f32 %v4522, %v4522
  %v4651 = vmul.f32 %v4523, %v4523
  %v4652 = vmul.f32 %v4524, %v4524
  %v4653 = vmul.f32 %v4525, %v4525
  %v4654 = vmul.f32 %v4526, %v4526
  %v4655 = vmul.f32 %v4527, %v4527
  %v4656 = vmul.f32 %v4528, %v4528
  %v4657 = vmul.f32 %v4529, %v4529
  %v4658 = vmul.f32 %v4530, %v4530
  %v4659 = vmul.f32 %v4531, %v4531
  %v4660 = vmul.f32 %v4532, %v4532
  %v4661 = vmul.f32 %v4533, %v4533
  %v4662 = vmul.f32 %v4534, %v4534
  %v4663 = vmul.f32 %v4535, %v4535
  %v4664 = vmul.f32 %v4536, %v4536
  %v4665 = vmul.f32 %v4537, %v4537
  %v4666 = vmul.f32 %v4538, %v4538
  %v4667 = vmul.f32 %v4539, %v4539
  %v4668 = vmul.f32 %v4540, %v4540
  %v4669 = vmul.f32 %v4541, %v4541
  %v4670 = vmul.f32 %v4542, %v4542
  %v4671 = vmul.f32 %v4543, %v4543
  %v4672 = vmul.f32 %v4544, %v4544
  %v4673 = vmul.f32 %v4545, %v4545
  %v4674 = vmul.f32 %v4546, %v4546
  %v4675 = vmul.f32 %v4547, %v4547
  %v4676 = vmul.f32 %v4548, %v4548
  %v4677 = vmul.f32 %v4549, %v4549
  %v4678 = vmul.f32 %v4550, %v4550
  %v4679 = vmul.f32 %v4551, %v4551
  %v4680 = vmul.f32 %v4552, %v4552
  %v4681 = vmul.f32 %v4553, %v4553
  %v4682 = vmul.f32 %v4554, %v4554
  %v4683 = vmul.f32 %v4555, %v4555
  %v4684 = vmul.f32 %v4556, %v4556
  %v4685 = vmul.f32 %v4557, %v4557
  %v4686 = vmul.f32 %v4558, %v4558
  %v4687 = vmul.f32 %v4559, %v4559
  %v4688 = vmul.f32 %v4560, %v4560
  %v4689 = vmul.f32 %v4561, %v4561
  %v4690 = vmul.f32 %v4562, %v4562
  %v4691 = vmul.f32 %v4563, %v4563
  %v4692 = vmul.f32 %v4564, %v4564
  %v4693 = vmul.f32 %v4565, %v4565
  %v4694 = vmul.f32 %v4566, %v4566
  %v4695 = vmul.f32 %v4567, %v4567
  %v4696 = vld [vmem:[%s2] sm:$0x1]
  %v4698 = vlaneseq
  %v4699 = vshrl.u32 %v4698, 7
  %v4700 = vsub.s32 0, %v4699
  %v4701 = vrot.slane %v4696, %v4700
  %v4703 = vmul.f32 %v4568, %v4701
  %v4704 = vmul.f32 %v4569, %v4701
  %v4705 = vmul.f32 %v4570, %v4701
  %v4706 = vmul.f32 %v4571, %v4701
  %v4707 = vmul.f32 %v4572, %v4701
  %v4708 = vmul.f32 %v4573, %v4701
  %v4709 = vmul.f32 %v4574, %v4701
  %v4710 = vmul.f32 %v4575, %v4701
  %v4711 = vmul.f32 %v4576, %v4701
  %v4712 = vmul.f32 %v4577, %v4701
  %v4713 = vmul.f32 %v4578, %v4701
  %v4714 = vmul.f32 %v4579, %v4701
  %v4715 = vmul.f32 %v4580, %v4701
  %v4716 = vmul.f32 %v4581, %v4701
  %v4717 = vmul.f32 %v4582, %v4701
  %v4718 = vmul.f32 %v4583, %v4701
  %v4719 = vmul.f32 %v4584, %v4701
  %v4720 = vmul.f32 %v4585, %v4701
  %v4721 = vmul.f32 %v4586, %v4701
  %v4722 = vmul.f32 %v4587, %v4701
  %v4723 = vmul.f32 %v4588, %v4701
  %v4724 = vmul.f32 %v4589, %v4701
  %v4725 = vmul.f32 %v4590, %v4701
  %v4726 = vmul.f32 %v4591, %v4701
  %v4727 = vmul.f32 %v4592, %v4701
  %v4728 = vmul.f32 %v4593, %v4701
  %v4729 = vmul.f32 %v4594, %v4701
  %v4730 = vmul.f32 %v4595, %v4701
  %v4731 = vmul.f32 %v4596, %v4701
  %v4732 = vmul.f32 %v4597, %v4701
  %v4733 = vmul.f32 %v4598, %v4701
  %v4734 = vmul.f32 %v4599, %v4701
  %v4735 = vmul.f32 %v4600, %v4701
  %v4736 = vmul.f32 %v4601, %v4701
  %v4737 = vmul.f32 %v4602, %v4701
  %v4738 = vmul.f32 %v4603, %v4701
  %v4739 = vmul.f32 %v4604, %v4701
  %v4740 = vmul.f32 %v4605, %v4701
  %v4741 = vmul.f32 %v4606, %v4701
  %v4742 = vmul.f32 %v4607, %v4701
  %v4743 = vmul.f32 %v4608, %v4701
  %v4744 = vmul.f32 %v4609, %v4701
  %v4745 = vmul.f32 %v4610, %v4701
  %v4746 = vmul.f32 %v4611, %v4701
  %v4747 = vmul.f32 %v4612, %v4701
  %v4748 = vmul.f32 %v4613, %v4701
  %v4749 = vmul.f32 %v4614, %v4701
  %v4750 = vmul.f32 %v4615, %v4701
  %v4751 = vmul.f32 %v4616, %v4701
  %v4752 = vmul.f32 %v4617, %v4701
  %v4753 = vmul.f32 %v4618, %v4701
  %v4754 = vmul.f32 %v4619, %v4701
  %v4755 = vmul.f32 %v4620, %v4701
  %v4756 = vmul.f32 %v4621, %v4701
  %v4757 = vmul.f32 %v4622, %v4701
  %v4758 = vmul.f32 %v4623, %v4701
  %v4759 = vmul.f32 %v4624, %v4701
  %v4760 = vmul.f32 %v4625, %v4701
  %v4761 = vmul.f32 %v4626, %v4701
  %v4762 = vmul.f32 %v4627, %v4701
  %v4763 = vmul.f32 %v4628, %v4701
  %v4764 = vmul.f32 %v4629, %v4701
  %v4765 = vmul.f32 %v4630, %v4701
  %v4766 = vmul.f32 %v4631, %v4701
  %v4767 = vmul.f32 %v4632, %v4701
  %v4768 = vmul.f32 %v4633, %v4701
  %v4769 = vmul.f32 %v4634, %v4701
  %v4770 = vmul.f32 %v4635, %v4701
  %v4771 = vmul.f32 %v4636, %v4701
  %v4772 = vmul.f32 %v4637, %v4701
  %v4773 = vmul.f32 %v4638, %v4701
  %v4774 = vmul.f32 %v4639, %v4701
  %v4775 = vmul.f32 %v4640, %v4701
  %v4776 = vmul.f32 %v4641, %v4701
  %v4777 = vmul.f32 %v4642, %v4701
  %v4778 = vmul.f32 %v4643, %v4701
  %v4779 = vmul.f32 %v4644, %v4701
  %v4780 = vmul.f32 %v4645, %v4701
  %v4781 = vmul.f32 %v4646, %v4701
  %v4782 = vmul.f32 %v4647, %v4701
  %v4783 = vmul.f32 %v4648, %v4701
  %v4784 = vmul.f32 %v4649, %v4701
  %v4785 = vmul.f32 %v4650, %v4701
  %v4786 = vmul.f32 %v4651, %v4701
  %v4787 = vmul.f32 %v4652, %v4701
  %v4788 = vmul.f32 %v4653, %v4701
  %v4789 = vmul.f32 %v4654, %v4701
  %v4790 = vmul.f32 %v4655, %v4701
  %v4791 = vmul.f32 %v4656, %v4701
  %v4792 = vmul.f32 %v4657, %v4701
  %v4793 = vmul.f32 %v4658, %v4701
  %v4794 = vmul.f32 %v4659, %v4701
  %v4795 = vmul.f32 %v4660, %v4701
  %v4796 = vmul.f32 %v4661, %v4701
  %v4797 = vmul.f32 %v4662, %v4701
  %v4798 = vmul.f32 %v4663, %v4701
  %v4799 = vmul.f32 %v4664, %v4701
  %v4800 = vmul.f32 %v4665, %v4701
  %v4801 = vmul.f32 %v4666, %v4701
  %v4802 = vmul.f32 %v4667, %v4701
  %v4803 = vmul.f32 %v4668, %v4701
  %v4804 = vmul.f32 %v4669, %v4701
  %v4805 = vmul.f32 %v4670, %v4701
  %v4806 = vmul.f32 %v4671, %v4701
  %v4807 = vmul.f32 %v4672, %v4701
  %v4808 = vmul.f32 %v4673, %v4701
  %v4809 = vmul.f32 %v4674, %v4701
  %v4810 = vmul.f32 %v4675, %v4701
  %v4811 = vmul.f32 %v4676, %v4701
  %v4812 = vmul.f32 %v4677, %v4701
  %v4813 = vmul.f32 %v4678, %v4701
  %v4814 = vmul.f32 %v4679, %v4701
  %v4815 = vmul.f32 %v4680, %v4701
  %v4816 = vmul.f32 %v4681, %v4701
  %v4817 = vmul.f32 %v4682, %v4701
  %v4818 = vmul.f32 %v4683, %v4701
  %v4819 = vmul.f32 %v4684, %v4701
  %v4820 = vmul.f32 %v4685, %v4701
  %v4821 = vmul.f32 %v4686, %v4701
  %v4822 = vmul.f32 %v4687, %v4701
  %v4823 = vmul.f32 %v4688, %v4701
  %v4824 = vmul.f32 %v4689, %v4701
  %v4825 = vmul.f32 %v4690, %v4701
  %v4826 = vmul.f32 %v4691, %v4701
  %v4827 = vmul.f32 %v4692, %v4701
  %v4828 = vmul.f32 %v4693, %v4701
  %v4829 = vmul.f32 %v4694, %v4701
  %v4830 = vmul.f32 %v4695, %v4701
  %vm4831 = vcmask 31744
  %v4832 = vsel %vm4831, %v4703, 0.0
  %4833 = vadd.xlane.f32.xlu0 %v4832
  %v4834 = vpop.xlane.xlu0 %4833
  %v4835 = vsel %vm4831, %v4704, 0.0
  %4836 = vadd.xlane.f32.xlu0 %v4835
  %v4837 = vpop.xlane.xlu0 %4836
  %v4838 = vsel %vm4831, %v4705, 0.0
  %4839 = vadd.xlane.f32.xlu0 %v4838
  %v4840 = vpop.xlane.xlu0 %4839
  %v4841 = vsel %vm4831, %v4706, 0.0
  %4842 = vadd.xlane.f32.xlu0 %v4841
  %v4843 = vpop.xlane.xlu0 %4842
  %v4844 = vsel %vm4831, %v4707, 0.0
  %4845 = vadd.xlane.f32.xlu0 %v4844
  %v4846 = vpop.xlane.xlu0 %4845
  %v4847 = vsel %vm4831, %v4708, 0.0
  %4848 = vadd.xlane.f32.xlu0 %v4847
  %v4849 = vpop.xlane.xlu0 %4848
  %v4850 = vsel %vm4831, %v4709, 0.0
  %4851 = vadd.xlane.f32.xlu0 %v4850
  %v4852 = vpop.xlane.xlu0 %4851
  %v4853 = vsel %vm4831, %v4710, 0.0
  %4854 = vadd.xlane.f32.xlu0 %v4853
  %v4855 = vpop.xlane.xlu0 %4854
  %v4856 = vsel %vm4831, %v4711, 0.0
  %4857 = vadd.xlane.f32.xlu0 %v4856
  %v4858 = vpop.xlane.xlu0 %4857
  %v4859 = vsel %vm4831, %v4712, 0.0
  %4860 = vadd.xlane.f32.xlu0 %v4859
  %v4861 = vpop.xlane.xlu0 %4860
  %v4862 = vsel %vm4831, %v4713, 0.0
  %4863 = vadd.xlane.f32.xlu0 %v4862
  %v4864 = vpop.xlane.xlu0 %4863
  %v4865 = vsel %vm4831, %v4714, 0.0
  %4866 = vadd.xlane.f32.xlu0 %v4865
  %v4867 = vpop.xlane.xlu0 %4866
  %v4868 = vsel %vm4831, %v4715, 0.0
  %4869 = vadd.xlane.f32.xlu0 %v4868
  %v4870 = vpop.xlane.xlu0 %4869
  %v4871 = vsel %vm4831, %v4716, 0.0
  %4872 = vadd.xlane.f32.xlu0 %v4871
  %v4873 = vpop.xlane.xlu0 %4872
  %v4874 = vsel %vm4831, %v4717, 0.0
  %4875 = vadd.xlane.f32.xlu0 %v4874
  %v4876 = vpop.xlane.xlu0 %4875
  %v4877 = vsel %vm4831, %v4718, 0.0
  %4878 = vadd.xlane.f32.xlu0 %v4877
  %v4879 = vpop.xlane.xlu0 %4878
  %v4880 = vsel %vm4831, %v4719, 0.0
  %4881 = vadd.xlane.f32.xlu0 %v4880
  %v4882 = vpop.xlane.xlu0 %4881
  %v4883 = vsel %vm4831, %v4720, 0.0
  %4884 = vadd.xlane.f32.xlu0 %v4883
  %v4885 = vpop.xlane.xlu0 %4884
  %v4886 = vsel %vm4831, %v4721, 0.0
  %4887 = vadd.xlane.f32.xlu0 %v4886
  %v4888 = vpop.xlane.xlu0 %4887
  %v4889 = vsel %vm4831, %v4722, 0.0
  %4890 = vadd.xlane.f32.xlu0 %v4889
  %v4891 = vpop.xlane.xlu0 %4890
  %v4892 = vsel %vm4831, %v4723, 0.0
  %4893 = vadd.xlane.f32.xlu0 %v4892
  %v4894 = vpop.xlane.xlu0 %4893
  %v4895 = vsel %vm4831, %v4724, 0.0
  %4896 = vadd.xlane.f32.xlu0 %v4895
  %v4897 = vpop.xlane.xlu0 %4896
  %v4898 = vsel %vm4831, %v4725, 0.0
  %4899 = vadd.xlane.f32.xlu0 %v4898
  %v4900 = vpop.xlane.xlu0 %4899
  %v4901 = vsel %vm4831, %v4726, 0.0
  %4902 = vadd.xlane.f32.xlu0 %v4901
  %v4903 = vpop.xlane.xlu0 %4902
  %v4904 = vsel %vm4831, %v4727, 0.0
  %4905 = vadd.xlane.f32.xlu0 %v4904
  %v4906 = vpop.xlane.xlu0 %4905
  %v4907 = vsel %vm4831, %v4728, 0.0
  %4908 = vadd.xlane.f32.xlu0 %v4907
  %v4909 = vpop.xlane.xlu0 %4908
  %v4910 = vsel %vm4831, %v4729, 0.0
  %4911 = vadd.xlane.f32.xlu0 %v4910
  %v4912 = vpop.xlane.xlu0 %4911
  %v4913 = vsel %vm4831, %v4730, 0.0
  %4914 = vadd.xlane.f32.xlu0 %v4913
  %v4915 = vpop.xlane.xlu0 %4914
  %v4916 = vsel %vm4831, %v4731, 0.0
  %4917 = vadd.xlane.f32.xlu0 %v4916
  %v4918 = vpop.xlane.xlu0 %4917
  %v4919 = vsel %vm4831, %v4732, 0.0
  %4920 = vadd.xlane.f32.xlu0 %v4919
  %v4921 = vpop.xlane.xlu0 %4920
  %v4922 = vsel %vm4831, %v4733, 0.0
  %4923 = vadd.xlane.f32.xlu0 %v4922
  %v4924 = vpop.xlane.xlu0 %4923
  %v4925 = vsel %vm4831, %v4734, 0.0
  %4926 = vadd.xlane.f32.xlu0 %v4925
  %v4927 = vpop.xlane.xlu0 %4926
  %v4928 = vsel %vm4831, %v4735, 0.0
  %4929 = vadd.xlane.f32.xlu0 %v4928
  %v4930 = vpop.xlane.xlu0 %4929
  %v4931 = vsel %vm4831, %v4736, 0.0
  %4932 = vadd.xlane.f32.xlu0 %v4931
  %v4933 = vpop.xlane.xlu0 %4932
  %v4934 = vsel %vm4831, %v4737, 0.0
  %4935 = vadd.xlane.f32.xlu0 %v4934
  %v4936 = vpop.xlane.xlu0 %4935
  %v4937 = vsel %vm4831, %v4738, 0.0
  %4938 = vadd.xlane.f32.xlu0 %v4937
  %v4939 = vpop.xlane.xlu0 %4938
  %v4940 = vsel %vm4831, %v4739, 0.0
  %4941 = vadd.xlane.f32.xlu0 %v4940
  %v4942 = vpop.xlane.xlu0 %4941
  %v4943 = vsel %vm4831, %v4740, 0.0
  %4944 = vadd.xlane.f32.xlu0 %v4943
  %v4945 = vpop.xlane.xlu0 %4944
  %v4946 = vsel %vm4831, %v4741, 0.0
  %4947 = vadd.xlane.f32.xlu0 %v4946
  %v4948 = vpop.xlane.xlu0 %4947
  %v4949 = vsel %vm4831, %v4742, 0.0
  %4950 = vadd.xlane.f32.xlu0 %v4949
  %v4951 = vpop.xlane.xlu0 %4950
  %v4952 = vsel %vm4831, %v4743, 0.0
  %4953 = vadd.xlane.f32.xlu0 %v4952
  %v4954 = vpop.xlane.xlu0 %4953
  %v4955 = vsel %vm4831, %v4744, 0.0
  %4956 = vadd.xlane.f32.xlu0 %v4955
  %v4957 = vpop.xlane.xlu0 %4956
  %v4958 = vsel %vm4831, %v4745, 0.0
  %4959 = vadd.xlane.f32.xlu0 %v4958
  %v4960 = vpop.xlane.xlu0 %4959
  %v4961 = vsel %vm4831, %v4746, 0.0
  %4962 = vadd.xlane.f32.xlu0 %v4961
  %v4963 = vpop.xlane.xlu0 %4962
  %v4964 = vsel %vm4831, %v4747, 0.0
  %4965 = vadd.xlane.f32.xlu0 %v4964
  %v4966 = vpop.xlane.xlu0 %4965
  %v4967 = vsel %vm4831, %v4748, 0.0
  %4968 = vadd.xlane.f32.xlu0 %v4967
  %v4969 = vpop.xlane.xlu0 %4968
  %v4970 = vsel %vm4831, %v4749, 0.0
  %4971 = vadd.xlane.f32.xlu0 %v4970
  %v4972 = vpop.xlane.xlu0 %4971
  %v4973 = vsel %vm4831, %v4750, 0.0
  %4974 = vadd.xlane.f32.xlu0 %v4973
  %v4975 = vpop.xlane.xlu0 %4974
  %v4976 = vsel %vm4831, %v4751, 0.0
  %4977 = vadd.xlane.f32.xlu0 %v4976
  %v4978 = vpop.xlane.xlu0 %4977
  %v4979 = vsel %vm4831, %v4752, 0.0
  %4980 = vadd.xlane.f32.xlu0 %v4979
  %v4981 = vpop.xlane.xlu0 %4980
  %v4982 = vsel %vm4831, %v4753, 0.0
  %4983 = vadd.xlane.f32.xlu0 %v4982
  %v4984 = vpop.xlane.xlu0 %4983
  %v4985 = vsel %vm4831, %v4754, 0.0
  %4986 = vadd.xlane.f32.xlu0 %v4985
  %v4987 = vpop.xlane.xlu0 %4986
  %v4988 = vsel %vm4831, %v4755, 0.0
  %4989 = vadd.xlane.f32.xlu0 %v4988
  %v4990 = vpop.xlane.xlu0 %4989
  %v4991 = vsel %vm4831, %v4756, 0.0
  %4992 = vadd.xlane.f32.xlu0 %v4991
  %v4993 = vpop.xlane.xlu0 %4992
  %v4994 = vsel %vm4831, %v4757, 0.0
  %4995 = vadd.xlane.f32.xlu0 %v4994
  %v4996 = vpop.xlane.xlu0 %4995
  %v4997 = vsel %vm4831, %v4758, 0.0
  %4998 = vadd.xlane.f32.xlu0 %v4997
  %v4999 = vpop.xlane.xlu0 %4998
  %v5000 = vsel %vm4831, %v4759, 0.0
  %5001 = vadd.xlane.f32.xlu0 %v5000
  %v5002 = vpop.xlane.xlu0 %5001
  %v5003 = vsel %vm4831, %v4760, 0.0
  %5004 = vadd.xlane.f32.xlu0 %v5003
  %v5005 = vpop.xlane.xlu0 %5004
  %v5006 = vsel %vm4831, %v4761, 0.0
  %5007 = vadd.xlane.f32.xlu0 %v5006
  %v5008 = vpop.xlane.xlu0 %5007
  %v5009 = vsel %vm4831, %v4762, 0.0
  %5010 = vadd.xlane.f32.xlu0 %v5009
  %v5011 = vpop.xlane.xlu0 %5010
  %v5012 = vsel %vm4831, %v4763, 0.0
  %5013 = vadd.xlane.f32.xlu0 %v5012
  %v5014 = vpop.xlane.xlu0 %5013
  %v5015 = vsel %vm4831, %v4764, 0.0
  %5016 = vadd.xlane.f32.xlu0 %v5015
  %v5017 = vpop.xlane.xlu0 %5016
  %v5018 = vsel %vm4831, %v4765, 0.0
  %5019 = vadd.xlane.f32.xlu0 %v5018
  %v5020 = vpop.xlane.xlu0 %5019
  %v5021 = vsel %vm4831, %v4766, 0.0
  %5022 = vadd.xlane.f32.xlu0 %v5021
  %v5023 = vpop.xlane.xlu0 %5022
  %v5024 = vsel %vm4831, %v4767, 0.0
  %5025 = vadd.xlane.f32.xlu0 %v5024
  %v5026 = vpop.xlane.xlu0 %5025
  %v5027 = vsel %vm4831, %v4768, 0.0
  %5028 = vadd.xlane.f32.xlu0 %v5027
  %v5029 = vpop.xlane.xlu0 %5028
  %v5030 = vsel %vm4831, %v4769, 0.0
  %5031 = vadd.xlane.f32.xlu0 %v5030
  %v5032 = vpop.xlane.xlu0 %5031
  %v5033 = vsel %vm4831, %v4770, 0.0
  %5034 = vadd.xlane.f32.xlu0 %v5033
  %v5035 = vpop.xlane.xlu0 %5034
  %v5036 = vsel %vm4831, %v4771, 0.0
  %5037 = vadd.xlane.f32.xlu0 %v5036
  %v5038 = vpop.xlane.xlu0 %5037
  %v5039 = vsel %vm4831, %v4772, 0.0
  %5040 = vadd.xlane.f32.xlu0 %v5039
  %v5041 = vpop.xlane.xlu0 %5040
  %v5042 = vsel %vm4831, %v4773, 0.0
  %5043 = vadd.xlane.f32.xlu0 %v5042
  %v5044 = vpop.xlane.xlu0 %5043
  %v5045 = vsel %vm4831, %v4774, 0.0
  %5046 = vadd.xlane.f32.xlu0 %v5045
  %v5047 = vpop.xlane.xlu0 %5046
  %v5048 = vsel %vm4831, %v4775, 0.0
  %5049 = vadd.xlane.f32.xlu0 %v5048
  %v5050 = vpop.xlane.xlu0 %5049
  %v5051 = vsel %vm4831, %v4776, 0.0
  %5052 = vadd.xlane.f32.xlu0 %v5051
  %v5053 = vpop.xlane.xlu0 %5052
  %v5054 = vsel %vm4831, %v4777, 0.0
  %5055 = vadd.xlane.f32.xlu0 %v5054
  %v5056 = vpop.xlane.xlu0 %5055
  %v5057 = vsel %vm4831, %v4778, 0.0
  %5058 = vadd.xlane.f32.xlu0 %v5057
  %v5059 = vpop.xlane.xlu0 %5058
  %v5060 = vsel %vm4831, %v4779, 0.0
  %5061 = vadd.xlane.f32.xlu0 %v5060
  %v5062 = vpop.xlane.xlu0 %5061
  %v5063 = vsel %vm4831, %v4780, 0.0
  %5064 = vadd.xlane.f32.xlu0 %v5063
  %v5065 = vpop.xlane.xlu0 %5064
  %v5066 = vsel %vm4831, %v4781, 0.0
  %5067 = vadd.xlane.f32.xlu0 %v5066
  %v5068 = vpop.xlane.xlu0 %5067
  %v5069 = vsel %vm4831, %v4782, 0.0
  %5070 = vadd.xlane.f32.xlu0 %v5069
  %v5071 = vpop.xlane.xlu0 %5070
  %v5072 = vsel %vm4831, %v4783, 0.0
  %5073 = vadd.xlane.f32.xlu0 %v5072
  %v5074 = vpop.xlane.xlu0 %5073
  %v5075 = vsel %vm4831, %v4784, 0.0
  %5076 = vadd.xlane.f32.xlu0 %v5075
  %v5077 = vpop.xlane.xlu0 %5076
  %v5078 = vsel %vm4831, %v4785, 0.0
  %5079 = vadd.xlane.f32.xlu0 %v5078
  %v5080 = vpop.xlane.xlu0 %5079
  %v5081 = vsel %vm4831, %v4786, 0.0
  %5082 = vadd.xlane.f32.xlu0 %v5081
  %v5083 = vpop.xlane.xlu0 %5082
  %v5084 = vsel %vm4831, %v4787, 0.0
  %5085 = vadd.xlane.f32.xlu0 %v5084
  %v5086 = vpop.xlane.xlu0 %5085
  %v5087 = vsel %vm4831, %v4788, 0.0
  %5088 = vadd.xlane.f32.xlu0 %v5087
  %v5089 = vpop.xlane.xlu0 %5088
  %v5090 = vsel %vm4831, %v4789, 0.0
  %5091 = vadd.xlane.f32.xlu0 %v5090
  %v5092 = vpop.xlane.xlu0 %5091
  %v5093 = vsel %vm4831, %v4790, 0.0
  %5094 = vadd.xlane.f32.xlu0 %v5093
  %v5095 = vpop.xlane.xlu0 %5094
  %v5096 = vsel %vm4831, %v4791, 0.0
  %5097 = vadd.xlane.f32.xlu0 %v5096
  %v5098 = vpop.xlane.xlu0 %5097
  %v5099 = vsel %vm4831, %v4792, 0.0
  %5100 = vadd.xlane.f32.xlu0 %v5099
  %v5101 = vpop.xlane.xlu0 %5100
  %v5102 = vsel %vm4831, %v4793, 0.0
  %5103 = vadd.xlane.f32.xlu0 %v5102
  %v5104 = vpop.xlane.xlu0 %5103
  %v5105 = vsel %vm4831, %v4794, 0.0
  %5106 = vadd.xlane.f32.xlu0 %v5105
  %v5107 = vpop.xlane.xlu0 %5106
  %v5108 = vsel %vm4831, %v4795, 0.0
  %5109 = vadd.xlane.f32.xlu0 %v5108
  %v5110 = vpop.xlane.xlu0 %5109
  %v5111 = vsel %vm4831, %v4796, 0.0
  %5112 = vadd.xlane.f32.xlu0 %v5111
  %v5113 = vpop.xlane.xlu0 %5112
  %v5114 = vsel %vm4831, %v4797, 0.0
  %5115 = vadd.xlane.f32.xlu0 %v5114
  %v5116 = vpop.xlane.xlu0 %5115
  %v5117 = vsel %vm4831, %v4798, 0.0
  %5118 = vadd.xlane.f32.xlu0 %v5117
  %v5119 = vpop.xlane.xlu0 %5118
  %v5120 = vsel %vm4831, %v4799, 0.0
  %5121 = vadd.xlane.f32.xlu0 %v5120
  %v5122 = vpop.xlane.xlu0 %5121
  %v5123 = vsel %vm4831, %v4800, 0.0
  %5124 = vadd.xlane.f32.xlu0 %v5123
  %v5125 = vpop.xlane.xlu0 %5124
  %v5126 = vsel %vm4831, %v4801, 0.0
  %5127 = vadd.xlane.f32.xlu0 %v5126
  %v5128 = vpop.xlane.xlu0 %5127
  %v5129 = vsel %vm4831, %v4802, 0.0
  %5130 = vadd.xlane.f32.xlu0 %v5129
  %v5131 = vpop.xlane.xlu0 %5130
  %v5132 = vsel %vm4831, %v4803, 0.0
  %5133 = vadd.xlane.f32.xlu0 %v5132
  %v5134 = vpop.xlane.xlu0 %5133
  %v5135 = vsel %vm4831, %v4804, 0.0
  %5136 = vadd.xlane.f32.xlu0 %v5135
  %v5137 = vpop.xlane.xlu0 %5136
  %v5138 = vsel %vm4831, %v4805, 0.0
  %5139 = vadd.xlane.f32.xlu0 %v5138
  %v5140 = vpop.xlane.xlu0 %5139
  %v5141 = vsel %vm4831, %v4806, 0.0
  %5142 = vadd.xlane.f32.xlu0 %v5141
  %v5143 = vpop.xlane.xlu0 %5142
  %v5144 = vsel %vm4831, %v4807, 0.0
  %5145 = vadd.xlane.f32.xlu0 %v5144
  %v5146 = vpop.xlane.xlu0 %5145
  %v5147 = vsel %vm4831, %v4808, 0.0
  %5148 = vadd.xlane.f32.xlu0 %v5147
  %v5149 = vpop.xlane.xlu0 %5148
  %v5150 = vsel %vm4831, %v4809, 0.0
  %5151 = vadd.xlane.f32.xlu0 %v5150
  %v5152 = vpop.xlane.xlu0 %5151
  %v5153 = vsel %vm4831, %v4810, 0.0
  %5154 = vadd.xlane.f32.xlu0 %v5153
  %v5155 = vpop.xlane.xlu0 %5154
  %v5156 = vsel %vm4831, %v4811, 0.0
  %5157 = vadd.xlane.f32.xlu0 %v5156
  %v5158 = vpop.xlane.xlu0 %5157
  %v5159 = vsel %vm4831, %v4812, 0.0
  %5160 = vadd.xlane.f32.xlu0 %v5159
  %v5161 = vpop.xlane.xlu0 %5160
  %v5162 = vsel %vm4831, %v4813, 0.0
  %5163 = vadd.xlane.f32.xlu0 %v5162
  %v5164 = vpop.xlane.xlu0 %5163
  %v5165 = vsel %vm4831, %v4814, 0.0
  %5166 = vadd.xlane.f32.xlu0 %v5165
  %v5167 = vpop.xlane.xlu0 %5166
  %v5168 = vsel %vm4831, %v4815, 0.0
  %5169 = vadd.xlane.f32.xlu0 %v5168
  %v5170 = vpop.xlane.xlu0 %5169
  %v5171 = vsel %vm4831, %v4816, 0.0
  %5172 = vadd.xlane.f32.xlu0 %v5171
  %v5173 = vpop.xlane.xlu0 %5172
  %v5174 = vsel %vm4831, %v4817, 0.0
  %5175 = vadd.xlane.f32.xlu0 %v5174
  %v5176 = vpop.xlane.xlu0 %5175
  %v5177 = vsel %vm4831, %v4818, 0.0
  %5178 = vadd.xlane.f32.xlu0 %v5177
  %v5179 = vpop.xlane.xlu0 %5178
  %v5180 = vsel %vm4831, %v4819, 0.0
  %5181 = vadd.xlane.f32.xlu0 %v5180
  %v5182 = vpop.xlane.xlu0 %5181
  %v5183 = vsel %vm4831, %v4820, 0.0
  %5184 = vadd.xlane.f32.xlu0 %v5183
  %v5185 = vpop.xlane.xlu0 %5184
  %v5186 = vsel %vm4831, %v4821, 0.0
  %5187 = vadd.xlane.f32.xlu0 %v5186
  %v5188 = vpop.xlane.xlu0 %5187
  %v5189 = vsel %vm4831, %v4822, 0.0
  %5190 = vadd.xlane.f32.xlu0 %v5189
  %v5191 = vpop.xlane.xlu0 %5190
  %v5192 = vsel %vm4831, %v4823, 0.0
  %5193 = vadd.xlane.f32.xlu0 %v5192
  %v5194 = vpop.xlane.xlu0 %5193
  %v5195 = vsel %vm4831, %v4824, 0.0
  %5196 = vadd.xlane.f32.xlu0 %v5195
  %v5197 = vpop.xlane.xlu0 %5196
  %v5198 = vsel %vm4831, %v4825, 0.0
  %5199 = vadd.xlane.f32.xlu0 %v5198
  %v5200 = vpop.xlane.xlu0 %5199
  %v5201 = vsel %vm4831, %v4826, 0.0
  %5202 = vadd.xlane.f32.xlu0 %v5201
  %v5203 = vpop.xlane.xlu0 %5202
  %v5204 = vsel %vm4831, %v4827, 0.0
  %5205 = vadd.xlane.f32.xlu0 %v5204
  %v5206 = vpop.xlane.xlu0 %5205
  %v5207 = vsel %vm4831, %v4828, 0.0
  %5208 = vadd.xlane.f32.xlu0 %v5207
  %v5209 = vpop.xlane.xlu0 %5208
  %v5210 = vsel %vm4831, %v4829, 0.0
  %5211 = vadd.xlane.f32.xlu0 %v5210
  %v5212 = vpop.xlane.xlu0 %5211
  %v5213 = vsel %vm4831, %v4830, 0.0
  %5214 = vadd.xlane.f32.xlu0 %v5213
  %v5215 = vpop.xlane.xlu0 %5214
  %v5216 = vlaneseq
  %v5217 = vand.u32 %v5216, 127
  %vm5218 = vcmp.eq.s32.totalorder %v5217, 65
  %v5219 = vsel %vm5218, %v4834, %v2193
  %v5220 = vsel %vm5218, %v4837, %v2196
  %v5221 = vsel %vm5218, %v4840, %v2201
  %v5222 = vsel %vm5218, %v4843, %v2204
  %v5223 = vsel %vm5218, %v4846, %v2209
  %v5224 = vsel %vm5218, %v4849, %v2212
  %v5225 = vsel %vm5218, %v4852, %v2217
  %v5226 = vsel %vm5218, %v4855, %v2220
  %v5227 = vsel %vm5218, %v4858, %v2225
  %v5228 = vsel %vm5218, %v4861, %v2228
  %v5229 = vsel %vm5218, %v4864, %v2233
  %v5230 = vsel %vm5218, %v4867, %v2236
  %v5231 = vsel %vm5218, %v4870, %v2241
  %v5232 = vsel %vm5218, %v4873, %v2244
  %v5233 = vsel %vm5218, %v4876, %v2249
  %v5234 = vsel %vm5218, %v4879, %v2252
  %v5235 = vsel %vm5218, %v4882, %v2257
  %v5236 = vsel %vm5218, %v4885, %v2260
  %v5237 = vsel %vm5218, %v4888, %v2265
  %v5238 = vsel %vm5218, %v4891, %v2268
  %v5239 = vsel %vm5218, %v4894, %v2273
  %v5240 = vsel %vm5218, %v4897, %v2276
  %v5241 = vsel %vm5218, %v4900, %v2281
  %v5242 = vsel %vm5218, %v4903, %v2284
  %v5243 = vsel %vm5218, %v4906, %v2289
  %v5244 = vsel %vm5218, %v4909, %v2292
  %v5245 = vsel %vm5218, %v4912, %v2297
  %v5246 = vsel %vm5218, %v4915, %v2300
  %v5247 = vsel %vm5218, %v4918, %v2305
  %v5248 = vsel %vm5218, %v4921, %v2308
  %v5249 = vsel %vm5218, %v4924, %v2313
  %v5250 = vsel %vm5218, %v4927, %v2316
  %v5251 = vsel %vm5218, %v4930, %v2321
  %v5252 = vsel %vm5218, %v4933, %v2324
  %v5253 = vsel %vm5218, %v4936, %v2329
  %v5254 = vsel %vm5218, %v4939, %v2332
  %v5255 = vsel %vm5218, %v4942, %v2337
  %v5256 = vsel %vm5218, %v4945, %v2340
  %v5257 = vsel %vm5218, %v4948, %v2345
  %v5258 = vsel %vm5218, %v4951, %v2348
  %v5259 = vsel %vm5218, %v4954, %v2353
  %v5260 = vsel %vm5218, %v4957, %v2356
  %v5261 = vsel %vm5218, %v4960, %v2361
  %v5262 = vsel %vm5218, %v4963, %v2364
  %v5263 = vsel %vm5218, %v4966, %v2369
  %v5264 = vsel %vm5218, %v4969, %v2372
  %v5265 = vsel %vm5218, %v4972, %v2377
  %v5266 = vsel %vm5218, %v4975, %v2380
  %v5267 = vsel %vm5218, %v4978, %v2385
  %v5268 = vsel %vm5218, %v4981, %v2388
  %v5269 = vsel %vm5218, %v4984, %v2393
  %v5270 = vsel %vm5218, %v4987, %v2396
  %v5271 = vsel %vm5218, %v4990, %v2401
  %v5272 = vsel %vm5218, %v4993, %v2404
  %v5273 = vsel %vm5218, %v4996, %v2409
  %v5274 = vsel %vm5218, %v4999, %v2412
  %v5275 = vsel %vm5218, %v5002, %v2417
  %v5276 = vsel %vm5218, %v5005, %v2420
  %v5277 = vsel %vm5218, %v5008, %v2425
  %v5278 = vsel %vm5218, %v5011, %v2428
  %v5279 = vsel %vm5218, %v5014, %v2433
  %v5280 = vsel %vm5218, %v5017, %v2436
  %v5281 = vsel %vm5218, %v5020, %v2441
  %v5282 = vsel %vm5218, %v5023, %v2444
  %v5283 = vsel %vm5218, %v5026, %v2449
  %v5284 = vsel %vm5218, %v5029, %v2452
  %v5285 = vsel %vm5218, %v5032, %v2457
  %v5286 = vsel %vm5218, %v5035, %v2460
  %v5287 = vsel %vm5218, %v5038, %v2465
  %v5288 = vsel %vm5218, %v5041, %v2468
  %v5289 = vsel %vm5218, %v5044, %v2473
  %v5290 = vsel %vm5218, %v5047, %v2476
  %v5291 = vsel %vm5218, %v5050, %v2481
  %v5292 = vsel %vm5218, %v5053, %v2484
  %v5293 = vsel %vm5218, %v5056, %v2489
  %v5294 = vsel %vm5218, %v5059, %v2492
  %v5295 = vsel %vm5218, %v5062, %v2497
  %v5296 = vsel %vm5218, %v5065, %v2500
  %v5297 = vsel %vm5218, %v5068, %v2505
  %v5298 = vsel %vm5218, %v5071, %v2508
  %v5299 = vsel %vm5218, %v5074, %v2513
  %v5300 = vsel %vm5218, %v5077, %v2516
  %v5301 = vsel %vm5218, %v5080, %v2521
  %v5302 = vsel %vm5218, %v5083, %v2524
  %v5303 = vsel %vm5218, %v5086, %v2529
  %v5304 = vsel %vm5218, %v5089, %v2532
  %v5305 = vsel %vm5218, %v5092, %v2537
  %v5306 = vsel %vm5218, %v5095, %v2540
  %v5307 = vsel %vm5218, %v5098, %v2545
  %v5308 = vsel %vm5218, %v5101, %v2548
  %v5309 = vsel %vm5218, %v5104, %v2553
  %v5310 = vsel %vm5218, %v5107, %v2556
  %v5311 = vsel %vm5218, %v5110, %v2561
  %v5312 = vsel %vm5218, %v5113, %v2564
  %v5313 = vsel %vm5218, %v5116, %v2569
  %v5314 = vsel %vm5218, %v5119, %v2572
  %v5315 = vsel %vm5218, %v5122, %v2577
  %v5316 = vsel %vm5218, %v5125, %v2580
  %v5317 = vsel %vm5218, %v5128, %v2585
  %v5318 = vsel %vm5218, %v5131, %v2588
  %v5319 = vsel %vm5218, %v5134, %v2593
  %v5320 = vsel %vm5218, %v5137, %v2596
  %v5321 = vsel %vm5218, %v5140, %v2601
  %v5322 = vsel %vm5218, %v5143, %v2604
  %v5323 = vsel %vm5218, %v5146, %v2609
  %v5324 = vsel %vm5218, %v5149, %v2612
  %v5325 = vsel %vm5218, %v5152, %v2617
  %v5326 = vsel %vm5218, %v5155, %v2620
  %v5327 = vsel %vm5218, %v5158, %v2625
  %v5328 = vsel %vm5218, %v5161, %v2628
  %v5329 = vsel %vm5218, %v5164, %v2633
  %v5330 = vsel %vm5218, %v5167, %v2636
  %v5331 = vsel %vm5218, %v5170, %v2641
  %v5332 = vsel %vm5218, %v5173, %v2644
  %v5333 = vsel %vm5218, %v5176, %v2649
  %v5334 = vsel %vm5218, %v5179, %v2652
  %v5335 = vsel %vm5218, %v5182, %v2657
  %v5336 = vsel %vm5218, %v5185, %v2660
  %v5337 = vsel %vm5218, %v5188, %v2665
  %v5338 = vsel %vm5218, %v5191, %v2668
  %v5339 = vsel %vm5218, %v5194, %v2673
  %v5340 = vsel %vm5218, %v5197, %v2676
  %v5341 = vsel %vm5218, %v5200, %v2681
  %v5342 = vsel %vm5218, %v5203, %v2684
  %v5343 = vsel %vm5218, %v5206, %v2689
  %v5344 = vsel %vm5218, %v5209, %v2692
  %v5345 = vsel %vm5218, %v5212, %v2697
  %v5346 = vsel %vm5218, %v5215, %v2700
  %5347 = vxpose.xlu0.b32.start [1/16] %v5219, 128
  %5348 = vxpose.xlu0.b32.cont [2/16] %v5220, 128
  %5349 = vxpose.xlu0.b32.cont [3/16] %v5221, 128
  %5350 = vxpose.xlu0.b32.cont [4/16] %v5222, 128
  %5351 = vxpose.xlu0.b32.cont [5/16] %v5223, 128
  %5352 = vxpose.xlu0.b32.cont [6/16] %v5224, 128
  %5353 = vxpose.xlu0.b32.cont [7/16] %v5225, 128
  %5354 = vxpose.xlu0.b32.cont [8/16] %v5226, 128
  %5355 = vxpose.xlu0.b32.cont [9/16] %v5227, 128
  %5356 = vxpose.xlu0.b32.cont [10/16] %v5228, 128
  %5357 = vxpose.xlu0.b32.cont [11/16] %v5229, 128
  %5358 = vxpose.xlu0.b32.cont [12/16] %v5230, 128
  %5359 = vxpose.xlu0.b32.cont [13/16] %v5231, 128
  %5360 = vxpose.xlu0.b32.cont [14/16] %v5232, 128
  %5361 = vxpose.xlu0.b32.cont [15/16] %v5233, 128
  %5362 = vxpose.xlu0.b32.end [16/16] %v5234, 128
  %v5363 = vpop.trf.xlu0
  %v5364 = vpop.trf.xlu0
  %v5365 = vpop.trf.xlu0
  %v5366 = vpop.trf.xlu0
  %v5367 = vpop.trf.xlu0
  %v5368 = vpop.trf.xlu0
  %v5369 = vpop.trf.xlu0
  %v5370 = vpop.trf.xlu0
  %v5371 = vpop.trf.xlu0
  %v5372 = vpop.trf.xlu0
  %v5373 = vpop.trf.xlu0
  %v5374 = vpop.trf.xlu0
  %v5375 = vpop.trf.xlu0
  %v5376 = vpop.trf.xlu0
  %v5377 = vpop.trf.xlu0
  %v5378 = vpop.trf.xlu0
  %5379 = vxpose.xlu0.b32.start [1/16] %v5235, 128
  %5380 = vxpose.xlu0.b32.cont [2/16] %v5236, 128
  %5381 = vxpose.xlu0.b32.cont [3/16] %v5237, 128
  %5382 = vxpose.xlu0.b32.cont [4/16] %v5238, 128
  %5383 = vxpose.xlu0.b32.cont [5/16] %v5239, 128
  %5384 = vxpose.xlu0.b32.cont [6/16] %v5240, 128
  %5385 = vxpose.xlu0.b32.cont [7/16] %v5241, 128
  %5386 = vxpose.xlu0.b32.cont [8/16] %v5242, 128
  %5387 = vxpose.xlu0.b32.cont [9/16] %v5243, 128
  %5388 = vxpose.xlu0.b32.cont [10/16] %v5244, 128
  %5389 = vxpose.xlu0.b32.cont [11/16] %v5245, 128
  %5390 = vxpose.xlu0.b32.cont [12/16] %v5246, 128
  %5391 = vxpose.xlu0.b32.cont [13/16] %v5247, 128
  %5392 = vxpose.xlu0.b32.cont [14/16] %v5248, 128
  %5393 = vxpose.xlu0.b32.cont [15/16] %v5249, 128
  %5394 = vxpose.xlu0.b32.end [16/16] %v5250, 128
  %v5395 = vpop.trf.xlu0
  %v5396 = vpop.trf.xlu0
  %v5397 = vpop.trf.xlu0
  %v5398 = vpop.trf.xlu0
  %v5399 = vpop.trf.xlu0
  %v5400 = vpop.trf.xlu0
  %v5401 = vpop.trf.xlu0
  %v5402 = vpop.trf.xlu0
  %v5403 = vpop.trf.xlu0
  %v5404 = vpop.trf.xlu0
  %v5405 = vpop.trf.xlu0
  %v5406 = vpop.trf.xlu0
  %v5407 = vpop.trf.xlu0
  %v5408 = vpop.trf.xlu0
  %v5409 = vpop.trf.xlu0
  %v5410 = vpop.trf.xlu0
  %5411 = vxpose.xlu0.b32.start [1/16] %v5251, 128
  %5412 = vxpose.xlu0.b32.cont [2/16] %v5252, 128
  %5413 = vxpose.xlu0.b32.cont [3/16] %v5253, 128
  %5414 = vxpose.xlu0.b32.cont [4/16] %v5254, 128
  %5415 = vxpose.xlu0.b32.cont [5/16] %v5255, 128
  %5416 = vxpose.xlu0.b32.cont [6/16] %v5256, 128
  %5417 = vxpose.xlu0.b32.cont [7/16] %v5257, 128
  %5418 = vxpose.xlu0.b32.cont [8/16] %v5258, 128
  %5419 = vxpose.xlu0.b32.cont [9/16] %v5259, 128
  %5420 = vxpose.xlu0.b32.cont [10/16] %v5260, 128
  %5421 = vxpose.xlu0.b32.cont [11/16] %v5261, 128
  %5422 = vxpose.xlu0.b32.cont [12/16] %v5262, 128
  %5423 = vxpose.xlu0.b32.cont [13/16] %v5263, 128
  %5424 = vxpose.xlu0.b32.cont [14/16] %v5264, 128
  %5425 = vxpose.xlu0.b32.cont [15/16] %v5265, 128
  %5426 = vxpose.xlu0.b32.end [16/16] %v5266, 128
  %v5427 = vpop.trf.xlu0
  %v5428 = vpop.trf.xlu0
  %v5429 = vpop.trf.xlu0
  %v5430 = vpop.trf.xlu0
  %v5431 = vpop.trf.xlu0
  %v5432 = vpop.trf.xlu0
  %v5433 = vpop.trf.xlu0
  %v5434 = vpop.trf.xlu0
  %v5435 = vpop.trf.xlu0
  %v5436 = vpop.trf.xlu0
  %v5437 = vpop.trf.xlu0
  %v5438 = vpop.trf.xlu0
  %v5439 = vpop.trf.xlu0
  %v5440 = vpop.trf.xlu0
  %v5441 = vpop.trf.xlu0
  %v5442 = vpop.trf.xlu0
  %5443 = vxpose.xlu0.b32.start [1/16] %v5267, 128
  %5444 = vxpose.xlu0.b32.cont [2/16] %v5268, 128
  %5445 = vxpose.xlu0.b32.cont [3/16] %v5269, 128
  %5446 = vxpose.xlu0.b32.cont [4/16] %v5270, 128
  %5447 = vxpose.xlu0.b32.cont [5/16] %v5271, 128
  %5448 = vxpose.xlu0.b32.cont [6/16] %v5272, 128
  %5449 = vxpose.xlu0.b32.cont [7/16] %v5273, 128
  %5450 = vxpose.xlu0.b32.cont [8/16] %v5274, 128
  %5451 = vxpose.xlu0.b32.cont [9/16] %v5275, 128
  %5452 = vxpose.xlu0.b32.cont [10/16] %v5276, 128
  %5453 = vxpose.xlu0.b32.cont [11/16] %v5277, 128
  %5454 = vxpose.xlu0.b32.cont [12/16] %v5278, 128
  %5455 = vxpose.xlu0.b32.cont [13/16] %v5279, 128
  %5456 = vxpose.xlu0.b32.cont [14/16] %v5280, 128
  %5457 = vxpose.xlu0.b32.cont [15/16] %v5281, 128
  %5458 = vxpose.xlu0.b32.end [16/16] %v5282, 128
  %v5459 = vpop.trf.xlu0
  %v5460 = vpop.trf.xlu0
  %v5461 = vpop.trf.xlu0
  %v5462 = vpop.trf.xlu0
  %v5463 = vpop.trf.xlu0
  %v5464 = vpop.trf.xlu0
  %v5465 = vpop.trf.xlu0
  %v5466 = vpop.trf.xlu0
  %v5467 = vpop.trf.xlu0
  %v5468 = vpop.trf.xlu0
  %v5469 = vpop.trf.xlu0
  %v5470 = vpop.trf.xlu0
  %v5471 = vpop.trf.xlu0
  %v5472 = vpop.trf.xlu0
  %v5473 = vpop.trf.xlu0
  %v5474 = vpop.trf.xlu0
  %5475 = vxpose.xlu0.b32.start [1/16] %v5283, 128
  %5476 = vxpose.xlu0.b32.cont [2/16] %v5284, 128
  %5477 = vxpose.xlu0.b32.cont [3/16] %v5285, 128
  %5478 = vxpose.xlu0.b32.cont [4/16] %v5286, 128
  %5479 = vxpose.xlu0.b32.cont [5/16] %v5287, 128
  %5480 = vxpose.xlu0.b32.cont [6/16] %v5288, 128
  %5481 = vxpose.xlu0.b32.cont [7/16] %v5289, 128
  %5482 = vxpose.xlu0.b32.cont [8/16] %v5290, 128
  %5483 = vxpose.xlu0.b32.cont [9/16] %v5291, 128
  %5484 = vxpose.xlu0.b32.cont [10/16] %v5292, 128
  %5485 = vxpose.xlu0.b32.cont [11/16] %v5293, 128
  %5486 = vxpose.xlu0.b32.cont [12/16] %v5294, 128
  %5487 = vxpose.xlu0.b32.cont [13/16] %v5295, 128
  %5488 = vxpose.xlu0.b32.cont [14/16] %v5296, 128
  %5489 = vxpose.xlu0.b32.cont [15/16] %v5297, 128
  %5490 = vxpose.xlu0.b32.end [16/16] %v5298, 128
  %v5491 = vpop.trf.xlu0
  %v5492 = vpop.trf.xlu0
  %v5493 = vpop.trf.xlu0
  %v5494 = vpop.trf.xlu0
  %v5495 = vpop.trf.xlu0
  %v5496 = vpop.trf.xlu0
  %v5497 = vpop.trf.xlu0
  %v5498 = vpop.trf.xlu0
  %v5499 = vpop.trf.xlu0
  %v5500 = vpop.trf.xlu0
  %v5501 = vpop.trf.xlu0
  %v5502 = vpop.trf.xlu0
  %v5503 = vpop.trf.xlu0
  %v5504 = vpop.trf.xlu0
  %v5505 = vpop.trf.xlu0
  %v5506 = vpop.trf.xlu0
  %5507 = vxpose.xlu0.b32.start [1/16] %v5299, 128
  %5508 = vxpose.xlu0.b32.cont [2/16] %v5300, 128
  %5509 = vxpose.xlu0.b32.cont [3/16] %v5301, 128
  %5510 = vxpose.xlu0.b32.cont [4/16] %v5302, 128
  %5511 = vxpose.xlu0.b32.cont [5/16] %v5303, 128
  %5512 = vxpose.xlu0.b32.cont [6/16] %v5304, 128
  %5513 = vxpose.xlu0.b32.cont [7/16] %v5305, 128
  %5514 = vxpose.xlu0.b32.cont [8/16] %v5306, 128
  %5515 = vxpose.xlu0.b32.cont [9/16] %v5307, 128
  %5516 = vxpose.xlu0.b32.cont [10/16] %v5308, 128
  %5517 = vxpose.xlu0.b32.cont [11/16] %v5309, 128
  %5518 = vxpose.xlu0.b32.cont [12/16] %v5310, 128
  %5519 = vxpose.xlu0.b32.cont [13/16] %v5311, 128
  %5520 = vxpose.xlu0.b32.cont [14/16] %v5312, 128
  %5521 = vxpose.xlu0.b32.cont [15/16] %v5313, 128
  %5522 = vxpose.xlu0.b32.end [16/16] %v5314, 128
  %v5523 = vpop.trf.xlu0
  %v5524 = vpop.trf.xlu0
  %v5525 = vpop.trf.xlu0
  %v5526 = vpop.trf.xlu0
  %v5527 = vpop.trf.xlu0
  %v5528 = vpop.trf.xlu0
  %v5529 = vpop.trf.xlu0
  %v5530 = vpop.trf.xlu0
  %v5531 = vpop.trf.xlu0
  %v5532 = vpop.trf.xlu0
  %v5533 = vpop.trf.xlu0
  %v5534 = vpop.trf.xlu0
  %v5535 = vpop.trf.xlu0
  %v5536 = vpop.trf.xlu0
  %v5537 = vpop.trf.xlu0
  %v5538 = vpop.trf.xlu0
  %5539 = vxpose.xlu0.b32.start [1/16] %v5315, 128
  %5540 = vxpose.xlu0.b32.cont [2/16] %v5316, 128
  %5541 = vxpose.xlu0.b32.cont [3/16] %v5317, 128
  %5542 = vxpose.xlu0.b32.cont [4/16] %v5318, 128
  %5543 = vxpose.xlu0.b32.cont [5/16] %v5319, 128
  %5544 = vxpose.xlu0.b32.cont [6/16] %v5320, 128
  %5545 = vxpose.xlu0.b32.cont [7/16] %v5321, 128
  %5546 = vxpose.xlu0.b32.cont [8/16] %v5322, 128
  %5547 = vxpose.xlu0.b32.cont [9/16] %v5323, 128
  %5548 = vxpose.xlu0.b32.cont [10/16] %v5324, 128
  %5549 = vxpose.xlu0.b32.cont [11/16] %v5325, 128
  %5550 = vxpose.xlu0.b32.cont [12/16] %v5326, 128
  %5551 = vxpose.xlu0.b32.cont [13/16] %v5327, 128
  %5552 = vxpose.xlu0.b32.cont [14/16] %v5328, 128
  %5553 = vxpose.xlu0.b32.cont [15/16] %v5329, 128
  %5554 = vxpose.xlu0.b32.end [16/16] %v5330, 128
  %v5555 = vpop.trf.xlu0
  %v5556 = vpop.trf.xlu0
  %v5557 = vpop.trf.xlu0
  %v5558 = vpop.trf.xlu0
  %v5559 = vpop.trf.xlu0
  %v5560 = vpop.trf.xlu0
  %v5561 = vpop.trf.xlu0
  %v5562 = vpop.trf.xlu0
  %v5563 = vpop.trf.xlu0
  %v5564 = vpop.trf.xlu0
  %v5565 = vpop.trf.xlu0
  %v5566 = vpop.trf.xlu0
  %v5567 = vpop.trf.xlu0
  %v5568 = vpop.trf.xlu0
  %v5569 = vpop.trf.xlu0
  %v5570 = vpop.trf.xlu0
  %5571 = vxpose.xlu0.b32.start [1/16] %v5331, 128
  %5572 = vxpose.xlu0.b32.cont [2/16] %v5332, 128
  %5573 = vxpose.xlu0.b32.cont [3/16] %v5333, 128
  %5574 = vxpose.xlu0.b32.cont [4/16] %v5334, 128
  %5575 = vxpose.xlu0.b32.cont [5/16] %v5335, 128
  %5576 = vxpose.xlu0.b32.cont [6/16] %v5336, 128
  %5577 = vxpose.xlu0.b32.cont [7/16] %v5337, 128
  %5578 = vxpose.xlu0.b32.cont [8/16] %v5338, 128
  %5579 = vxpose.xlu0.b32.cont [9/16] %v5339, 128
  %5580 = vxpose.xlu0.b32.cont [10/16] %v5340, 128
  %5581 = vxpose.xlu0.b32.cont [11/16] %v5341, 128
  %5582 = vxpose.xlu0.b32.cont [12/16] %v5342, 128
  %5583 = vxpose.xlu0.b32.cont [13/16] %v5343, 128
  %5584 = vxpose.xlu0.b32.cont [14/16] %v5344, 128
  %5585 = vxpose.xlu0.b32.cont [15/16] %v5345, 128
  %5586 = vxpose.xlu0.b32.end [16/16] %v5346, 128
  %v5587 = vpop.trf.xlu0
  %v5588 = vpop.trf.xlu0
  %v5589 = vpop.trf.xlu0
  %v5590 = vpop.trf.xlu0
  %v5591 = vpop.trf.xlu0
  %v5592 = vpop.trf.xlu0
  %v5593 = vpop.trf.xlu0
  %v5594 = vpop.trf.xlu0
  %v5595 = vpop.trf.xlu0
  %v5596 = vpop.trf.xlu0
  %v5597 = vpop.trf.xlu0
  %v5598 = vpop.trf.xlu0
  %v5599 = vpop.trf.xlu0
  %v5600 = vpop.trf.xlu0
  %v5601 = vpop.trf.xlu0
  %v5602 = vpop.trf.xlu0
  %5603 = vst [vmem:[%s9] sm:$0xff] %v5371
  %5604 = vst [vmem:[%s9 + $0x8] sm:$0xff] %v5403
  %5605 = vst [vmem:[%s9 + $0x10] sm:$0xff] %v5435
  %5606 = vst [vmem:[%s9 + $0x18] sm:$0xff] %v5467
  %5607 = vst [vmem:[%s9 + $0x20] sm:$0xff] %v5499
  %5608 = vst [vmem:[%s9 + $0x28] sm:$0xff] %v5531
  %5609 = vst [vmem:[%s9 + $0x30] sm:$0xff] %v5563
  %5610 = vst [vmem:[%s9 + $0x38] sm:$0xff] %v5595
  // Predicated region
  $region38: #{evaluate_continuous.1} parent=0 // pred_check
    _
  $region39: #{evaluate_continuous.1} parent=0 // pred_check_branch
    %5612 = sbr.rel (0) target = $region41
  $region40: #{evaluate_continuous.1} parent=0 // pred_region
    _
  $region41: #{evaluate_continuous.1} parent=0 // pred_fallthru
    _
  // Predicated region
  $region42: #{evaluate_continuous.1} parent=0 // pred_check
    _
  $region43: #{evaluate_continuous.1} parent=0 // pred_check_branch
    %5614 = sbr.rel (0) target = $region45
  $region44: #{evaluate_continuous.1} parent=0 // pred_region
    _
  $region45: #{evaluate_continuous.1} parent=0 // pred_fallthru
    _

</llo_original>
